<compile_context>
chip_gen: v5e
topology: v5e:2x2
jax: 0.10.0
libtpu: 0.0.40
codegen_flags: <defaults>
</compile_context>

<pallas_src>
import functools

import numpy as np
import jax
import jax.numpy as jnp
from jax.experimental import pallas as pl
from jax.experimental.pallas import tpu as pltpu


# ----------------------------------------------------------------------------
# Fused Pallas kernel: one grid step == TB samples, whole network
# ----------------------------------------------------------------------------
def _lenet5_kernel(x_ref,
                   m1_ref, m2_ref, m3fc_ref,
                   p1r_ref, p1c_ref, p2r_ref, p2c_ref,
                   b1_ref, b2_ref, bfc1_ref,
                   wfc2_ref, bfc2_ref,
                   out_ref):
    tb = x_ref.shape[0]

    def bdot(a, w):
        # bf16 x bf16 on the MXU, f32 accumulation.
        return jnp.dot(a.astype(jnp.bfloat16), w.astype(jnp.bfloat16),
                       preferred_element_type=jnp.float32)

    def conv(act, m_ref, oh, bias):
        # act: (H, W*Cin) f32.  Tap r contributes act[r:r+OH, :] @ m[r]
        # (static sublane slice instead of a row-selector matmul).
        kh = m_ref.shape[0]
        taps = [bdot(act[r:r + oh, :], m_ref[r]) for r in range(kh)]
        while len(taps) > 1:                                  # pairwise tree add
            nxt = [taps[i] + taps[i + 1] for i in range(0, len(taps) - 1, 2)]
            if len(taps) % 2:
                nxt.append(taps[-1])
            taps = nxt
        return taps[0] + bias                                 # (OH, OW*Cout) f32

    def pool2x2(act, pr_ref, pc_ref):
        # 2x2 max pool as 0/1 selector matmuls (rows, then spatial columns).
        rows = jnp.maximum(bdot(pr_ref[0], act), bdot(pr_ref[1], act))
        return jnp.maximum(bdot(rows, pc_ref[0]), bdot(rows, pc_ref[1]))

    # Hoist small bias / FC loads out of the per-sample loop.
    b1 = b1_ref[...]
    b2 = b2_ref[...]
    bfc1 = bfc1_ref[...]
    bfc2 = bfc2_ref[...]
    wfc2 = wfc2_ref[...]

    for b in range(tb):                                       # TB independent chains
        x = x_ref[b]                                          # (32, 32) = (H, W*Cin)
        a1 = jnp.maximum(conv(x, m1_ref, 28, b1), 0.0)        # (28, 168)
        a1 = pool2x2(a1, p1r_ref, p1c_ref)                    # (14, 84)
        a2 = jnp.maximum(conv(a1, m2_ref, 10, b2), 0.0)       # (10, 160)
        a2 = pool2x2(a2, p2r_ref, p2c_ref)                    # (5, 80)
        # conv3 (no ReLU, per PyTorch) folded into fc1 offline.
        h = jnp.maximum(conv(a2, m3fc_ref, 1, bfc1), 0.0)     # (1, 84)
        y = bdot(h, wfc2) + bfc2                              # (1, 128) lane-padded logits
        out_ref[pl.ds(b, 1), :] = y


# ----------------------------------------------------------------------------
# One-time parameter preparation (all layout glue hoisted out of the forward)
# ----------------------------------------------------------------------------
def _band_matrices(w_oihw, w_in):
    """Conv weight (Cout,Cin,KH,KW) -> per-tap banded matrices (KH, W*Cin, OW*Cout).

    M[r, (j+s)*Cin + ci, j*Cout + co] = w[co, ci, r, s]
    so that conv output row i equals sum_r (act[i+r, :] @ M[r]).
    """
    w = np.asarray(w_oihw, np.float32)
    co, ci, kh, kw = w.shape
    ow = w_in - kw + 1
    m = np.zeros((kh, w_in * ci, ow * co), np.float32)
    for r in range(kh):
        for s in range(kw):
            blk = w[:, :, r, s].T                             # (Cin, Cout)
            for j in range(ow):
                m[r, (j + s) * ci:(j + s + 1) * ci, j * co:(j + 1) * co] = blk
    return m


def _pool_row_select(h):
    """(2, H/2, H): [even-row selector, odd-row selector]."""
    ho = h // 2
    s = np.zeros((2, ho, h), np.float32)
    s[0, np.arange(ho), 2 * np.arange(ho)] = 1.0
    s[1, np.arange(ho), 2 * np.arange(ho) + 1] = 1.0
    return s


def _pool_col_select(w, c):
    """(2, W*C, (W/2)*C): even/odd spatial-column selectors for (j*C + c) layout."""
    wo = w // 2
    e = np.zeros((2, w * c, wo * c), np.float32)
    for k in range(wo):
        for ch in range(c):
            e[0, (2 * k) * c + ch, k * c + ch] = 1.0
            e[1, (2 * k + 1) * c + ch, k * c + ch] = 1.0
    return e


def prepare_pallas_params(params):
    p = {k: np.asarray(v, np.float32) for k, v in params.items()}
    bf, f32 = jnp.bfloat16, jnp.float32

    # Fold conv3 (no ReLU) into fc1: h = relu(sum_r a2[r:r+1] @ m3fc[r] + bfc1').
    m3 = _band_matrices(p["conv3_w"], 5)                      # (5, 80, 120)
    wfc1 = p["fc1_w"].T                                       # (120, 84)
    m3fc = np.einsum("rij,jk->rik", m3, wfc1)                 # (5, 80, 84)
    bfc1 = p["conv3_b"] @ wfc1 + p["fc1_b"]                   # (84,)

    # Lane-pad the classifier to 128 output lanes (unmasked, lane-dense stores).
    wfc2 = np.zeros((84, 128), np.float32)
    wfc2[:, :10] = p["fc2_w"].T
    bfc2 = np.zeros((1, 128), np.float32)
    bfc2[0, :10] = p["fc2_b"]

    return {
        "m1": jnp.asarray(_band_matrices(p["conv1_w"], 32), bf),     # (5, 32, 168)
        "m2": jnp.asarray(_band_matrices(p["conv2_w"], 14), bf),     # (5, 84, 160)
        "m3fc": jnp.asarray(m3fc, bf),                               # (5, 80, 84)
        "p1r": jnp.asarray(_pool_row_select(28), bf),                # (2, 14, 28)
        "p1c": jnp.asarray(_pool_col_select(28, 6), bf),             # (2, 168, 84)
        "p2r": jnp.asarray(_pool_row_select(10), bf),                # (2, 5, 10)
        "p2c": jnp.asarray(_pool_col_select(10, 16), bf),            # (2, 160, 80)
        "b1": jnp.asarray(np.tile(p["conv1_b"], 28)[None, :], f32),  # (1, 168)
        "b2": jnp.asarray(np.tile(p["conv2_b"], 10)[None, :], f32),  # (1, 160)
        "bfc1": jnp.asarray(bfc1[None, :], f32),                     # (1, 84)
        "wfc2": jnp.asarray(wfc2, bf),                               # (84, 128)
        "bfc2": jnp.asarray(bfc2, f32),                              # (1, 128)
    }


# ----------------------------------------------------------------------------
# Forward wrapper: one pallas_call for the whole network, batch-tiled grid
# ----------------------------------------------------------------------------
def _const_spec(shape):
    rank = len(shape)
    return pl.BlockSpec(shape, lambda i, _r=rank: (0,) * _r)


@functools.partial(jax.jit, static_argnames=("tb",))
def lenet5_forward(x_nchw, prep, tb=8):
    """x_nchw: (N, 1, 32, 32) float32 (PyTorch layout).  Returns (N, 10) logits.

    tb: samples per grid step (keep it 8 or a multiple of 8 when N > tb).
    VMEM use is tiny (<1 MB weights + (tb,32,32) input blocks), well under the
    v7x 64 MiB budget, so no vmem_limit_bytes override is needed.
    """
    n = x_nchw.shape[0]
    tb = max(1, min(tb, n))
    n_pad = ((n + tb - 1) // tb) * tb
    x = x_nchw[:, 0, :, :].astype(jnp.float32)                # (N, 32, 32) = (N, H, W*Cin)
    if n_pad != n:
        x = jnp.pad(x, ((0, n_pad - n), (0, 0), (0, 0)))

    operands = (x, prep["m1"], prep["m2"], prep["m3fc"],
                prep["p1r"], prep["p1c"], prep["p2r"], prep["p2c"],
                prep["b1"], prep["b2"], prep["bfc1"],
                prep["wfc2"], prep["bfc2"])

    in_specs = [pl.BlockSpec((tb, 32, 32), lambda i: (i, 0, 0))]
    in_specs += [_const_spec(op.shape) for op in operands[1:]]

    out = pl.pallas_call(
        _lenet5_kernel,
        out_shape=jax.ShapeDtypeStruct((n_pad, 128), jnp.float32),
        grid=(n_pad // tb,),
        in_specs=in_specs,
        out_specs=pl.BlockSpec((tb, 128), lambda i: (i, 0)),
        compiler_params=pltpu.CompilerParams(
            dimension_semantics=("parallel",)),
    )(*operands)
    return out[:n, :10]


# ----------------------------------------------------------------------------
# Parameters and pure-JAX reference (for a correctness check)
# ----------------------------------------------------------------------------
def init_lenet5_params(key):
    ks = jax.random.split(key, 10)
    s = 0.05
    return {
        "conv1_w": jax.random.normal(ks[0], (6, 1, 5, 5), jnp.float32) * s,
        "conv1_b": jax.random.normal(ks[1], (6,), jnp.float32) * s,
        "conv2_w": jax.random.normal(ks[2], (16, 6, 5, 5), jnp.float32) * s,
        "conv2_b": jax.random.normal(ks[3], (16,), jnp.float32) * s,
        "conv3_w": jax.random.normal(ks[4], (120, 16, 5, 5), jnp.float32) * s,
        "conv3_b": jax.random.normal(ks[5], (120,), jnp.float32) * s,
        "fc1_w": jax.random.normal(ks[6], (84, 120), jnp.float32) * s,   # (out, in) like nn.Linear
        "fc1_b": jax.random.normal(ks[7], (84,), jnp.float32) * s,
        "fc2_w": jax.random.normal(ks[8], (10, 84), jnp.float32) * s,
        "fc2_b": jax.random.normal(ks[9], (10,), jnp.float32) * s,
    }


def lenet5_reference(x_nchw, params):
    dn = ("NCHW", "OIHW", "NCHW")
    hp = jax.lax.Precision.HIGHEST
    y = jax.lax.conv_general_dilated(x_nchw, params["conv1_w"], (1, 1), "VALID",
                                     dimension_numbers=dn, precision=hp)
    y = jax.nn.relu(y + params["conv1_b"][None, :, None, None])
    y = jax.lax.reduce_window(y, -jnp.inf, jax.lax.max, (1, 1, 2, 2), (1, 1, 2, 2), "VALID")
    y = jax.lax.conv_general_dilated(y, params["conv2_w"], (1, 1), "VALID",
                                     dimension_numbers=dn, precision=hp)
    y = jax.nn.relu(y + params["conv2_b"][None, :, None, None])
    y = jax.lax.reduce_window(y, -jnp.inf, jax.lax.max, (1, 1, 2, 2), (1, 1, 2, 2), "VALID")
    y = jax.lax.conv_general_dilated(y, params["conv3_w"], (1, 1), "VALID",
                                     dimension_numbers=dn, precision=hp)
    y = y + params["conv3_b"][None, :, None, None]
    y = y.reshape(y.shape[0], -1)
    y = jax.nn.relu(jnp.dot(y, params["fc1_w"].T, precision=hp) + params["fc1_b"])
    y = jnp.dot(y, params["fc2_w"].T, precision=hp) + params["fc2_b"]
    return y


if __name__ == "__main__":
    key = jax.random.PRNGKey(0)
    k_x, k_p = jax.random.split(key)
    # LeNet5 architecture requires 32x32 single-channel input.
    x = jax.random.normal(k_x, (2, 1, 32, 32), jnp.float32)
    params = init_lenet5_params(k_p)
    prep = prepare_pallas_params(params)   # one-time layout prep (hoisted glue)

    out = lenet5_forward(x, prep)
    out = jax.block_until_ready(out)
    assert out.shape == (2, 10), out.shape

    ref = lenet5_reference(x, params)
    err = float(jnp.max(jnp.abs(out - ref)))
    # bf16 weights/activations with f32 accumulation: error well below 2e-2.
    assert err < 2e-2, f"max abs error vs reference: {err}"
    print("KERNEL_OK")
</pallas_src>

<mosaic_0001>
module attributes {stable_mosaic.version = 11 : i64} {
  func.func @_lenet5_kernel(%arg0: i32, %arg1: memref<2x32x32xf32, #tpu.memory_space<vmem>>, %arg2: memref<5x32x168xbf16, #tpu.memory_space<vmem>>, %arg3: memref<5x84x160xbf16, #tpu.memory_space<vmem>>, %arg4: memref<5x80x84xbf16, #tpu.memory_space<vmem>>, %arg5: memref<2x14x28xbf16, #tpu.memory_space<vmem>>, %arg6: memref<2x168x84xbf16, #tpu.memory_space<vmem>>, %arg7: memref<2x5x10xbf16, #tpu.memory_space<vmem>>, %arg8: memref<2x160x80xbf16, #tpu.memory_space<vmem>>, %arg9: memref<1x168xf32, #tpu.memory_space<vmem>>, %arg10: memref<1x160xf32, #tpu.memory_space<vmem>>, %arg11: memref<1x84xf32, #tpu.memory_space<vmem>>, %arg12: memref<84x128xbf16, #tpu.memory_space<vmem>>, %arg13: memref<1x128xf32, #tpu.memory_space<vmem>>, %arg14: memref<2x128xf32, #tpu.memory_space<vmem>>) attributes {dimension_semantics = [#tpu.dimension_semantics<parallel>], iteration_bounds = array<i64: 1>, scalar_prefetch = 0 : i64, scratch_operands = 0 : i64, tpu.core_type = #tpu.core_type<tc>, window_params = [{transform_indices = @transform_0, window_bounds = array<i64: 2, 32, 32>}, {pipeline_mode = #tpu.pipeline_mode<synchronous>, transform_indices = @transform_1, window_bounds = array<i64: 5, 32, 168>}, {pipeline_mode = #tpu.pipeline_mode<synchronous>, transform_indices = @transform_2, window_bounds = array<i64: 5, 84, 160>}, {pipeline_mode = #tpu.pipeline_mode<synchronous>, transform_indices = @transform_3, window_bounds = array<i64: 5, 80, 84>}, {pipeline_mode = #tpu.pipeline_mode<synchronous>, transform_indices = @transform_4, window_bounds = array<i64: 2, 14, 28>}, {pipeline_mode = #tpu.pipeline_mode<synchronous>, transform_indices = @transform_5, window_bounds = array<i64: 2, 168, 84>}, {pipeline_mode = #tpu.pipeline_mode<synchronous>, transform_indices = @transform_6, window_bounds = array<i64: 2, 5, 10>}, {pipeline_mode = #tpu.pipeline_mode<synchronous>, transform_indices = @transform_7, window_bounds = array<i64: 2, 160, 80>}, {pipeline_mode = #tpu.pipeline_mode<synchronous>, transform_indices = @transform_8, window_bounds = array<i64: 1, 168>}, {pipeline_mode = #tpu.pipeline_mode<synchronous>, transform_indices = @transform_9, window_bounds = array<i64: 1, 160>}, {pipeline_mode = #tpu.pipeline_mode<synchronous>, transform_indices = @transform_10, window_bounds = array<i64: 1, 84>}, {pipeline_mode = #tpu.pipeline_mode<synchronous>, transform_indices = @transform_11, window_bounds = array<i64: 84, 128>}, {pipeline_mode = #tpu.pipeline_mode<synchronous>, transform_indices = @transform_12, window_bounds = array<i64: 1, 128>}, {transform_indices = @transform_13, window_bounds = array<i64: 2, 128>}]} {
    %c0 = arith.constant 0 : index
    %c0_0 = arith.constant 0 : index
    %0 = vector.load %arg9[%c0, %c0_0] : memref<1x168xf32, #tpu.memory_space<vmem>>, vector<1x168xf32>
    %c0_1 = arith.constant 0 : index
    %c0_2 = arith.constant 0 : index
    %1 = vector.load %arg10[%c0_1, %c0_2] : memref<1x160xf32, #tpu.memory_space<vmem>>, vector<1x160xf32>
    %c0_3 = arith.constant 0 : index
    %c0_4 = arith.constant 0 : index
    %2 = vector.load %arg11[%c0_3, %c0_4] : memref<1x84xf32, #tpu.memory_space<vmem>>, vector<1x84xf32>
    %c0_5 = arith.constant 0 : index
    %c0_6 = arith.constant 0 : index
    %3 = vector.load %arg13[%c0_5, %c0_6] : memref<1x128xf32, #tpu.memory_space<vmem>>, vector<1x128xf32>
    %c0_7 = arith.constant 0 : index
    %c0_8 = arith.constant 0 : index
    %4 = vector.load %arg12[%c0_7, %c0_8] : memref<84x128xbf16, #tpu.memory_space<vmem>>, vector<84x128xbf16>
    %c0_9 = arith.constant 0 : index
    %c0_10 = arith.constant 0 : index
    %c0_11 = arith.constant 0 : index
    %5 = vector.load %arg1[%c0_9, %c0_10, %c0_11] : memref<2x32x32xf32, #tpu.memory_space<vmem>>, vector<1x32x32xf32>
    %6 = vector.shape_cast %5 : vector<1x32x32xf32> to vector<32x32xf32>
    %7 = vector.extract_strided_slice %6 {offsets = [0, 0], sizes = [28, 32], strides = [1, 1]} : vector<32x32xf32> to vector<28x32xf32>
    %c0_12 = arith.constant 0 : index
    %c0_13 = arith.constant 0 : index
    %c0_14 = arith.constant 0 : index
    %8 = vector.load %arg2[%c0_12, %c0_13, %c0_14] : memref<5x32x168xbf16, #tpu.memory_space<vmem>>, vector<1x32x168xbf16>
    %9 = vector.shape_cast %8 : vector<1x32x168xbf16> to vector<32x168xbf16>
    %10 = arith.truncf %7 : vector<28x32xf32> to vector<28x32xbf16>
    %cst = arith.constant dense<0.000000e+00> : vector<28x168xf32>
    %11 = tpu.matmul %10, %9, %cst {dimension_numbers = #tpu.dot_dimension_numbers<[1], [0], [0], [1], [0, 0, 1, 1], [], []>} : vector<28x32xbf16>, vector<32x168xbf16>, vector<28x168xf32> -> vector<28x168xf32>
    %12 = vector.extract_strided_slice %6 {offsets = [1, 0], sizes = [28, 32], strides = [1, 1]} : vector<32x32xf32> to vector<28x32xf32>
    %c1 = arith.constant 1 : index
    %c0_15 = arith.constant 0 : index
    %c0_16 = arith.constant 0 : index
    %13 = vector.load %arg2[%c1, %c0_15, %c0_16] : memref<5x32x168xbf16, #tpu.memory_space<vmem>>, vector<1x32x168xbf16>
    %14 = vector.shape_cast %13 : vector<1x32x168xbf16> to vector<32x168xbf16>
    %15 = arith.truncf %12 : vector<28x32xf32> to vector<28x32xbf16>
    %cst_17 = arith.constant dense<0.000000e+00> : vector<28x168xf32>
    %16 = tpu.matmul %15, %14, %cst_17 {dimension_numbers = #tpu.dot_dimension_numbers<[1], [0], [0], [1], [0, 0, 1, 1], [], []>} : vector<28x32xbf16>, vector<32x168xbf16>, vector<28x168xf32> -> vector<28x168xf32>
    %17 = vector.extract_strided_slice %6 {offsets = [2, 0], sizes = [28, 32], strides = [1, 1]} : vector<32x32xf32> to vector<28x32xf32>
    %c2 = arith.constant 2 : index
    %c0_18 = arith.constant 0 : index
    %c0_19 = arith.constant 0 : index
    %18 = vector.load %arg2[%c2, %c0_18, %c0_19] : memref<5x32x168xbf16, #tpu.memory_space<vmem>>, vector<1x32x168xbf16>
    %19 = vector.shape_cast %18 : vector<1x32x168xbf16> to vector<32x168xbf16>
    %20 = arith.truncf %17 : vector<28x32xf32> to vector<28x32xbf16>
    %cst_20 = arith.constant dense<0.000000e+00> : vector<28x168xf32>
    %21 = tpu.matmul %20, %19, %cst_20 {dimension_numbers = #tpu.dot_dimension_numbers<[1], [0], [0], [1], [0, 0, 1, 1], [], []>} : vector<28x32xbf16>, vector<32x168xbf16>, vector<28x168xf32> -> vector<28x168xf32>
    %22 = vector.extract_strided_slice %6 {offsets = [3, 0], sizes = [28, 32], strides = [1, 1]} : vector<32x32xf32> to vector<28x32xf32>
    %c3 = arith.constant 3 : index
    %c0_21 = arith.constant 0 : index
    %c0_22 = arith.constant 0 : index
    %23 = vector.load %arg2[%c3, %c0_21, %c0_22] : memref<5x32x168xbf16, #tpu.memory_space<vmem>>, vector<1x32x168xbf16>
    %24 = vector.shape_cast %23 : vector<1x32x168xbf16> to vector<32x168xbf16>
    %25 = arith.truncf %22 : vector<28x32xf32> to vector<28x32xbf16>
    %cst_23 = arith.constant dense<0.000000e+00> : vector<28x168xf32>
    %26 = tpu.matmul %25, %24, %cst_23 {dimension_numbers = #tpu.dot_dimension_numbers<[1], [0], [0], [1], [0, 0, 1, 1], [], []>} : vector<28x32xbf16>, vector<32x168xbf16>, vector<28x168xf32> -> vector<28x168xf32>
    %27 = vector.extract_strided_slice %6 {offsets = [4, 0], sizes = [28, 32], strides = [1, 1]} : vector<32x32xf32> to vector<28x32xf32>
    %c4 = arith.constant 4 : index
    %c0_24 = arith.constant 0 : index
    %c0_25 = arith.constant 0 : index
    %28 = vector.load %arg2[%c4, %c0_24, %c0_25] : memref<5x32x168xbf16, #tpu.memory_space<vmem>>, vector<1x32x168xbf16>
    %29 = vector.shape_cast %28 : vector<1x32x168xbf16> to vector<32x168xbf16>
    %30 = arith.truncf %27 : vector<28x32xf32> to vector<28x32xbf16>
    %cst_26 = arith.constant dense<0.000000e+00> : vector<28x168xf32>
    %31 = tpu.matmul %30, %29, %cst_26 {dimension_numbers = #tpu.dot_dimension_numbers<[1], [0], [0], [1], [0, 0, 1, 1], [], []>} : vector<28x32xbf16>, vector<32x168xbf16>, vector<28x168xf32> -> vector<28x168xf32>
    %32 = arith.addf %11, %16 : vector<28x168xf32>
    %33 = arith.addf %21, %26 : vector<28x168xf32>
    %34 = arith.addf %32, %33 : vector<28x168xf32>
    %35 = arith.addf %34, %31 : vector<28x168xf32>
    %36 = vector.broadcast %0 : vector<1x168xf32> to vector<28x168xf32>
    %37 = arith.addf %35, %36 : vector<28x168xf32>
    %cst_27 = arith.constant 0.000000e+00 : f32
    %38 = vector.broadcast %cst_27 : f32 to vector<28x168xf32>
    %39 = arith.maximumf %37, %38 : vector<28x168xf32>
    %c0_28 = arith.constant 0 : index
    %c0_29 = arith.constant 0 : index
    %c0_30 = arith.constant 0 : index
    %40 = vector.load %arg5[%c0_28, %c0_29, %c0_30] : memref<2x14x28xbf16, #tpu.memory_space<vmem>>, vector<1x14x28xbf16>
    %41 = vector.shape_cast %40 : vector<1x14x28xbf16> to vector<14x28xbf16>
    %42 = arith.truncf %39 : vector<28x168xf32> to vector<28x168xbf16>
    %cst_31 = arith.constant dense<0.000000e+00> : vector<14x168xf32>
    %43 = tpu.matmul %41, %42, %cst_31 {dimension_numbers = #tpu.dot_dimension_numbers<[1], [0], [0], [1], [0, 0, 1, 1], [], []>} : vector<14x28xbf16>, vector<28x168xbf16>, vector<14x168xf32> -> vector<14x168xf32>
    %c1_32 = arith.constant 1 : index
    %c0_33 = arith.constant 0 : index
    %c0_34 = arith.constant 0 : index
    %44 = vector.load %arg5[%c1_32, %c0_33, %c0_34] : memref<2x14x28xbf16, #tpu.memory_space<vmem>>, vector<1x14x28xbf16>
    %45 = vector.shape_cast %44 : vector<1x14x28xbf16> to vector<14x28xbf16>
    %46 = arith.truncf %39 : vector<28x168xf32> to vector<28x168xbf16>
    %cst_35 = arith.constant dense<0.000000e+00> : vector<14x168xf32>
    %47 = tpu.matmul %45, %46, %cst_35 {dimension_numbers = #tpu.dot_dimension_numbers<[1], [0], [0], [1], [0, 0, 1, 1], [], []>} : vector<14x28xbf16>, vector<28x168xbf16>, vector<14x168xf32> -> vector<14x168xf32>
    %48 = arith.maximumf %43, %47 : vector<14x168xf32>
    %c0_36 = arith.constant 0 : index
    %c0_37 = arith.constant 0 : index
    %c0_38 = arith.constant 0 : index
    %49 = vector.load %arg6[%c0_36, %c0_37, %c0_38] : memref<2x168x84xbf16, #tpu.memory_space<vmem>>, vector<1x168x84xbf16>
    %50 = vector.shape_cast %49 : vector<1x168x84xbf16> to vector<168x84xbf16>
    %51 = arith.truncf %48 : vector<14x168xf32> to vector<14x168xbf16>
    %cst_39 = arith.constant dense<0.000000e+00> : vector<14x84xf32>
    %52 = tpu.matmul %51, %50, %cst_39 {dimension_numbers = #tpu.dot_dimension_numbers<[1], [0], [0], [1], [0, 0, 1, 1], [], []>} : vector<14x168xbf16>, vector<168x84xbf16>, vector<14x84xf32> -> vector<14x84xf32>
    %c1_40 = arith.constant 1 : index
    %c0_41 = arith.constant 0 : index
    %c0_42 = arith.constant 0 : index
    %53 = vector.load %arg6[%c1_40, %c0_41, %c0_42] : memref<2x168x84xbf16, #tpu.memory_space<vmem>>, vector<1x168x84xbf16>
    %54 = vector.shape_cast %53 : vector<1x168x84xbf16> to vector<168x84xbf16>
    %55 = arith.truncf %48 : vector<14x168xf32> to vector<14x168xbf16>
    %cst_43 = arith.constant dense<0.000000e+00> : vector<14x84xf32>
    %56 = tpu.matmul %55, %54, %cst_43 {dimension_numbers = #tpu.dot_dimension_numbers<[1], [0], [0], [1], [0, 0, 1, 1], [], []>} : vector<14x168xbf16>, vector<168x84xbf16>, vector<14x84xf32> -> vector<14x84xf32>
    %57 = arith.maximumf %52, %56 : vector<14x84xf32>
    %58 = vector.extract_strided_slice %57 {offsets = [0, 0], sizes = [10, 84], strides = [1, 1]} : vector<14x84xf32> to vector<10x84xf32>
    %c0_44 = arith.constant 0 : index
    %c0_45 = arith.constant 0 : index
    %c0_46 = arith.constant 0 : index
    %59 = vector.load %arg3[%c0_44, %c0_45, %c0_46] : memref<5x84x160xbf16, #tpu.memory_space<vmem>>, vector<1x84x160xbf16>
    %60 = vector.shape_cast %59 : vector<1x84x160xbf16> to vector<84x160xbf16>
    %61 = arith.truncf %58 : vector<10x84xf32> to vector<10x84xbf16>
    %cst_47 = arith.constant dense<0.000000e+00> : vector<10x160xf32>
    %62 = tpu.matmul %61, %60, %cst_47 {dimension_numbers = #tpu.dot_dimension_numbers<[1], [0], [0], [1], [0, 0, 1, 1], [], []>} : vector<10x84xbf16>, vector<84x160xbf16>, vector<10x160xf32> -> vector<10x160xf32>
    %63 = vector.extract_strided_slice %57 {offsets = [1, 0], sizes = [10, 84], strides = [1, 1]} : vector<14x84xf32> to vector<10x84xf32>
    %c1_48 = arith.constant 1 : index
    %c0_49 = arith.constant 0 : index
    %c0_50 = arith.constant 0 : index
    %64 = vector.load %arg3[%c1_48, %c0_49, %c0_50] : memref<5x84x160xbf16, #tpu.memory_space<vmem>>, vector<1x84x160xbf16>
    %65 = vector.shape_cast %64 : vector<1x84x160xbf16> to vector<84x160xbf16>
    %66 = arith.truncf %63 : vector<10x84xf32> to vector<10x84xbf16>
    %cst_51 = arith.constant dense<0.000000e+00> : vector<10x160xf32>
    %67 = tpu.matmul %66, %65, %cst_51 {dimension_numbers = #tpu.dot_dimension_numbers<[1], [0], [0], [1], [0, 0, 1, 1], [], []>} : vector<10x84xbf16>, vector<84x160xbf16>, vector<10x160xf32> -> vector<10x160xf32>
    %68 = vector.extract_strided_slice %57 {offsets = [2, 0], sizes = [10, 84], strides = [1, 1]} : vector<14x84xf32> to vector<10x84xf32>
    %c2_52 = arith.constant 2 : index
    %c0_53 = arith.constant 0 : index
    %c0_54 = arith.constant 0 : index
    %69 = vector.load %arg3[%c2_52, %c0_53, %c0_54] : memref<5x84x160xbf16, #tpu.memory_space<vmem>>, vector<1x84x160xbf16>
    %70 = vector.shape_cast %69 : vector<1x84x160xbf16> to vector<84x160xbf16>
    %71 = arith.truncf %68 : vector<10x84xf32> to vector<10x84xbf16>
    %cst_55 = arith.constant dense<0.000000e+00> : vector<10x160xf32>
    %72 = tpu.matmul %71, %70, %cst_55 {dimension_numbers = #tpu.dot_dimension_numbers<[1], [0], [0], [1], [0, 0, 1, 1], [], []>} : vector<10x84xbf16>, vector<84x160xbf16>, vector<10x160xf32> -> vector<10x160xf32>
    %73 = vector.extract_strided_slice %57 {offsets = [3, 0], sizes = [10, 84], strides = [1, 1]} : vector<14x84xf32> to vector<10x84xf32>
    %c3_56 = arith.constant 3 : index
    %c0_57 = arith.constant 0 : index
    %c0_58 = arith.constant 0 : index
    %74 = vector.load %arg3[%c3_56, %c0_57, %c0_58] : memref<5x84x160xbf16, #tpu.memory_space<vmem>>, vector<1x84x160xbf16>
    %75 = vector.shape_cast %74 : vector<1x84x160xbf16> to vector<84x160xbf16>
    %76 = arith.truncf %73 : vector<10x84xf32> to vector<10x84xbf16>
    %cst_59 = arith.constant dense<0.000000e+00> : vector<10x160xf32>
    %77 = tpu.matmul %76, %75, %cst_59 {dimension_numbers = #tpu.dot_dimension_numbers<[1], [0], [0], [1], [0, 0, 1, 1], [], []>} : vector<10x84xbf16>, vector<84x160xbf16>, vector<10x160xf32> -> vector<10x160xf32>
    %78 = vector.extract_strided_slice %57 {offsets = [4, 0], sizes = [10, 84], strides = [1, 1]} : vector<14x84xf32> to vector<10x84xf32>
    %c4_60 = arith.constant 4 : index
    %c0_61 = arith.constant 0 : index
    %c0_62 = arith.constant 0 : index
    %79 = vector.load %arg3[%c4_60, %c0_61, %c0_62] : memref<5x84x160xbf16, #tpu.memory_space<vmem>>, vector<1x84x160xbf16>
    %80 = vector.shape_cast %79 : vector<1x84x160xbf16> to vector<84x160xbf16>
    %81 = arith.truncf %78 : vector<10x84xf32> to vector<10x84xbf16>
    %cst_63 = arith.constant dense<0.000000e+00> : vector<10x160xf32>
    %82 = tpu.matmul %81, %80, %cst_63 {dimension_numbers = #tpu.dot_dimension_numbers<[1], [0], [0], [1], [0, 0, 1, 1], [], []>} : vector<10x84xbf16>, vector<84x160xbf16>, vector<10x160xf32> -> vector<10x160xf32>
    %83 = arith.addf %62, %67 : vector<10x160xf32>
    %84 = arith.addf %72, %77 : vector<10x160xf32>
    %85 = arith.addf %83, %84 : vector<10x160xf32>
    %86 = arith.addf %85, %82 : vector<10x160xf32>
    %87 = vector.broadcast %1 : vector<1x160xf32> to vector<10x160xf32>
    %88 = arith.addf %86, %87 : vector<10x160xf32>
    %cst_64 = arith.constant 0.000000e+00 : f32
    %89 = vector.broadcast %cst_64 : f32 to vector<10x160xf32>
    %90 = arith.maximumf %88, %89 : vector<10x160xf32>
    %c0_65 = arith.constant 0 : index
    %c0_66 = arith.constant 0 : index
    %c0_67 = arith.constant 0 : index
    %91 = vector.load %arg7[%c0_65, %c0_66, %c0_67] : memref<2x5x10xbf16, #tpu.memory_space<vmem>>, vector<1x5x10xbf16>
    %92 = vector.shape_cast %91 : vector<1x5x10xbf16> to vector<5x10xbf16>
    %93 = arith.truncf %90 : vector<10x160xf32> to vector<10x160xbf16>
    %cst_68 = arith.constant dense<0.000000e+00> : vector<5x160xf32>
    %94 = tpu.matmul %92, %93, %cst_68 {dimension_numbers = #tpu.dot_dimension_numbers<[1], [0], [0], [1], [0, 0, 1, 1], [], []>} : vector<5x10xbf16>, vector<10x160xbf16>, vector<5x160xf32> -> vector<5x160xf32>
    %c1_69 = arith.constant 1 : index
    %c0_70 = arith.constant 0 : index
    %c0_71 = arith.constant 0 : index
    %95 = vector.load %arg7[%c1_69, %c0_70, %c0_71] : memref<2x5x10xbf16, #tpu.memory_space<vmem>>, vector<1x5x10xbf16>
    %96 = vector.shape_cast %95 : vector<1x5x10xbf16> to vector<5x10xbf16>
    %97 = arith.truncf %90 : vector<10x160xf32> to vector<10x160xbf16>
    %cst_72 = arith.constant dense<0.000000e+00> : vector<5x160xf32>
    %98 = tpu.matmul %96, %97, %cst_72 {dimension_numbers = #tpu.dot_dimension_numbers<[1], [0], [0], [1], [0, 0, 1, 1], [], []>} : vector<5x10xbf16>, vector<10x160xbf16>, vector<5x160xf32> -> vector<5x160xf32>
    %99 = arith.maximumf %94, %98 : vector<5x160xf32>
    %c0_73 = arith.constant 0 : index
    %c0_74 = arith.constant 0 : index
    %c0_75 = arith.constant 0 : index
    %100 = vector.load %arg8[%c0_73, %c0_74, %c0_75] : memref<2x160x80xbf16, #tpu.memory_space<vmem>>, vector<1x160x80xbf16>
    %101 = vector.shape_cast %100 : vector<1x160x80xbf16> to vector<160x80xbf16>
    %102 = arith.truncf %99 : vector<5x160xf32> to vector<5x160xbf16>
    %cst_76 = arith.constant dense<0.000000e+00> : vector<5x80xf32>
    %103 = tpu.matmul %102, %101, %cst_76 {dimension_numbers = #tpu.dot_dimension_numbers<[1], [0], [0], [1], [0, 0, 1, 1], [], []>} : vector<5x160xbf16>, vector<160x80xbf16>, vector<5x80xf32> -> vector<5x80xf32>
    %c1_77 = arith.constant 1 : index
    %c0_78 = arith.constant 0 : index
    %c0_79 = arith.constant 0 : index
    %104 = vector.load %arg8[%c1_77, %c0_78, %c0_79] : memref<2x160x80xbf16, #tpu.memory_space<vmem>>, vector<1x160x80xbf16>
    %105 = vector.shape_cast %104 : vector<1x160x80xbf16> to vector<160x80xbf16>
    %106 = arith.truncf %99 : vector<5x160xf32> to vector<5x160xbf16>
    %cst_80 = arith.constant dense<0.000000e+00> : vector<5x80xf32>
    %107 = tpu.matmul %106, %105, %cst_80 {dimension_numbers = #tpu.dot_dimension_numbers<[1], [0], [0], [1], [0, 0, 1, 1], [], []>} : vector<5x160xbf16>, vector<160x80xbf16>, vector<5x80xf32> -> vector<5x80xf32>
    %108 = arith.maximumf %103, %107 : vector<5x80xf32>
    %109 = vector.extract_strided_slice %108 {offsets = [0, 0], sizes = [1, 80], strides = [1, 1]} : vector<5x80xf32> to vector<1x80xf32>
    %c0_81 = arith.constant 0 : index
    %c0_82 = arith.constant 0 : index
    %c0_83 = arith.constant 0 : index
    %110 = vector.load %arg4[%c0_81, %c0_82, %c0_83] : memref<5x80x84xbf16, #tpu.memory_space<vmem>>, vector<1x80x84xbf16>
    %111 = vector.shape_cast %110 : vector<1x80x84xbf16> to vector<80x84xbf16>
    %112 = arith.truncf %109 : vector<1x80xf32> to vector<1x80xbf16>
    %cst_84 = arith.constant dense<0.000000e+00> : vector<1x84xf32>
    %113 = tpu.matmul %112, %111, %cst_84 {dimension_numbers = #tpu.dot_dimension_numbers<[1], [0], [0], [1], [0, 0, 1, 1], [], []>} : vector<1x80xbf16>, vector<80x84xbf16>, vector<1x84xf32> -> vector<1x84xf32>
    %114 = vector.extract_strided_slice %108 {offsets = [1, 0], sizes = [1, 80], strides = [1, 1]} : vector<5x80xf32> to vector<1x80xf32>
    %c1_85 = arith.constant 1 : index
    %c0_86 = arith.constant 0 : index
    %c0_87 = arith.constant 0 : index
    %115 = vector.load %arg4[%c1_85, %c0_86, %c0_87] : memref<5x80x84xbf16, #tpu.memory_space<vmem>>, vector<1x80x84xbf16>
    %116 = vector.shape_cast %115 : vector<1x80x84xbf16> to vector<80x84xbf16>
    %117 = arith.truncf %114 : vector<1x80xf32> to vector<1x80xbf16>
    %cst_88 = arith.constant dense<0.000000e+00> : vector<1x84xf32>
    %118 = tpu.matmul %117, %116, %cst_88 {dimension_numbers = #tpu.dot_dimension_numbers<[1], [0], [0], [1], [0, 0, 1, 1], [], []>} : vector<1x80xbf16>, vector<80x84xbf16>, vector<1x84xf32> -> vector<1x84xf32>
    %119 = vector.extract_strided_slice %108 {offsets = [2, 0], sizes = [1, 80], strides = [1, 1]} : vector<5x80xf32> to vector<1x80xf32>
    %c2_89 = arith.constant 2 : index
    %c0_90 = arith.constant 0 : index
    %c0_91 = arith.constant 0 : index
    %120 = vector.load %arg4[%c2_89, %c0_90, %c0_91] : memref<5x80x84xbf16, #tpu.memory_space<vmem>>, vector<1x80x84xbf16>
    %121 = vector.shape_cast %120 : vector<1x80x84xbf16> to vector<80x84xbf16>
    %122 = arith.truncf %119 : vector<1x80xf32> to vector<1x80xbf16>
    %cst_92 = arith.constant dense<0.000000e+00> : vector<1x84xf32>
    %123 = tpu.matmul %122, %121, %cst_92 {dimension_numbers = #tpu.dot_dimension_numbers<[1], [0], [0], [1], [0, 0, 1, 1], [], []>} : vector<1x80xbf16>, vector<80x84xbf16>, vector<1x84xf32> -> vector<1x84xf32>
    %124 = vector.extract_strided_slice %108 {offsets = [3, 0], sizes = [1, 80], strides = [1, 1]} : vector<5x80xf32> to vector<1x80xf32>
    %c3_93 = arith.constant 3 : index
    %c0_94 = arith.constant 0 : index
    %c0_95 = arith.constant 0 : index
    %125 = vector.load %arg4[%c3_93, %c0_94, %c0_95] : memref<5x80x84xbf16, #tpu.memory_space<vmem>>, vector<1x80x84xbf16>
    %126 = vector.shape_cast %125 : vector<1x80x84xbf16> to vector<80x84xbf16>
    %127 = arith.truncf %124 : vector<1x80xf32> to vector<1x80xbf16>
    %cst_96 = arith.constant dense<0.000000e+00> : vector<1x84xf32>
    %128 = tpu.matmul %127, %126, %cst_96 {dimension_numbers = #tpu.dot_dimension_numbers<[1], [0], [0], [1], [0, 0, 1, 1], [], []>} : vector<1x80xbf16>, vector<80x84xbf16>, vector<1x84xf32> -> vector<1x84xf32>
    %129 = vector.extract_strided_slice %108 {offsets = [4, 0], sizes = [1, 80], strides = [1, 1]} : vector<5x80xf32> to vector<1x80xf32>
    %c4_97 = arith.constant 4 : index
    %c0_98 = arith.constant 0 : index
    %c0_99 = arith.constant 0 : index
    %130 = vector.load %arg4[%c4_97, %c0_98, %c0_99] : memref<5x80x84xbf16, #tpu.memory_space<vmem>>, vector<1x80x84xbf16>
    %131 = vector.shape_cast %130 : vector<1x80x84xbf16> to vector<80x84xbf16>
    %132 = arith.truncf %129 : vector<1x80xf32> to vector<1x80xbf16>
    %cst_100 = arith.constant dense<0.000000e+00> : vector<1x84xf32>
    %133 = tpu.matmul %132, %131, %cst_100 {dimension_numbers = #tpu.dot_dimension_numbers<[1], [0], [0], [1], [0, 0, 1, 1], [], []>} : vector<1x80xbf16>, vector<80x84xbf16>, vector<1x84xf32> -> vector<1x84xf32>
    %134 = arith.addf %113, %118 : vector<1x84xf32>
    %135 = arith.addf %123, %128 : vector<1x84xf32>
    %136 = arith.addf %134, %135 : vector<1x84xf32>
    %137 = arith.addf %136, %133 : vector<1x84xf32>
    %138 = arith.addf %137, %2 : vector<1x84xf32>
    %cst_101 = arith.constant 0.000000e+00 : f32
    %139 = vector.broadcast %cst_101 : f32 to vector<1x84xf32>
    %140 = arith.maximumf %138, %139 : vector<1x84xf32>
    %141 = arith.truncf %140 : vector<1x84xf32> to vector<1x84xbf16>
    %cst_102 = arith.constant dense<0.000000e+00> : vector<1x128xf32>
    %142 = tpu.matmul %141, %4, %cst_102 {dimension_numbers = #tpu.dot_dimension_numbers<[1], [0], [0], [1], [0, 0, 1, 1], [], []>} : vector<1x84xbf16>, vector<84x128xbf16>, vector<1x128xf32> -> vector<1x128xf32>
    %143 = arith.addf %142, %3 : vector<1x128xf32>
    %c0_103 = arith.constant 0 : index
    %c0_104 = arith.constant 0 : index
    %144 = vector.load %arg14[%c0_103, %c0_104] : memref<2x128xf32, #tpu.memory_space<vmem>>, vector<1x128xf32>
    tpu.vector_store %arg14[%c0_103, %c0_104], %143 {strides = array<i32>} : memref<2x128xf32, #tpu.memory_space<vmem>>, vector<1x128xf32>,
    %c1_105 = arith.constant 1 : index
    %c0_106 = arith.constant 0 : index
    %c0_107 = arith.constant 0 : index
    %145 = vector.load %arg1[%c1_105, %c0_106, %c0_107] : memref<2x32x32xf32, #tpu.memory_space<vmem>>, vector<1x32x32xf32>
    %146 = vector.shape_cast %145 : vector<1x32x32xf32> to vector<32x32xf32>
    %147 = vector.extract_strided_slice %146 {offsets = [0, 0], sizes = [28, 32], strides = [1, 1]} : vector<32x32xf32> to vector<28x32xf32>
    %c0_108 = arith.constant 0 : index
    %c0_109 = arith.constant 0 : index
    %c0_110 = arith.constant 0 : index
    %148 = vector.load %arg2[%c0_108, %c0_109, %c0_110] : memref<5x32x168xbf16, #tpu.memory_space<vmem>>, vector<1x32x168xbf16>
    %149 = vector.shape_cast %148 : vector<1x32x168xbf16> to vector<32x168xbf16>
    %150 = arith.truncf %147 : vector<28x32xf32> to vector<28x32xbf16>
    %cst_111 = arith.constant dense<0.000000e+00> : vector<28x168xf32>
    %151 = tpu.matmul %150, %149, %cst_111 {dimension_numbers = #tpu.dot_dimension_numbers<[1], [0], [0], [1], [0, 0, 1, 1], [], []>} : vector<28x32xbf16>, vector<32x168xbf16>, vector<28x168xf32> -> vector<28x168xf32>
    %152 = vector.extract_strided_slice %146 {offsets = [1, 0], sizes = [28, 32], strides = [1, 1]} : vector<32x32xf32> to vector<28x32xf32>
    %c1_112 = arith.constant 1 : index
    %c0_113 = arith.constant 0 : index
    %c0_114 = arith.constant 0 : index
    %153 = vector.load %arg2[%c1_112, %c0_113, %c0_114] : memref<5x32x168xbf16, #tpu.memory_space<vmem>>, vector<1x32x168xbf16>
    %154 = vector.shape_cast %153 : vector<1x32x168xbf16> to vector<32x168xbf16>
    %155 = arith.truncf %152 : vector<28x32xf32> to vector<28x32xbf16>
    %cst_115 = arith.constant dense<0.000000e+00> : vector<28x168xf32>
    %156 = tpu.matmul %155, %154, %cst_115 {dimension_numbers = #tpu.dot_dimension_numbers<[1], [0], [0], [1], [0, 0, 1, 1], [], []>} : vector<28x32xbf16>, vector<32x168xbf16>, vector<28x168xf32> -> vector<28x168xf32>
    %157 = vector.extract_strided_slice %146 {offsets = [2, 0], sizes = [28, 32], strides = [1, 1]} : vector<32x32xf32> to vector<28x32xf32>
    %c2_116 = arith.constant 2 : index
    %c0_117 = arith.constant 0 : index
    %c0_118 = arith.constant 0 : index
    %158 = vector.load %arg2[%c2_116, %c0_117, %c0_118] : memref<5x32x168xbf16, #tpu.memory_space<vmem>>, vector<1x32x168xbf16>
    %159 = vector.shape_cast %158 : vector<1x32x168xbf16> to vector<32x168xbf16>
    %160 = arith.truncf %157 : vector<28x32xf32> to vector<28x32xbf16>
    %cst_119 = arith.constant dense<0.000000e+00> : vector<28x168xf32>
    %161 = tpu.matmul %160, %159, %cst_119 {dimension_numbers = #tpu.dot_dimension_numbers<[1], [0], [0], [1], [0, 0, 1, 1], [], []>} : vector<28x32xbf16>, vector<32x168xbf16>, vector<28x168xf32> -> vector<28x168xf32>
    %162 = vector.extract_strided_slice %146 {offsets = [3, 0], sizes = [28, 32], strides = [1, 1]} : vector<32x32xf32> to vector<28x32xf32>
    %c3_120 = arith.constant 3 : index
    %c0_121 = arith.constant 0 : index
    %c0_122 = arith.constant 0 : index
    %163 = vector.load %arg2[%c3_120, %c0_121, %c0_122] : memref<5x32x168xbf16, #tpu.memory_space<vmem>>, vector<1x32x168xbf16>
    %164 = vector.shape_cast %163 : vector<1x32x168xbf16> to vector<32x168xbf16>
    %165 = arith.truncf %162 : vector<28x32xf32> to vector<28x32xbf16>
    %cst_123 = arith.constant dense<0.000000e+00> : vector<28x168xf32>
    %166 = tpu.matmul %165, %164, %cst_123 {dimension_numbers = #tpu.dot_dimension_numbers<[1], [0], [0], [1], [0, 0, 1, 1], [], []>} : vector<28x32xbf16>, vector<32x168xbf16>, vector<28x168xf32> -> vector<28x168xf32>
    %167 = vector.extract_strided_slice %146 {offsets = [4, 0], sizes = [28, 32], strides = [1, 1]} : vector<32x32xf32> to vector<28x32xf32>
    %c4_124 = arith.constant 4 : index
    %c0_125 = arith.constant 0 : index
    %c0_126 = arith.constant 0 : index
    %168 = vector.load %arg2[%c4_124, %c0_125, %c0_126] : memref<5x32x168xbf16, #tpu.memory_space<vmem>>, vector<1x32x168xbf16>
    %169 = vector.shape_cast %168 : vector<1x32x168xbf16> to vector<32x168xbf16>
    %170 = arith.truncf %167 : vector<28x32xf32> to vector<28x32xbf16>
    %cst_127 = arith.constant dense<0.000000e+00> : vector<28x168xf32>
    %171 = tpu.matmul %170, %169, %cst_127 {dimension_numbers = #tpu.dot_dimension_numbers<[1], [0], [0], [1], [0, 0, 1, 1], [], []>} : vector<28x32xbf16>, vector<32x168xbf16>, vector<28x168xf32> -> vector<28x168xf32>
    %172 = arith.addf %151, %156 : vector<28x168xf32>
    %173 = arith.addf %161, %166 : vector<28x168xf32>
    %174 = arith.addf %172, %173 : vector<28x168xf32>
    %175 = arith.addf %174, %171 : vector<28x168xf32>
    %176 = vector.broadcast %0 : vector<1x168xf32> to vector<28x168xf32>
    %177 = arith.addf %175, %176 : vector<28x168xf32>
    %cst_128 = arith.constant 0.000000e+00 : f32
    %178 = vector.broadcast %cst_128 : f32 to vector<28x168xf32>
    %179 = arith.maximumf %177, %178 : vector<28x168xf32>
    %c0_129 = arith.constant 0 : index
    %c0_130 = arith.constant 0 : index
    %c0_131 = arith.constant 0 : index
    %180 = vector.load %arg5[%c0_129, %c0_130, %c0_131] : memref<2x14x28xbf16, #tpu.memory_space<vmem>>, vector<1x14x28xbf16>
    %181 = vector.shape_cast %180 : vector<1x14x28xbf16> to vector<14x28xbf16>
    %182 = arith.truncf %179 : vector<28x168xf32> to vector<28x168xbf16>
    %cst_132 = arith.constant dense<0.000000e+00> : vector<14x168xf32>
    %183 = tpu.matmul %181, %182, %cst_132 {dimension_numbers = #tpu.dot_dimension_numbers<[1], [0], [0], [1], [0, 0, 1, 1], [], []>} : vector<14x28xbf16>, vector<28x168xbf16>, vector<14x168xf32> -> vector<14x168xf32>
    %c1_133 = arith.constant 1 : index
    %c0_134 = arith.constant 0 : index
    %c0_135 = arith.constant 0 : index
    %184 = vector.load %arg5[%c1_133, %c0_134, %c0_135] : memref<2x14x28xbf16, #tpu.memory_space<vmem>>, vector<1x14x28xbf16>
    %185 = vector.shape_cast %184 : vector<1x14x28xbf16> to vector<14x28xbf16>
    %186 = arith.truncf %179 : vector<28x168xf32> to vector<28x168xbf16>
    %cst_136 = arith.constant dense<0.000000e+00> : vector<14x168xf32>
    %187 = tpu.matmul %185, %186, %cst_136 {dimension_numbers = #tpu.dot_dimension_numbers<[1], [0], [0], [1], [0, 0, 1, 1], [], []>} : vector<14x28xbf16>, vector<28x168xbf16>, vector<14x168xf32> -> vector<14x168xf32>
    %188 = arith.maximumf %183, %187 : vector<14x168xf32>
    %c0_137 = arith.constant 0 : index
    %c0_138 = arith.constant 0 : index
    %c0_139 = arith.constant 0 : index
    %189 = vector.load %arg6[%c0_137, %c0_138, %c0_139] : memref<2x168x84xbf16, #tpu.memory_space<vmem>>, vector<1x168x84xbf16>
    %190 = vector.shape_cast %189 : vector<1x168x84xbf16> to vector<168x84xbf16>
    %191 = arith.truncf %188 : vector<14x168xf32> to vector<14x168xbf16>
    %cst_140 = arith.constant dense<0.000000e+00> : vector<14x84xf32>
    %192 = tpu.matmul %191, %190, %cst_140 {dimension_numbers = #tpu.dot_dimension_numbers<[1], [0], [0], [1], [0, 0, 1, 1], [], []>} : vector<14x168xbf16>, vector<168x84xbf16>, vector<14x84xf32> -> vector<14x84xf32>
    %c1_141 = arith.constant 1 : index
    %c0_142 = arith.constant 0 : index
    %c0_143 = arith.constant 0 : index
    %193 = vector.load %arg6[%c1_141, %c0_142, %c0_143] : memref<2x168x84xbf16, #tpu.memory_space<vmem>>, vector<1x168x84xbf16>
    %194 = vector.shape_cast %193 : vector<1x168x84xbf16> to vector<168x84xbf16>
    %195 = arith.truncf %188 : vector<14x168xf32> to vector<14x168xbf16>
    %cst_144 = arith.constant dense<0.000000e+00> : vector<14x84xf32>
    %196 = tpu.matmul %195, %194, %cst_144 {dimension_numbers = #tpu.dot_dimension_numbers<[1], [0], [0], [1], [0, 0, 1, 1], [], []>} : vector<14x168xbf16>, vector<168x84xbf16>, vector<14x84xf32> -> vector<14x84xf32>
    %197 = arith.maximumf %192, %196 : vector<14x84xf32>
    %198 = vector.extract_strided_slice %197 {offsets = [0, 0], sizes = [10, 84], strides = [1, 1]} : vector<14x84xf32> to vector<10x84xf32>
    %c0_145 = arith.constant 0 : index
    %c0_146 = arith.constant 0 : index
    %c0_147 = arith.constant 0 : index
    %199 = vector.load %arg3[%c0_145, %c0_146, %c0_147] : memref<5x84x160xbf16, #tpu.memory_space<vmem>>, vector<1x84x160xbf16>
    %200 = vector.shape_cast %199 : vector<1x84x160xbf16> to vector<84x160xbf16>
    %201 = arith.truncf %198 : vector<10x84xf32> to vector<10x84xbf16>
    %cst_148 = arith.constant dense<0.000000e+00> : vector<10x160xf32>
    %202 = tpu.matmul %201, %200, %cst_148 {dimension_numbers = #tpu.dot_dimension_numbers<[1], [0], [0], [1], [0, 0, 1, 1], [], []>} : vector<10x84xbf16>, vector<84x160xbf16>, vector<10x160xf32> -> vector<10x160xf32>
    %203 = vector.extract_strided_slice %197 {offsets = [1, 0], sizes = [10, 84], strides = [1, 1]} : vector<14x84xf32> to vector<10x84xf32>
    %c1_149 = arith.constant 1 : index
    %c0_150 = arith.constant 0 : index
    %c0_151 = arith.constant 0 : index
    %204 = vector.load %arg3[%c1_149, %c0_150, %c0_151] : memref<5x84x160xbf16, #tpu.memory_space<vmem>>, vector<1x84x160xbf16>
    %205 = vector.shape_cast %204 : vector<1x84x160xbf16> to vector<84x160xbf16>
    %206 = arith.truncf %203 : vector<10x84xf32> to vector<10x84xbf16>
    %cst_152 = arith.constant dense<0.000000e+00> : vector<10x160xf32>
    %207 = tpu.matmul %206, %205, %cst_152 {dimension_numbers = #tpu.dot_dimension_numbers<[1], [0], [0], [1], [0, 0, 1, 1], [], []>} : vector<10x84xbf16>, vector<84x160xbf16>, vector<10x160xf32> -> vector<10x160xf32>
    %208 = vector.extract_strided_slice %197 {offsets = [2, 0], sizes = [10, 84], strides = [1, 1]} : vector<14x84xf32> to vector<10x84xf32>
    %c2_153 = arith.constant 2 : index
    %c0_154 = arith.constant 0 : index
    %c0_155 = arith.constant 0 : index
    %209 = vector.load %arg3[%c2_153, %c0_154, %c0_155] : memref<5x84x160xbf16, #tpu.memory_space<vmem>>, vector<1x84x160xbf16>
    %210 = vector.shape_cast %209 : vector<1x84x160xbf16> to vector<84x160xbf16>
    %211 = arith.truncf %208 : vector<10x84xf32> to vector<10x84xbf16>
    %cst_156 = arith.constant dense<0.000000e+00> : vector<10x160xf32>
    %212 = tpu.matmul %211, %210, %cst_156 {dimension_numbers = #tpu.dot_dimension_numbers<[1], [0], [0], [1], [0, 0, 1, 1], [], []>} : vector<10x84xbf16>, vector<84x160xbf16>, vector<10x160xf32> -> vector<10x160xf32>
    %213 = vector.extract_strided_slice %197 {offsets = [3, 0], sizes = [10, 84], strides = [1, 1]} : vector<14x84xf32> to vector<10x84xf32>
    %c3_157 = arith.constant 3 : index
    %c0_158 = arith.constant 0 : index
    %c0_159 = arith.constant 0 : index
    %214 = vector.load %arg3[%c3_157, %c0_158, %c0_159] : memref<5x84x160xbf16, #tpu.memory_space<vmem>>, vector<1x84x160xbf16>
    %215 = vector.shape_cast %214 : vector<1x84x160xbf16> to vector<84x160xbf16>
    %216 = arith.truncf %213 : vector<10x84xf32> to vector<10x84xbf16>
    %cst_160 = arith.constant dense<0.000000e+00> : vector<10x160xf32>
    %217 = tpu.matmul %216, %215, %cst_160 {dimension_numbers = #tpu.dot_dimension_numbers<[1], [0], [0], [1], [0, 0, 1, 1], [], []>} : vector<10x84xbf16>, vector<84x160xbf16>, vector<10x160xf32> -> vector<10x160xf32>
    %218 = vector.extract_strided_slice %197 {offsets = [4, 0], sizes = [10, 84], strides = [1, 1]} : vector<14x84xf32> to vector<10x84xf32>
    %c4_161 = arith.constant 4 : index
    %c0_162 = arith.constant 0 : index
    %c0_163 = arith.constant 0 : index
    %219 = vector.load %arg3[%c4_161, %c0_162, %c0_163] : memref<5x84x160xbf16, #tpu.memory_space<vmem>>, vector<1x84x160xbf16>
    %220 = vector.shape_cast %219 : vector<1x84x160xbf16> to vector<84x160xbf16>
    %221 = arith.truncf %218 : vector<10x84xf32> to vector<10x84xbf16>
    %cst_164 = arith.constant dense<0.000000e+00> : vector<10x160xf32>
    %222 = tpu.matmul %221, %220, %cst_164 {dimension_numbers = #tpu.dot_dimension_numbers<[1], [0], [0], [1], [0, 0, 1, 1], [], []>} : vector<10x84xbf16>, vector<84x160xbf16>, vector<10x160xf32> -> vector<10x160xf32>
    %223 = arith.addf %202, %207 : vector<10x160xf32>
    %224 = arith.addf %212, %217 : vector<10x160xf32>
    %225 = arith.addf %223, %224 : vector<10x160xf32>
    %226 = arith.addf %225, %222 : vector<10x160xf32>
    %227 = vector.broadcast %1 : vector<1x160xf32> to vector<10x160xf32>
    %228 = arith.addf %226, %227 : vector<10x160xf32>
    %cst_165 = arith.constant 0.000000e+00 : f32
    %229 = vector.broadcast %cst_165 : f32 to vector<10x160xf32>
    %230 = arith.maximumf %228, %229 : vector<10x160xf32>
    %c0_166 = arith.constant 0 : index
    %c0_167 = arith.constant 0 : index
    %c0_168 = arith.constant 0 : index
    %231 = vector.load %arg7[%c0_166, %c0_167, %c0_168] : memref<2x5x10xbf16, #tpu.memory_space<vmem>>, vector<1x5x10xbf16>
    %232 = vector.shape_cast %231 : vector<1x5x10xbf16> to vector<5x10xbf16>
    %233 = arith.truncf %230 : vector<10x160xf32> to vector<10x160xbf16>
    %cst_169 = arith.constant dense<0.000000e+00> : vector<5x160xf32>
    %234 = tpu.matmul %232, %233, %cst_169 {dimension_numbers = #tpu.dot_dimension_numbers<[1], [0], [0], [1], [0, 0, 1, 1], [], []>} : vector<5x10xbf16>, vector<10x160xbf16>, vector<5x160xf32> -> vector<5x160xf32>
    %c1_170 = arith.constant 1 : index
    %c0_171 = arith.constant 0 : index
    %c0_172 = arith.constant 0 : index
    %235 = vector.load %arg7[%c1_170, %c0_171, %c0_172] : memref<2x5x10xbf16, #tpu.memory_space<vmem>>, vector<1x5x10xbf16>
    %236 = vector.shape_cast %235 : vector<1x5x10xbf16> to vector<5x10xbf16>
    %237 = arith.truncf %230 : vector<10x160xf32> to vector<10x160xbf16>
    %cst_173 = arith.constant dense<0.000000e+00> : vector<5x160xf32>
    %238 = tpu.matmul %236, %237, %cst_173 {dimension_numbers = #tpu.dot_dimension_numbers<[1], [0], [0], [1], [0, 0, 1, 1], [], []>} : vector<5x10xbf16>, vector<10x160xbf16>, vector<5x160xf32> -> vector<5x160xf32>
    %239 = arith.maximumf %234, %238 : vector<5x160xf32>
    %c0_174 = arith.constant 0 : index
    %c0_175 = arith.constant 0 : index
    %c0_176 = arith.constant 0 : index
    %240 = vector.load %arg8[%c0_174, %c0_175, %c0_176] : memref<2x160x80xbf16, #tpu.memory_space<vmem>>, vector<1x160x80xbf16>
    %241 = vector.shape_cast %240 : vector<1x160x80xbf16> to vector<160x80xbf16>
    %242 = arith.truncf %239 : vector<5x160xf32> to vector<5x160xbf16>
    %cst_177 = arith.constant dense<0.000000e+00> : vector<5x80xf32>
    %243 = tpu.matmul %242, %241, %cst_177 {dimension_numbers = #tpu.dot_dimension_numbers<[1], [0], [0], [1], [0, 0, 1, 1], [], []>} : vector<5x160xbf16>, vector<160x80xbf16>, vector<5x80xf32> -> vector<5x80xf32>
    %c1_178 = arith.constant 1 : index
    %c0_179 = arith.constant 0 : index
    %c0_180 = arith.constant 0 : index
    %244 = vector.load %arg8[%c1_178, %c0_179, %c0_180] : memref<2x160x80xbf16, #tpu.memory_space<vmem>>, vector<1x160x80xbf16>
    %245 = vector.shape_cast %244 : vector<1x160x80xbf16> to vector<160x80xbf16>
    %246 = arith.truncf %239 : vector<5x160xf32> to vector<5x160xbf16>
    %cst_181 = arith.constant dense<0.000000e+00> : vector<5x80xf32>
    %247 = tpu.matmul %246, %245, %cst_181 {dimension_numbers = #tpu.dot_dimension_numbers<[1], [0], [0], [1], [0, 0, 1, 1], [], []>} : vector<5x160xbf16>, vector<160x80xbf16>, vector<5x80xf32> -> vector<5x80xf32>
    %248 = arith.maximumf %243, %247 : vector<5x80xf32>
    %249 = vector.extract_strided_slice %248 {offsets = [0, 0], sizes = [1, 80], strides = [1, 1]} : vector<5x80xf32> to vector<1x80xf32>
    %c0_182 = arith.constant 0 : index
    %c0_183 = arith.constant 0 : index
    %c0_184 = arith.constant 0 : index
    %250 = vector.load %arg4[%c0_182, %c0_183, %c0_184] : memref<5x80x84xbf16, #tpu.memory_space<vmem>>, vector<1x80x84xbf16>
    %251 = vector.shape_cast %250 : vector<1x80x84xbf16> to vector<80x84xbf16>
    %252 = arith.truncf %249 : vector<1x80xf32> to vector<1x80xbf16>
    %cst_185 = arith.constant dense<0.000000e+00> : vector<1x84xf32>
    %253 = tpu.matmul %252, %251, %cst_185 {dimension_numbers = #tpu.dot_dimension_numbers<[1], [0], [0], [1], [0, 0, 1, 1], [], []>} : vector<1x80xbf16>, vector<80x84xbf16>, vector<1x84xf32> -> vector<1x84xf32>
    %254 = vector.extract_strided_slice %248 {offsets = [1, 0], sizes = [1, 80], strides = [1, 1]} : vector<5x80xf32> to vector<1x80xf32>
    %c1_186 = arith.constant 1 : index
    %c0_187 = arith.constant 0 : index
    %c0_188 = arith.constant 0 : index
    %255 = vector.load %arg4[%c1_186, %c0_187, %c0_188] : memref<5x80x84xbf16, #tpu.memory_space<vmem>>, vector<1x80x84xbf16>
    %256 = vector.shape_cast %255 : vector<1x80x84xbf16> to vector<80x84xbf16>
    %257 = arith.truncf %254 : vector<1x80xf32> to vector<1x80xbf16>
    %cst_189 = arith.constant dense<0.000000e+00> : vector<1x84xf32>
    %258 = tpu.matmul %257, %256, %cst_189 {dimension_numbers = #tpu.dot_dimension_numbers<[1], [0], [0], [1], [0, 0, 1, 1], [], []>} : vector<1x80xbf16>, vector<80x84xbf16>, vector<1x84xf32> -> vector<1x84xf32>
    %259 = vector.extract_strided_slice %248 {offsets = [2, 0], sizes = [1, 80], strides = [1, 1]} : vector<5x80xf32> to vector<1x80xf32>
    %c2_190 = arith.constant 2 : index
    %c0_191 = arith.constant 0 : index
    %c0_192 = arith.constant 0 : index
    %260 = vector.load %arg4[%c2_190, %c0_191, %c0_192] : memref<5x80x84xbf16, #tpu.memory_space<vmem>>, vector<1x80x84xbf16>
    %261 = vector.shape_cast %260 : vector<1x80x84xbf16> to vector<80x84xbf16>
    %262 = arith.truncf %259 : vector<1x80xf32> to vector<1x80xbf16>
    %cst_193 = arith.constant dense<0.000000e+00> : vector<1x84xf32>
    %263 = tpu.matmul %262, %261, %cst_193 {dimension_numbers = #tpu.dot_dimension_numbers<[1], [0], [0], [1], [0, 0, 1, 1], [], []>} : vector<1x80xbf16>, vector<80x84xbf16>, vector<1x84xf32> -> vector<1x84xf32>
    %264 = vector.extract_strided_slice %248 {offsets = [3, 0], sizes = [1, 80], strides = [1, 1]} : vector<5x80xf32> to vector<1x80xf32>
    %c3_194 = arith.constant 3 : index
    %c0_195 = arith.constant 0 : index
    %c0_196 = arith.constant 0 : index
    %265 = vector.load %arg4[%c3_194, %c0_195, %c0_196] : memref<5x80x84xbf16, #tpu.memory_space<vmem>>, vector<1x80x84xbf16>
    %266 = vector.shape_cast %265 : vector<1x80x84xbf16> to vector<80x84xbf16>
    %267 = arith.truncf %264 : vector<1x80xf32> to vector<1x80xbf16>
    %cst_197 = arith.constant dense<0.000000e+00> : vector<1x84xf32>
    %268 = tpu.matmul %267, %266, %cst_197 {dimension_numbers = #tpu.dot_dimension_numbers<[1], [0], [0], [1], [0, 0, 1, 1], [], []>} : vector<1x80xbf16>, vector<80x84xbf16>, vector<1x84xf32> -> vector<1x84xf32>
    %269 = vector.extract_strided_slice %248 {offsets = [4, 0], sizes = [1, 80], strides = [1, 1]} : vector<5x80xf32> to vector<1x80xf32>
    %c4_198 = arith.constant 4 : index
    %c0_199 = arith.constant 0 : index
    %c0_200 = arith.constant 0 : index
    %270 = vector.load %arg4[%c4_198, %c0_199, %c0_200] : memref<5x80x84xbf16, #tpu.memory_space<vmem>>, vector<1x80x84xbf16>
    %271 = vector.shape_cast %270 : vector<1x80x84xbf16> to vector<80x84xbf16>
    %272 = arith.truncf %269 : vector<1x80xf32> to vector<1x80xbf16>
    %cst_201 = arith.constant dense<0.000000e+00> : vector<1x84xf32>
    %273 = tpu.matmul %272, %271, %cst_201 {dimension_numbers = #tpu.dot_dimension_numbers<[1], [0], [0], [1], [0, 0, 1, 1], [], []>} : vector<1x80xbf16>, vector<80x84xbf16>, vector<1x84xf32> -> vector<1x84xf32>
    %274 = arith.addf %253, %258 : vector<1x84xf32>
    %275 = arith.addf %263, %268 : vector<1x84xf32>
    %276 = arith.addf %274, %275 : vector<1x84xf32>
    %277 = arith.addf %276, %273 : vector<1x84xf32>
    %278 = arith.addf %277, %2 : vector<1x84xf32>
    %cst_202 = arith.constant 0.000000e+00 : f32
    %279 = vector.broadcast %cst_202 : f32 to vector<1x84xf32>
    %280 = arith.maximumf %278, %279 : vector<1x84xf32>
    %281 = arith.truncf %280 : vector<1x84xf32> to vector<1x84xbf16>
    %cst_203 = arith.constant dense<0.000000e+00> : vector<1x128xf32>
    %282 = tpu.matmul %281, %4, %cst_203 {dimension_numbers = #tpu.dot_dimension_numbers<[1], [0], [0], [1], [0, 0, 1, 1], [], []>} : vector<1x84xbf16>, vector<84x128xbf16>, vector<1x128xf32> -> vector<1x128xf32>
    %283 = arith.addf %282, %3 : vector<1x128xf32>
    %c1_204 = arith.constant 1 : index
    %c0_205 = arith.constant 0 : index
    %284 = vector.load %arg14[%c1_204, %c0_205] : memref<2x128xf32, #tpu.memory_space<vmem>>, vector<1x128xf32>
    tpu.vector_store %arg14[%c1_204, %c0_205], %283 {strides = array<i32>} : memref<2x128xf32, #tpu.memory_space<vmem>>, vector<1x128xf32>,
    return
  }
  func.func @transform_0(%arg0: i32) -> (i32, i32, i32) {
    %c0_i32 = arith.constant 0 : i32
    %c0_i32_0 = arith.constant 0 : i32
    %c0_i32_1 = arith.constant 0 : i32
    return %arg0, %c0_i32, %c0_i32_0 : i32, i32, i32
  }
  func.func @transform_1(%arg0: i32) -> (i32, i32, i32) {
    %c0_i32 = arith.constant 0 : i32
    %c0_i32_0 = arith.constant 0 : i32
    %c0_i32_1 = arith.constant 0 : i32
    %c0_i32_2 = arith.constant 0 : i32
    return %c0_i32, %c0_i32_0, %c0_i32_1 : i32, i32, i32
  }
  func.func @transform_2(%arg0: i32) -> (i32, i32, i32) {
    %c0_i32 = arith.constant 0 : i32
    %c0_i32_0 = arith.constant 0 : i32
    %c0_i32_1 = arith.constant 0 : i32
    %c0_i32_2 = arith.constant 0 : i32
    return %c0_i32, %c0_i32_0, %c0_i32_1 : i32, i32, i32
  }
  func.func @transform_3(%arg0: i32) -> (i32, i32, i32) {
    %c0_i32 = arith.constant 0 : i32
    %c0_i32_0 = arith.constant 0 : i32
    %c0_i32_1 = arith.constant 0 : i32
    %c0_i32_2 = arith.constant 0 : i32
    return %c0_i32, %c0_i32_0, %c0_i32_1 : i32, i32, i32
  }
  func.func @transform_4(%arg0: i32) -> (i32, i32, i32) {
    %c0_i32 = arith.constant 0 : i32
    %c0_i32_0 = arith.constant 0 : i32
    %c0_i32_1 = arith.constant 0 : i32
    %c0_i32_2 = arith.constant 0 : i32
    return %c0_i32, %c0_i32_0, %c0_i32_1 : i32, i32, i32
  }
  func.func @transform_5(%arg0: i32) -> (i32, i32, i32) {
    %c0_i32 = arith.constant 0 : i32
    %c0_i32_0 = arith.constant 0 : i32
    %c0_i32_1 = arith.constant 0 : i32
    %c0_i32_2 = arith.constant 0 : i32
    return %c0_i32, %c0_i32_0, %c0_i32_1 : i32, i32, i32
  }
  func.func @transform_6(%arg0: i32) -> (i32, i32, i32) {
    %c0_i32 = arith.constant 0 : i32
    %c0_i32_0 = arith.constant 0 : i32
    %c0_i32_1 = arith.constant 0 : i32
    %c0_i32_2 = arith.constant 0 : i32
    return %c0_i32, %c0_i32_0, %c0_i32_1 : i32, i32, i32
  }
  func.func @transform_7(%arg0: i32) -> (i32, i32, i32) {
    %c0_i32 = arith.constant 0 : i32
    %c0_i32_0 = arith.constant 0 : i32
    %c0_i32_1 = arith.constant 0 : i32
    %c0_i32_2 = arith.constant 0 : i32
    return %c0_i32, %c0_i32_0, %c0_i32_1 : i32, i32, i32
  }
  func.func @transform_8(%arg0: i32) -> (i32, i32) {
    %c0_i32 = arith.constant 0 : i32
    %c0_i32_0 = arith.constant 0 : i32
    %c0_i32_1 = arith.constant 0 : i32
    return %c0_i32, %c0_i32_0 : i32, i32
  }
  func.func @transform_9(%arg0: i32) -> (i32, i32) {
    %c0_i32 = arith.constant 0 : i32
    %c0_i32_0 = arith.constant 0 : i32
    %c0_i32_1 = arith.constant 0 : i32
    return %c0_i32, %c0_i32_0 : i32, i32
  }
  func.func @transform_10(%arg0: i32) -> (i32, i32) {
    %c0_i32 = arith.constant 0 : i32
    %c0_i32_0 = arith.constant 0 : i32
    %c0_i32_1 = arith.constant 0 : i32
    return %c0_i32, %c0_i32_0 : i32, i32
  }
  func.func @transform_11(%arg0: i32) -> (i32, i32) {
    %c0_i32 = arith.constant 0 : i32
    %c0_i32_0 = arith.constant 0 : i32
    %c0_i32_1 = arith.constant 0 : i32
    return %c0_i32, %c0_i32_0 : i32, i32
  }
  func.func @transform_12(%arg0: i32) -> (i32, i32) {
    %c0_i32 = arith.constant 0 : i32
    %c0_i32_0 = arith.constant 0 : i32
    %c0_i32_1 = arith.constant 0 : i32
    return %c0_i32, %c0_i32_0 : i32, i32
  }
  func.func @transform_13(%arg0: i32) -> (i32, i32) {
    %c0_i32 = arith.constant 0 : i32
    %c0_i32_0 = arith.constant 0 : i32
    return %arg0, %c0_i32 : i32, i32
  }
}

</mosaic_0001>

<llo_original>
// kernel: lenet5_forward.1
$region0: #{lenet5_forward.1}
  #allocation0 [shape = 'u32[]', space=smem, size = 0x4, offset = 0x4, fixed_abs, tag = 'smem constant byte address 0x4 - core index']
  #allocation1 [shape = 'u32[72,128]{1,0:T(1,128)}', space=vmem, size = 0x9000, scoped, tag = 'internal scratch']
  %s0 = inlined_call_operand.vmem [shape: f32[2,32,32], index: 0, kind: input, shape index: {}]
  %s1 = inlined_call_operand.vmem [shape: bf16[5,32,168], index: 1, kind: input, shape index: {}]
  %s2 = inlined_call_operand.vmem [shape: bf16[5,84,160], index: 2, kind: input, shape index: {}]
  %s3 = inlined_call_operand.vmem [shape: bf16[5,80,84], index: 3, kind: input, shape index: {}]
  %s4 = inlined_call_operand.vmem [shape: bf16[2,14,28], index: 4, kind: input, shape index: {}]
  %s5 = inlined_call_operand.vmem [shape: bf16[2,168,84], index: 5, kind: input, shape index: {}]
  %s6 = inlined_call_operand.vmem [shape: bf16[2,5,10], index: 6, kind: input, shape index: {}]
  %s7 = inlined_call_operand.vmem [shape: bf16[2,160,80], index: 7, kind: input, shape index: {}]
  %s8 = inlined_call_operand.vmem [shape: f32[1,168], index: 8, kind: input, shape index: {}]
  %s9 = inlined_call_operand.vmem [shape: f32[1,160], index: 9, kind: input, shape index: {}]
  %s10 = inlined_call_operand.vmem [shape: f32[1,84], index: 10, kind: input, shape index: {}]
  %s11 = inlined_call_operand.vmem [shape: bf16[84,128], index: 11, kind: input, shape index: {}]
  %s12 = inlined_call_operand.vmem [shape: f32[1,128], index: 12, kind: input, shape index: {}]
  %s13 = inlined_call_operand.hbm [shape: f32[2,128], index: 13, kind: output, shape index: {}]
  %s14 = sld [smem:[#allocation0]]
  $region62: #{lenet5_forward.1} parent=0
    _
  %s16 = ssub.s32 1, %s14
  %s17 = scalar_select 0, %s16, %s14
  $region1: #{lenet5_forward.1} parent=0
    #allocation2 [shape = 'u8[1024]{0}', space=vmem, size = 0x400, scoped, tag = 'output window, operand 0, single buffered']
    #allocation3 [shape = 's32[1]{0}', space=sflag, size = 0x4, scoped, tag = 'scoped memory for lenet5_forward.1']
    %18 = vsyncpa [#allocation3], 0
    // Predicated region
    $region2: #{lenet5_forward.1} parent=1 // pred_check
      _
    $region3: #{lenet5_forward.1} parent=1 // pred_check_branch
      %20 = sbr.rel (0) target = $region5
    $region4: #{lenet5_forward.1} parent=1 // pred_region
      _
    $region5: #{lenet5_forward.1} parent=1 // pred_fallthru
      _
    // Predicated region
    $region6: #{lenet5_forward.1} parent=1 // pred_check
      _
    $region7: #{lenet5_forward.1} parent=1 // pred_check_branch
      %22 = sbr.rel (0) target = $region9
    $region8: #{lenet5_forward.1} parent=1 // pred_region
      _
    $region9: #{lenet5_forward.1} parent=1 // pred_fallthru
      _
    // Predicated region
    $region10: #{lenet5_forward.1} parent=1 // pred_check
      _
    $region11: #{lenet5_forward.1} parent=1 // pred_check_branch
      %24 = sbr.rel (0) target = $region13
    $region12: #{lenet5_forward.1} parent=1 // pred_region
      _
    $region13: #{lenet5_forward.1} parent=1 // pred_fallthru
      _
    // Predicated region
    $region14: #{lenet5_forward.1} parent=1 // pred_check
      _
    $region15: #{lenet5_forward.1} parent=1 // pred_check_branch
      %26 = sbr.rel (0) target = $region17
    $region16: #{lenet5_forward.1} parent=1 // pred_region
      _
    $region17: #{lenet5_forward.1} parent=1 // pred_fallthru
      _
    // Predicated region
    $region18: #{lenet5_forward.1} parent=1 // pred_check
      _
    $region19: #{lenet5_forward.1} parent=1 // pred_check_branch
      %28 = sbr.rel (0) target = $region21
    $region20: #{lenet5_forward.1} parent=1 // pred_region
      _
    $region21: #{lenet5_forward.1} parent=1 // pred_fallthru
      _
    // Predicated region
    $region22: #{lenet5_forward.1} parent=1 // pred_check
      _
    $region23: #{lenet5_forward.1} parent=1 // pred_check_branch
      %30 = sbr.rel (0) target = $region25
    $region24: #{lenet5_forward.1} parent=1 // pred_region
      _
    $region25: #{lenet5_forward.1} parent=1 // pred_fallthru
      _
    // Predicated region
    $region26: #{lenet5_forward.1} parent=1 // pred_check
      _
    $region27: #{lenet5_forward.1} parent=1 // pred_check_branch
      %32 = sbr.rel (0) target = $region29
    $region28: #{lenet5_forward.1} parent=1 // pred_region
      _
    $region29: #{lenet5_forward.1} parent=1 // pred_fallthru
      _
    // Predicated region
    $region30: #{lenet5_forward.1} parent=1 // pred_check
      _
    $region31: #{lenet5_forward.1} parent=1 // pred_check_branch
      %34 = sbr.rel (0) target = $region33
    $region32: #{lenet5_forward.1} parent=1 // pred_region
      _
    $region33: #{lenet5_forward.1} parent=1 // pred_fallthru
      _
    // Predicated region
    $region34: #{lenet5_forward.1} parent=1 // pred_check
      _
    $region35: #{lenet5_forward.1} parent=1 // pred_check_branch
      %36 = sbr.rel (0) target = $region37
    $region36: #{lenet5_forward.1} parent=1 // pred_region
      _
    $region37: #{lenet5_forward.1} parent=1 // pred_fallthru
      _
    // Predicated region
    $region38: #{lenet5_forward.1} parent=1 // pred_check
      _
    $region39: #{lenet5_forward.1} parent=1 // pred_check_branch
      %38 = sbr.rel (0) target = $region41
    $region40: #{lenet5_forward.1} parent=1 // pred_region
      _
    $region41: #{lenet5_forward.1} parent=1 // pred_fallthru
      _
    // Predicated region
    $region42: #{lenet5_forward.1} parent=1 // pred_check
      _
    $region43: #{lenet5_forward.1} parent=1 // pred_check_branch
      %40 = sbr.rel (0) target = $region45
    $region44: #{lenet5_forward.1} parent=1 // pred_region
      _
    $region45: #{lenet5_forward.1} parent=1 // pred_fallthru
      _
    // Predicated region
    $region46: #{lenet5_forward.1} parent=1 // pred_check
      _
    $region47: #{lenet5_forward.1} parent=1 // pred_check_branch
      %42 = sbr.rel (0) target = $region49
    $region48: #{lenet5_forward.1} parent=1 // pred_region
      _
    $region49: #{lenet5_forward.1} parent=1 // pred_fallthru
      _
    // Predicated region
    $region50: #{lenet5_forward.1} parent=1 // pred_check
      _
    $region51: #{lenet5_forward.1} parent=1 // pred_check_branch
      %44 = sbr.rel (0) target = $region53
    $region52: #{lenet5_forward.1} parent=1 // pred_region
      _
    $region53: #{lenet5_forward.1} parent=1 // pred_fallthru
      _
    %v46 = vld [vmem:[%s8] sm:$0x3]
    %v47 = vld [vmem:[%s9] sm:$0x3]
    %v48 = vld [vmem:[%s10] sm:$0x1]
    %v49 = vld [vmem:[%s12] sm:$0x1]
    %v50 = vld [vmem:[%s11] sm:$0xf]
    %v51 = vld [vmem:[%s11 + $0x4] sm:$0xf]
    %v52 = vld [vmem:[%s11 + $0x8] sm:$0xf]
    %v53 = vld [vmem:[%s11 + $0xc] sm:$0xf]
    %v54 = vld [vmem:[%s11 + $0x10] sm:$0xf]
    %v55 = vld [vmem:[%s11 + $0x14] sm:$0xf]
    %v56 = vld [vmem:[%s11 + $0x18] sm:$0xf]
    %v57 = vld [vmem:[%s11 + $0x1c] sm:$0xf]
    %v58 = vld [vmem:[%s11 + $0x20] sm:$0xf]
    %v59 = vld [vmem:[%s11 + $0x24] sm:$0xf]
    %v60 = vld [vmem:[%s11 + $0x28] sm:$0x3]
    %v61 = vld [vmem:[%s0] sm:$0xff]
    %v62 = vld [vmem:[%s0 + $0x8] sm:$0xff]
    %v63 = vld [vmem:[%s0 + $0x10] sm:$0xff]
    %v64 = vld [vmem:[%s0 + $0x18] sm:$0xff]
    %v65 = vld [vmem:[%s1] sm:$0xff]
    %v66 = vld [vmem:[%s1 + $0x8] sm:$0xff]
    %v67 = vld [vmem:[%s1 + $0x10] sm:$0xff]
    %v68 = vld [vmem:[%s1 + $0x18] sm:$0xff]
    %v69 = vpack.c.bf16 %v62, %v61
    %v70 = vpack.c.bf16 %v64, %v63
    %s71 = scalar_lea.vmem %s1, 32
    %v72 = vld [vmem:[%s71] sm:$0xff]
    %v73 = vld [vmem:[%s71 + $0x8] sm:$0xff]
    %v74 = vld [vmem:[%s71 + $0x10] sm:$0xff]
    %v75 = vld [vmem:[%s71 + $0x18] sm:$0xff]
    %vm76 = vsmask.f32 7424
    %v78 = vshrl.u32 %v69, 16
    %v80 = vshll.u32 %v69, 16
    %v82 = vrot.slane %v80, 1
    %v83 = vor.u32 %v78, %v82
    %v85 = vshll.u32 %v70, 16
    %v87 = vrot.slane %v85, 1
    %v88 = vsel %vm76, %v83, %v87
    %v89 = vshrl.u32 %v70, 16
    %v91 = vor.u32 %v89, %v87
    %v96 = vunpack.c.l.b16 %v72
    %v97 = vunpack.c.h.b16 %v72
    %v98 = vunpack.c.l.b16 %v73
    %v99 = vunpack.c.h.b16 %v73
    %v100 = vunpack.c.l.b16 %v74
    %v101 = vunpack.c.h.b16 %v74
    %v102 = vunpack.c.l.b16 %v75
    %v103 = vunpack.c.h.b16 %v75
    %v104 = vpack.c.b16 %v98, %v96
    %v105 = vpack.c.b16 %v99, %v97
    %v106 = vpack.c.b16 %v102, %v100
    %v107 = vpack.c.b16 %v103, %v101
    %vm112 = vcmask 261120
    %v114 = vsel %vm112, %v88, 0
    %v117 = vsel %vm112, %v91, 0
    %119 = vmatpush.bf16.msra.mxu0 0
    %120 = vmatpush.bf16.msra.mxu0 0
    %121 = vmatpush.bf16.msra.mxu0 0
    %122 = vmatpush.bf16.msra.mxu0 0
    %123 = vmatpush.bf16.msra.mxu0 0
    %124 = vmatpush.bf16.msra.mxu0 0
    %125 = vmatpush.bf16.msra.mxu0 %v106
    %126 = vmatpush.bf16.msra.mxu0 %v104
    %127 = vmatmul.bf16.gmra.mxu0 %v114
    %v128 = vpop.f32.mrf.mxu0
    %v129 = vadd.f32 0.0, %v128
    %v130 = vpop.f32.mrf.mxu0
    %v131 = vadd.f32 0.0, %v130
    %132 = vmatmul.bf16.gmra.mxu0 %v117
    %v133 = vpop.f32.mrf.mxu0
    %v134 = vadd.f32 0.0, %v133
    %v135 = vpop.f32.mrf.mxu0
    %v136 = vadd.f32 0.0, %v135
    %137 = vdwg.mxu0
    %138 = vmatpush.bf16.msra.mxu0 0
    %139 = vmatpush.bf16.msra.mxu0 0
    %140 = vmatpush.bf16.msra.mxu0 0
    %141 = vmatpush.bf16.msra.mxu0 0
    %142 = vmatpush.bf16.msra.mxu0 0
    %143 = vmatpush.bf16.msra.mxu0 0
    %144 = vmatpush.bf16.msra.mxu0 %v107
    %145 = vmatpush.bf16.msra.mxu0 %v105
    %146 = vmatmul.bf16.gmra.mxu0 %v114
    %v147 = vpop.f32.mrf.mxu0
    %v148 = vadd.f32 0.0, %v147
    %v149 = vpop.f32.mrf.mxu0
    %v150 = vadd.f32 0.0, %v149
    %151 = vmatmul.bf16.gmra.mxu0 %v117
    %v152 = vpop.f32.mrf.mxu0
    %v153 = vadd.f32 0.0, %v152
    %v154 = vpop.f32.mrf.mxu0
    %v155 = vadd.f32 0.0, %v154
    %156 = vdwg.mxu0
    %s157 = scalar_lea.vmem %s1, 64
    %v158 = vld [vmem:[%s157] sm:$0xff]
    %v159 = vld [vmem:[%s157 + $0x8] sm:$0xff]
    %v160 = vld [vmem:[%s157 + $0x10] sm:$0xff]
    %v161 = vld [vmem:[%s157 + $0x18] sm:$0xff]
    %s162 = scalar_lea.vmem %s1, 96
    %v163 = vld [vmem:[%s162] sm:$0xff]
    %v164 = vld [vmem:[%s162 + $0x8] sm:$0xff]
    %v165 = vld [vmem:[%s162 + $0x10] sm:$0xff]
    %v166 = vld [vmem:[%s162 + $0x18] sm:$0xff]
    %vm167 = vsmask.f32 6400
    %v168 = vrot.slane %v78, 1
    %v169 = vrot.slane %v80, 2
    %v170 = vor.u32 %v168, %v169
    %v171 = vrot.slane %v89, 1
    %v172 = vrot.slane %v85, 2
    %v173 = vor.u32 %v171, %v172
    %v174 = vsel %vm167, %v170, %v173
    %v179 = vunpack.c.l.b16 %v163
    %v180 = vunpack.c.h.b16 %v163
    %v181 = vunpack.c.l.b16 %v164
    %v182 = vunpack.c.h.b16 %v164
    %v183 = vunpack.c.l.b16 %v165
    %v184 = vunpack.c.h.b16 %v165
    %v185 = vunpack.c.l.b16 %v166
    %v186 = vunpack.c.h.b16 %v166
    %v187 = vpack.c.b16 %v181, %v179
    %v188 = vpack.c.b16 %v182, %v180
    %v189 = vpack.c.b16 %v185, %v183
    %v190 = vpack.c.b16 %v186, %v184
    %v196 = vsel %vm112, %v174, 0
    %v199 = vsel %vm112, %v173, 0
    %201 = vmatpush.bf16.msra.mxu0 0
    %202 = vmatpush.bf16.msra.mxu0 0
    %203 = vmatpush.bf16.msra.mxu0 0
    %204 = vmatpush.bf16.msra.mxu0 0
    %205 = vmatpush.bf16.msra.mxu0 0
    %206 = vmatpush.bf16.msra.mxu0 0
    %207 = vmatpush.bf16.msra.mxu0 %v189
    %208 = vmatpush.bf16.msra.mxu0 %v187
    %209 = vmatmul.bf16.gmra.mxu0 %v196
    %v210 = vpop.f32.mrf.mxu0
    %v211 = vadd.f32 0.0, %v210
    %v212 = vpop.f32.mrf.mxu0
    %v213 = vadd.f32 0.0, %v212
    %214 = vmatmul.bf16.gmra.mxu0 %v199
    %v215 = vpop.f32.mrf.mxu0
    %v216 = vadd.f32 0.0, %v215
    %v217 = vpop.f32.mrf.mxu0
    %v218 = vadd.f32 0.0, %v217
    %219 = vdwg.mxu0
    %220 = vmatpush.bf16.msra.mxu0 0
    %221 = vmatpush.bf16.msra.mxu0 0
    %222 = vmatpush.bf16.msra.mxu0 0
    %223 = vmatpush.bf16.msra.mxu0 0
    %224 = vmatpush.bf16.msra.mxu0 0
    %225 = vmatpush.bf16.msra.mxu0 0
    %226 = vmatpush.bf16.msra.mxu0 %v190
    %227 = vmatpush.bf16.msra.mxu0 %v188
    %228 = vmatmul.bf16.gmra.mxu0 %v196
    %v229 = vpop.f32.mrf.mxu0
    %v230 = vadd.f32 0.0, %v229
    %v231 = vpop.f32.mrf.mxu0
    %v232 = vadd.f32 0.0, %v231
    %233 = vmatmul.bf16.gmra.mxu0 %v199
    %v234 = vpop.f32.mrf.mxu0
    %v235 = vadd.f32 0.0, %v234
    %v236 = vpop.f32.mrf.mxu0
    %v237 = vadd.f32 0.0, %v236
    %238 = vdwg.mxu0
    %s239 = scalar_lea.vmem %s1, 128
    %v240 = vld [vmem:[%s239] sm:$0xff]
    %v241 = vld [vmem:[%s239 + $0x8] sm:$0xff]
    %v242 = vld [vmem:[%s239 + $0x10] sm:$0xff]
    %v243 = vld [vmem:[%s239 + $0x18] sm:$0xff]
    %vm246 = vcmask 1045504
    %v247 = vrot.slane %v69, 2
    %v248 = vrot.slane %v70, 2
    %v249 = vsel %vm246, %v247, %v248
    %v254 = vunpack.c.l.b16 %v240
    %v255 = vunpack.c.h.b16 %v240
    %v256 = vunpack.c.l.b16 %v241
    %v257 = vunpack.c.h.b16 %v241
    %v258 = vunpack.c.l.b16 %v242
    %v259 = vunpack.c.h.b16 %v242
    %v260 = vunpack.c.l.b16 %v243
    %v261 = vunpack.c.h.b16 %v243
    %v262 = vpack.c.b16 %v256, %v254
    %v263 = vpack.c.b16 %v257, %v255
    %v264 = vpack.c.b16 %v260, %v258
    %v265 = vpack.c.b16 %v261, %v259
    %v271 = vsel %vm112, %v249, 0
    %v274 = vsel %vm112, %v248, 0
    %276 = vmatpush.bf16.msra.mxu0 0
    %277 = vmatpush.bf16.msra.mxu0 0
    %278 = vmatpush.bf16.msra.mxu0 0
    %279 = vmatpush.bf16.msra.mxu0 0
    %280 = vmatpush.bf16.msra.mxu0 0
    %281 = vmatpush.bf16.msra.mxu0 0
    %282 = vmatpush.bf16.msra.mxu0 %v264
    %283 = vmatpush.bf16.msra.mxu0 %v262
    %284 = vmatmul.bf16.gmra.mxu0 %v271
    %v285 = vpop.f32.mrf.mxu0
    %v286 = vadd.f32 0.0, %v285
    %v287 = vpop.f32.mrf.mxu0
    %v288 = vadd.f32 0.0, %v287
    %289 = vmatmul.bf16.gmra.mxu0 %v274
    %v290 = vpop.f32.mrf.mxu0
    %v291 = vadd.f32 0.0, %v290
    %v292 = vpop.f32.mrf.mxu0
    %v293 = vadd.f32 0.0, %v292
    %294 = vdwg.mxu0
    %295 = vmatpush.bf16.msra.mxu0 0
    %296 = vmatpush.bf16.msra.mxu0 0
    %297 = vmatpush.bf16.msra.mxu0 0
    %298 = vmatpush.bf16.msra.mxu0 0
    %299 = vmatpush.bf16.msra.mxu0 0
    %300 = vmatpush.bf16.msra.mxu0 0
    %301 = vmatpush.bf16.msra.mxu0 %v265
    %302 = vmatpush.bf16.msra.mxu0 %v263
    %303 = vmatmul.bf16.gmra.mxu0 %v271
    %v304 = vpop.f32.mrf.mxu0
    %v305 = vadd.f32 0.0, %v304
    %v306 = vpop.f32.mrf.mxu0
    %v307 = vadd.f32 0.0, %v306
    %308 = vmatmul.bf16.gmra.mxu0 %v274
    %v309 = vpop.f32.mrf.mxu0
    %v310 = vadd.f32 0.0, %v309
    %v311 = vpop.f32.mrf.mxu0
    %v312 = vadd.f32 0.0, %v311
    %313 = vdwg.mxu0
    %v318 = vunpack.c.l.b16 %v65
    %v319 = vunpack.c.h.b16 %v65
    %v320 = vunpack.c.l.b16 %v66
    %v321 = vunpack.c.h.b16 %v66
    %v322 = vunpack.c.l.b16 %v67
    %v323 = vunpack.c.h.b16 %v67
    %v324 = vunpack.c.l.b16 %v68
    %v325 = vunpack.c.h.b16 %v68
    %v326 = vpack.c.b16 %v320, %v318
    %v327 = vpack.c.b16 %v321, %v319
    %v328 = vpack.c.b16 %v324, %v322
    %v329 = vpack.c.b16 %v325, %v323
    %v334 = vsel %vm112, %v69, 0
    %v336 = vsel %vm112, %v70, 0
    %338 = vmatpush.bf16.msra.mxu0 0
    %339 = vmatpush.bf16.msra.mxu0 0
    %340 = vmatpush.bf16.msra.mxu0 0
    %341 = vmatpush.bf16.msra.mxu0 0
    %342 = vmatpush.bf16.msra.mxu0 0
    %343 = vmatpush.bf16.msra.mxu0 0
    %344 = vmatpush.bf16.msra.mxu0 %v328
    %345 = vmatpush.bf16.msra.mxu0 %v326
    %346 = vmatmul.bf16.gmra.mxu0 %v334
    %v347 = vpop.f32.mrf.mxu0
    %v348 = vadd.f32 %v129, %v347
    %v349 = vpop.f32.mrf.mxu0
    %v350 = vadd.f32 %v131, %v349
    %351 = vmatmul.bf16.gmra.mxu0 %v336
    %v352 = vpop.f32.mrf.mxu0
    %v353 = vadd.f32 %v134, %v352
    %v354 = vpop.f32.mrf.mxu0
    %v355 = vadd.f32 %v136, %v354
    %356 = vdwg.mxu0
    %357 = vmatpush.bf16.msra.mxu0 0
    %358 = vmatpush.bf16.msra.mxu0 0
    %359 = vmatpush.bf16.msra.mxu0 0
    %360 = vmatpush.bf16.msra.mxu0 0
    %361 = vmatpush.bf16.msra.mxu0 0
    %362 = vmatpush.bf16.msra.mxu0 0
    %363 = vmatpush.bf16.msra.mxu0 %v329
    %364 = vmatpush.bf16.msra.mxu0 %v327
    %365 = vmatmul.bf16.gmra.mxu0 %v334
    %v366 = vpop.f32.mrf.mxu0
    %v367 = vadd.f32 %v148, %v366
    %v368 = vpop.f32.mrf.mxu0
    %v369 = vadd.f32 %v150, %v368
    %370 = vmatmul.bf16.gmra.mxu0 %v336
    %v371 = vpop.f32.mrf.mxu0
    %v372 = vadd.f32 %v153, %v371
    %v373 = vpop.f32.mrf.mxu0
    %v374 = vadd.f32 %v155, %v373
    %375 = vdwg.mxu0
    %vm376 = vcmask 1046528
    %v377 = vrot.slane %v69, 1
    %v378 = vrot.slane %v70, 1
    %v379 = vsel %vm376, %v377, %v378
    %v384 = vunpack.c.l.b16 %v158
    %v385 = vunpack.c.h.b16 %v158
    %v386 = vunpack.c.l.b16 %v159
    %v387 = vunpack.c.h.b16 %v159
    %v388 = vunpack.c.l.b16 %v160
    %v389 = vunpack.c.h.b16 %v160
    %v390 = vunpack.c.l.b16 %v161
    %v391 = vunpack.c.h.b16 %v161
    %v392 = vpack.c.b16 %v386, %v384
    %v393 = vpack.c.b16 %v387, %v385
    %v394 = vpack.c.b16 %v390, %v388
    %v395 = vpack.c.b16 %v391, %v389
    %v401 = vsel %vm112, %v379, 0
    %v404 = vsel %vm112, %v378, 0
    %406 = vmatpush.bf16.msra.mxu0 0
    %407 = vmatpush.bf16.msra.mxu0 0
    %408 = vmatpush.bf16.msra.mxu0 0
    %409 = vmatpush.bf16.msra.mxu0 0
    %410 = vmatpush.bf16.msra.mxu0 0
    %411 = vmatpush.bf16.msra.mxu0 0
    %412 = vmatpush.bf16.msra.mxu0 %v394
    %413 = vmatpush.bf16.msra.mxu0 %v392
    %414 = vmatmul.bf16.gmra.mxu0 %v401
    %v415 = vpop.f32.mrf.mxu0
    %v416 = vadd.f32 %v211, %v415
    %v417 = vpop.f32.mrf.mxu0
    %v418 = vadd.f32 %v213, %v417
    %419 = vmatmul.bf16.gmra.mxu0 %v404
    %v420 = vpop.f32.mrf.mxu0
    %v421 = vadd.f32 %v216, %v420
    %v422 = vpop.f32.mrf.mxu0
    %v423 = vadd.f32 %v218, %v422
    %424 = vdwg.mxu0
    %425 = vmatpush.bf16.msra.mxu0 0
    %426 = vmatpush.bf16.msra.mxu0 0
    %427 = vmatpush.bf16.msra.mxu0 0
    %428 = vmatpush.bf16.msra.mxu0 0
    %429 = vmatpush.bf16.msra.mxu0 0
    %430 = vmatpush.bf16.msra.mxu0 0
    %431 = vmatpush.bf16.msra.mxu0 %v395
    %432 = vmatpush.bf16.msra.mxu0 %v393
    %433 = vmatmul.bf16.gmra.mxu0 %v401
    %v434 = vpop.f32.mrf.mxu0
    %v435 = vadd.f32 %v230, %v434
    %v436 = vpop.f32.mrf.mxu0
    %v437 = vadd.f32 %v232, %v436
    %438 = vmatmul.bf16.gmra.mxu0 %v404
    %v439 = vpop.f32.mrf.mxu0
    %v440 = vadd.f32 %v235, %v439
    %v441 = vpop.f32.mrf.mxu0
    %v442 = vadd.f32 %v237, %v441
    %443 = vdwg.mxu0
    %v444 = vadd.f32 %v348, %v416
    %v445 = vadd.f32 %v367, %v435
    %v446 = vadd.f32 %v350, %v418
    %v447 = vadd.f32 %v369, %v437
    %v448 = vadd.f32 %v353, %v421
    %v449 = vadd.f32 %v372, %v440
    %v450 = vadd.f32 %v355, %v423
    %v451 = vadd.f32 %v374, %v442
    %v452 = vadd.f32 %v444, %v286
    %v453 = vadd.f32 %v445, %v305
    %v454 = vadd.f32 %v446, %v288
    %v455 = vadd.f32 %v447, %v307
    %v456 = vadd.f32 %v448, %v291
    %v457 = vadd.f32 %v449, %v310
    %v458 = vadd.f32 %v450, %v293
    %v459 = vadd.f32 %v451, %v312
    %v461 = vperm.slane %v46, 0
    %v462 = vperm.slane %v46, 1
    %v465 = vadd.f32 %v452, %v461
    %v466 = vadd.f32 %v453, %v462
    %v467 = vadd.f32 %v454, %v461
    %v468 = vadd.f32 %v455, %v462
    %v469 = vadd.f32 %v456, %v461
    %v470 = vadd.f32 %v457, %v462
    %v471 = vadd.f32 %v458, %v461
    %v472 = vadd.f32 %v459, %v462
    %v473 = vmax.f32 %v465, 0.0
    %v474 = vmax.f32 %v466, 0.0
    %v475 = vmax.f32 %v467, 0.0
    %v476 = vmax.f32 %v468, 0.0
    %v477 = vmax.f32 %v469, 0.0
    %v478 = vmax.f32 %v470, 0.0
    %v479 = vmax.f32 %v471, 0.0
    %v480 = vmax.f32 %v472, 0.0
    %v481 = vld [vmem:[%s4] sm:$0xf]
    %v482 = vld [vmem:[%s4 + $0x4] sm:$0x7]
    %v483 = vpack.c.bf16 %v475, %v473
    %v484 = vpack.c.bf16 %v476, %v474
    %v485 = vpack.c.bf16 %v479, %v477
    %v486 = vpack.c.bf16 %v480, %v478
    %v489 = vunpack.c.l.b16 %v481
    %v490 = vunpack.c.l.b16 %v482
    %v491 = vpack.c.b16 %v490, %v489
    %vm492 = vcmask 228352
    %v494 = vsel %vm492, %v491, 0
    %vm496 = vcmask 1045504
    %v498 = vsel %vm496, %v485, 0
    %v501 = vsel %vm496, %v486, 0
    %503 = vmatpush.bf16.msra.mxu0 0
    %504 = vmatpush.bf16.msra.mxu0 0
    %505 = vmatpush.bf16.msra.mxu0 0
    %506 = vmatpush.bf16.msra.mxu0 0
    %507 = vmatpush.bf16.msra.mxu0 0
    %508 = vmatpush.bf16.msra.mxu0 0
    %509 = vmatpush.bf16.msra.mxu0 %v498
    %510 = vmatpush.bf16.msra.mxu0 %v483
    %511 = vmatmul.bf16.gmra.mxu0 %v494
    %v512 = vpop.f32.mrf.mxu0
    %v513 = vadd.f32 0.0, %v512
    %v514 = vpop.f32.mrf.mxu0
    %v515 = vadd.f32 0.0, %v514
    %516 = vdwg.mxu0
    %517 = vmatpush.bf16.msra.mxu0 0
    %518 = vmatpush.bf16.msra.mxu0 0
    %519 = vmatpush.bf16.msra.mxu0 0
    %520 = vmatpush.bf16.msra.mxu0 0
    %521 = vmatpush.bf16.msra.mxu0 0
    %522 = vmatpush.bf16.msra.mxu0 0
    %523 = vmatpush.bf16.msra.mxu0 %v501
    %524 = vmatpush.bf16.msra.mxu0 %v484
    %525 = vmatmul.bf16.gmra.mxu0 %v494
    %v526 = vpop.f32.mrf.mxu0
    %v527 = vadd.f32 0.0, %v526
    %v528 = vpop.f32.mrf.mxu0
    %v529 = vadd.f32 0.0, %v528
    %530 = vdwg.mxu0
    %s531 = scalar_lea.vmem %s4, 8
    %v532 = vld [vmem:[%s531] sm:$0xf]
    %v533 = vld [vmem:[%s531 + $0x4] sm:$0x7]
    %v536 = vunpack.c.l.b16 %v532
    %v537 = vunpack.c.l.b16 %v533
    %v538 = vpack.c.b16 %v537, %v536
    %v540 = vsel %vm492, %v538, 0
    %542 = vmatpush.bf16.msra.mxu0 0
    %543 = vmatpush.bf16.msra.mxu0 0
    %544 = vmatpush.bf16.msra.mxu0 0
    %545 = vmatpush.bf16.msra.mxu0 0
    %546 = vmatpush.bf16.msra.mxu0 0
    %547 = vmatpush.bf16.msra.mxu0 0
    %548 = vmatpush.bf16.msra.mxu0 %v498
    %549 = vmatpush.bf16.msra.mxu0 %v483
    %550 = vmatmul.bf16.gmra.mxu0 %v540
    %v551 = vpop.f32.mrf.mxu0
    %v552 = vadd.f32 0.0, %v551
    %v553 = vpop.f32.mrf.mxu0
    %v554 = vadd.f32 0.0, %v553
    %555 = vdwg.mxu0
    %556 = vmatpush.bf16.msra.mxu0 0
    %557 = vmatpush.bf16.msra.mxu0 0
    %558 = vmatpush.bf16.msra.mxu0 0
    %559 = vmatpush.bf16.msra.mxu0 0
    %560 = vmatpush.bf16.msra.mxu0 0
    %561 = vmatpush.bf16.msra.mxu0 0
    %562 = vmatpush.bf16.msra.mxu0 %v501
    %563 = vmatpush.bf16.msra.mxu0 %v484
    %564 = vmatmul.bf16.gmra.mxu0 %v540
    %v565 = vpop.f32.mrf.mxu0
    %v566 = vadd.f32 0.0, %v565
    %v567 = vpop.f32.mrf.mxu0
    %v568 = vadd.f32 0.0, %v567
    %569 = vdwg.mxu0
    %v570 = vmax.f32 %v513, %v552
    %v571 = vmax.f32 %v527, %v566
    %v572 = vmax.f32 %v515, %v554
    %v573 = vmax.f32 %v529, %v568
    %v574 = vld [vmem:[%s5] sm:$0xf]
    %v575 = vld [vmem:[%s5 + $0x4] sm:$0xf]
    %v576 = vld [vmem:[%s5 + $0x8] sm:$0xf]
    %v577 = vld [vmem:[%s5 + $0xc] sm:$0xf]
    %v578 = vld [vmem:[%s5 + $0x10] sm:$0xf]
    %v579 = vld [vmem:[%s5 + $0x14] sm:$0xf]
    %v580 = vld [vmem:[%s5 + $0x18] sm:$0xf]
    %v581 = vld [vmem:[%s5 + $0x1c] sm:$0xf]
    %v582 = vld [vmem:[%s5 + $0x20] sm:$0xf]
    %v583 = vld [vmem:[%s5 + $0x24] sm:$0xf]
    %v584 = vld [vmem:[%s5 + $0x28] sm:$0xf]
    %v585 = vld [vmem:[%s5 + $0x2c] sm:$0xf]
    %v586 = vld [vmem:[%s5 + $0x30] sm:$0xf]
    %v587 = vld [vmem:[%s5 + $0x34] sm:$0xf]
    %v588 = vld [vmem:[%s5 + $0x38] sm:$0xf]
    %v589 = vld [vmem:[%s5 + $0x3c] sm:$0xf]
    %v590 = vld [vmem:[%s5 + $0x40] sm:$0xf]
    %v591 = vld [vmem:[%s5 + $0x44] sm:$0xf]
    %v592 = vld [vmem:[%s5 + $0x48] sm:$0xf]
    %v593 = vld [vmem:[%s5 + $0x4c] sm:$0xf]
    %v594 = vld [vmem:[%s5 + $0x50] sm:$0xf]
    %v595 = vpack.c.bf16 %v572, %v570
    %v596 = vpack.c.bf16 %v573, %v571
    %v618 = vunpack.c.l.b16 %v574
    %v619 = vunpack.c.l.b16 %v575
    %v620 = vunpack.c.l.b16 %v576
    %v621 = vunpack.c.l.b16 %v577
    %v622 = vunpack.c.l.b16 %v578
    %v623 = vunpack.c.l.b16 %v579
    %v624 = vunpack.c.l.b16 %v580
    %v625 = vunpack.c.l.b16 %v581
    %v626 = vunpack.c.l.b16 %v582
    %v627 = vunpack.c.l.b16 %v583
    %v628 = vunpack.c.l.b16 %v584
    %v629 = vunpack.c.l.b16 %v585
    %v630 = vunpack.c.l.b16 %v586
    %v631 = vunpack.c.l.b16 %v587
    %v632 = vunpack.c.l.b16 %v588
    %v633 = vunpack.c.l.b16 %v589
    %v634 = vunpack.c.l.b16 %v590
    %v635 = vunpack.c.l.b16 %v591
    %v636 = vunpack.c.l.b16 %v592
    %v637 = vunpack.c.l.b16 %v593
    %v638 = vunpack.c.l.b16 %v594
    %v639 = vpack.c.b16 %v619, %v618
    %v640 = vpack.c.b16 %v621, %v620
    %v641 = vpack.c.b16 %v623, %v622
    %v642 = vpack.c.b16 %v625, %v624
    %v643 = vpack.c.b16 %v627, %v626
    %v644 = vpack.c.b16 %v629, %v628
    %v645 = vpack.c.b16 %v631, %v630
    %v646 = vpack.c.b16 %v633, %v632
    %v647 = vpack.c.b16 %v635, %v634
    %v648 = vpack.c.b16 %v637, %v636
    %v649 = vpack.c.b16 %v638, %v638
    %vm660 = vcmask 326656
    %v662 = vsel %vm660, %v596, 0
    %vm664 = vcmask 1043456
    %v666 = vsel %vm664, %v649, 0
    %668 = vmatpush.bf16.msra.mxu0 %v646
    %669 = vmatpush.bf16.msra.mxu0 %v645
    %670 = vmatpush.bf16.msra.mxu0 %v644
    %671 = vmatpush.bf16.msra.mxu0 %v643
    %672 = vmatpush.bf16.msra.mxu0 %v642
    %673 = vmatpush.bf16.msra.mxu0 %v641
    %674 = vmatpush.bf16.msra.mxu0 %v640
    %675 = vmatpush.bf16.msra.mxu0 %v639
    %676 = vmatmul.bf16.gmra.mxu0 %v595
    %v677 = vpop.f32.mrf.mxu0
    %v678 = vadd.f32 0.0, %v677
    %v679 = vpop.f32.mrf.mxu0
    %v680 = vadd.f32 0.0, %v679
    %681 = vdwg.mxu0
    %682 = vmatpush.bf16.msra.mxu0 0
    %683 = vmatpush.bf16.msra.mxu0 0
    %684 = vmatpush.bf16.msra.mxu0 0
    %685 = vmatpush.bf16.msra.mxu0 0
    %686 = vmatpush.bf16.msra.mxu0 0
    %687 = vmatpush.bf16.msra.mxu0 %v666
    %688 = vmatpush.bf16.msra.mxu0 %v648
    %689 = vmatpush.bf16.msra.mxu0 %v647
    %690 = vmatmul.bf16.gmra.mxu0 %v662
    %v691 = vpop.f32.mrf.mxu0
    %v692 = vadd.f32 %v678, %v691
    %v693 = vpop.f32.mrf.mxu0
    %v694 = vadd.f32 %v680, %v693
    %695 = vdwg.mxu0
    %s696 = scalar_lea.vmem %s5, 84
    %v697 = vld [vmem:[%s696] sm:$0xf]
    %v698 = vld [vmem:[%s696 + $0x4] sm:$0xf]
    %v699 = vld [vmem:[%s696 + $0x8] sm:$0xf]
    %v700 = vld [vmem:[%s696 + $0xc] sm:$0xf]
    %v701 = vld [vmem:[%s696 + $0x10] sm:$0xf]
    %v702 = vld [vmem:[%s696 + $0x14] sm:$0xf]
    %v703 = vld [vmem:[%s696 + $0x18] sm:$0xf]
    %v704 = vld [vmem:[%s696 + $0x1c] sm:$0xf]
    %v705 = vld [vmem:[%s696 + $0x20] sm:$0xf]
    %v706 = vld [vmem:[%s696 + $0x24] sm:$0xf]
    %v707 = vld [vmem:[%s696 + $0x28] sm:$0xf]
    %v708 = vld [vmem:[%s696 + $0x2c] sm:$0xf]
    %v709 = vld [vmem:[%s696 + $0x30] sm:$0xf]
    %v710 = vld [vmem:[%s696 + $0x34] sm:$0xf]
    %v711 = vld [vmem:[%s696 + $0x38] sm:$0xf]
    %v712 = vld [vmem:[%s696 + $0x3c] sm:$0xf]
    %v713 = vld [vmem:[%s696 + $0x40] sm:$0xf]
    %v714 = vld [vmem:[%s696 + $0x44] sm:$0xf]
    %v715 = vld [vmem:[%s696 + $0x48] sm:$0xf]
    %v716 = vld [vmem:[%s696 + $0x4c] sm:$0xf]
    %v717 = vld [vmem:[%s696 + $0x50] sm:$0xf]
    %v739 = vunpack.c.l.b16 %v697
    %v740 = vunpack.c.l.b16 %v698
    %v741 = vunpack.c.l.b16 %v699
    %v742 = vunpack.c.l.b16 %v700
    %v743 = vunpack.c.l.b16 %v701
    %v744 = vunpack.c.l.b16 %v702
    %v745 = vunpack.c.l.b16 %v703
    %v746 = vunpack.c.l.b16 %v704
    %v747 = vunpack.c.l.b16 %v705
    %v748 = vunpack.c.l.b16 %v706
    %v749 = vunpack.c.l.b16 %v707
    %v750 = vunpack.c.l.b16 %v708
    %v751 = vunpack.c.l.b16 %v709
    %v752 = vunpack.c.l.b16 %v710
    %v753 = vunpack.c.l.b16 %v711
    %v754 = vunpack.c.l.b16 %v712
    %v755 = vunpack.c.l.b16 %v713
    %v756 = vunpack.c.l.b16 %v714
    %v757 = vunpack.c.l.b16 %v715
    %v758 = vunpack.c.l.b16 %v716
    %v759 = vunpack.c.l.b16 %v717
    %v760 = vpack.c.b16 %v740, %v739
    %v761 = vpack.c.b16 %v742, %v741
    %v762 = vpack.c.b16 %v744, %v743
    %v763 = vpack.c.b16 %v746, %v745
    %v764 = vpack.c.b16 %v748, %v747
    %v765 = vpack.c.b16 %v750, %v749
    %v766 = vpack.c.b16 %v752, %v751
    %v767 = vpack.c.b16 %v754, %v753
    %v768 = vpack.c.b16 %v756, %v755
    %v769 = vpack.c.b16 %v758, %v757
    %v770 = vpack.c.b16 %v759, %v759
    %v782 = vsel %vm664, %v770, 0
    %784 = vmatpush.bf16.msra.mxu0 %v767
    %785 = vmatpush.bf16.msra.mxu0 %v766
    %786 = vmatpush.bf16.msra.mxu0 %v765
    %787 = vmatpush.bf16.msra.mxu0 %v764
    %788 = vmatpush.bf16.msra.mxu0 %v763
    %789 = vmatpush.bf16.msra.mxu0 %v762
    %790 = vmatpush.bf16.msra.mxu0 %v761
    %791 = vmatpush.bf16.msra.mxu0 %v760
    %792 = vmatmul.bf16.gmra.mxu0 %v595
    %v793 = vpop.f32.mrf.mxu0
    %v794 = vadd.f32 0.0, %v793
    %v795 = vpop.f32.mrf.mxu0
    %v796 = vadd.f32 0.0, %v795
    %797 = vdwg.mxu0
    %798 = vmatpush.bf16.msra.mxu0 0
    %799 = vmatpush.bf16.msra.mxu0 0
    %800 = vmatpush.bf16.msra.mxu0 0
    %801 = vmatpush.bf16.msra.mxu0 0
    %802 = vmatpush.bf16.msra.mxu0 0
    %803 = vmatpush.bf16.msra.mxu0 %v782
    %804 = vmatpush.bf16.msra.mxu0 %v769
    %805 = vmatpush.bf16.msra.mxu0 %v768
    %806 = vmatmul.bf16.gmra.mxu0 %v662
    %v807 = vpop.f32.mrf.mxu0
    %v808 = vadd.f32 %v794, %v807
    %v809 = vpop.f32.mrf.mxu0
    %v810 = vadd.f32 %v796, %v809
    %811 = vdwg.mxu0
    %v812 = vmax.f32 %v692, %v808
    %v813 = vmax.f32 %v694, %v810
    %v814 = vld [vmem:[%s2] sm:$0xff]
    %v815 = vld [vmem:[%s2 + $0x8] sm:$0xff]
    %v816 = vld [vmem:[%s2 + $0x10] sm:$0xff]
    %v817 = vld [vmem:[%s2 + $0x18] sm:$0xff]
    %v818 = vld [vmem:[%s2 + $0x20] sm:$0xff]
    %v819 = vld [vmem:[%s2 + $0x28] sm:$0xff]
    %v820 = vld [vmem:[%s2 + $0x30] sm:$0xff]
    %v821 = vld [vmem:[%s2 + $0x38] sm:$0xff]
    %v822 = vld [vmem:[%s2 + $0x40] sm:$0xff]
    %v823 = vld [vmem:[%s2 + $0x48] sm:$0xff]
    %v824 = vld [vmem:[%s2 + $0x50] sm:$0x33]
    %v825 = vpack.c.bf16 %v813, %v812
    %s826 = scalar_lea.vmem %s2, 88
    %v827 = vld [vmem:[%s826] sm:$0xff]
    %v828 = vld [vmem:[%s826 + $0x8] sm:$0xff]
    %v829 = vld [vmem:[%s826 + $0x10] sm:$0xff]
    %v830 = vld [vmem:[%s826 + $0x18] sm:$0xff]
    %v831 = vld [vmem:[%s826 + $0x20] sm:$0xff]
    %v832 = vld [vmem:[%s826 + $0x28] sm:$0xff]
    %v833 = vld [vmem:[%s826 + $0x30] sm:$0xff]
    %v834 = vld [vmem:[%s826 + $0x38] sm:$0xff]
    %v835 = vld [vmem:[%s826 + $0x40] sm:$0xff]
    %v836 = vld [vmem:[%s826 + $0x48] sm:$0xff]
    %v837 = vld [vmem:[%s826 + $0x50] sm:$0x33]
    %v839 = vshrl.u32 %v825, 16
    %v841 = vshll.u32 %v825, 16
    %v843 = vrot.slane %v841, 1
    %v844 = vor.u32 %v839, %v843
    %v856 = vunpack.c.l.b16 %v827
    %v857 = vunpack.c.h.b16 %v827
    %v858 = vunpack.c.l.b16 %v828
    %v859 = vunpack.c.h.b16 %v828
    %v860 = vunpack.c.l.b16 %v829
    %v861 = vunpack.c.h.b16 %v829
    %v862 = vunpack.c.l.b16 %v830
    %v863 = vunpack.c.h.b16 %v830
    %v864 = vunpack.c.l.b16 %v831
    %v865 = vunpack.c.h.b16 %v831
    %v866 = vunpack.c.l.b16 %v832
    %v867 = vunpack.c.h.b16 %v832
    %v868 = vunpack.c.l.b16 %v833
    %v869 = vunpack.c.h.b16 %v833
    %v870 = vunpack.c.l.b16 %v834
    %v871 = vunpack.c.h.b16 %v834
    %v872 = vunpack.c.l.b16 %v835
    %v873 = vunpack.c.h.b16 %v835
    %v874 = vunpack.c.l.b16 %v836
    %v875 = vunpack.c.h.b16 %v836
    %v876 = vunpack.c.l.b16 %v837
    %v877 = vunpack.c.h.b16 %v837
    %v878 = vpack.c.b16 %v858, %v856
    %v879 = vpack.c.b16 %v859, %v857
    %v880 = vpack.c.b16 %v862, %v860
    %v881 = vpack.c.b16 %v863, %v861
    %v882 = vpack.c.b16 %v866, %v864
    %v883 = vpack.c.b16 %v867, %v865
    %v884 = vpack.c.b16 %v870, %v868
    %v885 = vpack.c.b16 %v871, %v869
    %v886 = vpack.c.b16 %v874, %v872
    %v887 = vpack.c.b16 %v875, %v873
    %v888 = vpack.c.b16 %v876, %v876
    %v889 = vpack.c.b16 %v877, %v877
    %vm900 = vcmask 687104
    %v902 = vsel %vm900, %v844, 0
    %vm904 = vcmask 1041408
    %v906 = vsel %vm904, %v888, 0
    %v909 = vsel %vm904, %v889, 0
    %911 = vmatpush.bf16.msra.mxu0 0
    %912 = vmatpush.bf16.msra.mxu0 0
    %913 = vmatpush.bf16.msra.mxu0 %v906
    %914 = vmatpush.bf16.msra.mxu0 %v886
    %915 = vmatpush.bf16.msra.mxu0 %v884
    %916 = vmatpush.bf16.msra.mxu0 %v882
    %917 = vmatpush.bf16.msra.mxu0 %v880
    %918 = vmatpush.bf16.msra.mxu0 %v878
    %919 = vmatmul.bf16.gmra.mxu0 %v902
    %v920 = vpop.f32.mrf.mxu0
    %v921 = vadd.f32 0.0, %v920
    %v922 = vpop.f32.mrf.mxu0
    %v923 = vadd.f32 0.0, %v922
    %924 = vdwg.mxu0
    %925 = vmatpush.bf16.msra.mxu0 0
    %926 = vmatpush.bf16.msra.mxu0 0
    %927 = vmatpush.bf16.msra.mxu0 %v909
    %928 = vmatpush.bf16.msra.mxu0 %v887
    %929 = vmatpush.bf16.msra.mxu0 %v885
    %930 = vmatpush.bf16.msra.mxu0 %v883
    %931 = vmatpush.bf16.msra.mxu0 %v881
    %932 = vmatpush.bf16.msra.mxu0 %v879
    %933 = vmatmul.bf16.gmra.mxu0 %v902
    %v934 = vpop.f32.mrf.mxu0
    %v935 = vadd.f32 0.0, %v934
    %v936 = vpop.f32.mrf.mxu0
    %v937 = vadd.f32 0.0, %v936
    %938 = vdwg.mxu0
    %s939 = scalar_lea.vmem %s2, 176
    %v940 = vld [vmem:[%s939] sm:$0xff]
    %v941 = vld [vmem:[%s939 + $0x8] sm:$0xff]
    %v942 = vld [vmem:[%s939 + $0x10] sm:$0xff]
    %v943 = vld [vmem:[%s939 + $0x18] sm:$0xff]
    %v944 = vld [vmem:[%s939 + $0x20] sm:$0xff]
    %v945 = vld [vmem:[%s939 + $0x28] sm:$0xff]
    %v946 = vld [vmem:[%s939 + $0x30] sm:$0xff]
    %v947 = vld [vmem:[%s939 + $0x38] sm:$0xff]
    %v948 = vld [vmem:[%s939 + $0x40] sm:$0xff]
    %v949 = vld [vmem:[%s939 + $0x48] sm:$0xff]
    %v950 = vld [vmem:[%s939 + $0x50] sm:$0x33]
    %s951 = scalar_lea.vmem %s2, 264
    %v952 = vld [vmem:[%s951] sm:$0xff]
    %v953 = vld [vmem:[%s951 + $0x8] sm:$0xff]
    %v954 = vld [vmem:[%s951 + $0x10] sm:$0xff]
    %v955 = vld [vmem:[%s951 + $0x18] sm:$0xff]
    %v956 = vld [vmem:[%s951 + $0x20] sm:$0xff]
    %v957 = vld [vmem:[%s951 + $0x28] sm:$0xff]
    %v958 = vld [vmem:[%s951 + $0x30] sm:$0xff]
    %v959 = vld [vmem:[%s951 + $0x38] sm:$0xff]
    %v960 = vld [vmem:[%s951 + $0x40] sm:$0xff]
    %v961 = vld [vmem:[%s951 + $0x48] sm:$0xff]
    %v962 = vld [vmem:[%s951 + $0x50] sm:$0x33]
    %v963 = vrot.slane %v839, 1
    %v964 = vrot.slane %v841, 2
    %v965 = vor.u32 %v963, %v964
    %v977 = vunpack.c.l.b16 %v952
    %v978 = vunpack.c.h.b16 %v952
    %v979 = vunpack.c.l.b16 %v953
    %v980 = vunpack.c.h.b16 %v953
    %v981 = vunpack.c.l.b16 %v954
    %v982 = vunpack.c.h.b16 %v954
    %v983 = vunpack.c.l.b16 %v955
    %v984 = vunpack.c.h.b16 %v955
    %v985 = vunpack.c.l.b16 %v956
    %v986 = vunpack.c.h.b16 %v956
    %v987 = vunpack.c.l.b16 %v957
    %v988 = vunpack.c.h.b16 %v957
    %v989 = vunpack.c.l.b16 %v958
    %v990 = vunpack.c.h.b16 %v958
    %v991 = vunpack.c.l.b16 %v959
    %v992 = vunpack.c.h.b16 %v959
    %v993 = vunpack.c.l.b16 %v960
    %v994 = vunpack.c.h.b16 %v960
    %v995 = vunpack.c.l.b16 %v961
    %v996 = vunpack.c.h.b16 %v961
    %v997 = vunpack.c.l.b16 %v962
    %v998 = vunpack.c.h.b16 %v962
    %v999 = vpack.c.b16 %v979, %v977
    %v1000 = vpack.c.b16 %v980, %v978
    %v1001 = vpack.c.b16 %v983, %v981
    %v1002 = vpack.c.b16 %v984, %v982
    %v1003 = vpack.c.b16 %v987, %v985
    %v1004 = vpack.c.b16 %v988, %v986
    %v1005 = vpack.c.b16 %v991, %v989
    %v1006 = vpack.c.b16 %v992, %v990
    %v1007 = vpack.c.b16 %v995, %v993
    %v1008 = vpack.c.b16 %v996, %v994
    %v1009 = vpack.c.b16 %v997, %v997
    %v1010 = vpack.c.b16 %v998, %v998
    %v1022 = vsel %vm900, %v965, 0
    %v1025 = vsel %vm904, %v1009, 0
    %v1028 = vsel %vm904, %v1010, 0
    %1030 = vmatpush.bf16.msra.mxu0 0
    %1031 = vmatpush.bf16.msra.mxu0 0
    %1032 = vmatpush.bf16.msra.mxu0 %v1025
    %1033 = vmatpush.bf16.msra.mxu0 %v1007
    %1034 = vmatpush.bf16.msra.mxu0 %v1005
    %1035 = vmatpush.bf16.msra.mxu0 %v1003
    %1036 = vmatpush.bf16.msra.mxu0 %v1001
    %1037 = vmatpush.bf16.msra.mxu0 %v999
    %1038 = vmatmul.bf16.gmra.mxu0 %v1022
    %v1039 = vpop.f32.mrf.mxu0
    %v1040 = vadd.f32 0.0, %v1039
    %v1041 = vpop.f32.mrf.mxu0
    %v1042 = vadd.f32 0.0, %v1041
    %1043 = vdwg.mxu0
    %1044 = vmatpush.bf16.msra.mxu0 0
    %1045 = vmatpush.bf16.msra.mxu0 0
    %1046 = vmatpush.bf16.msra.mxu0 %v1028
    %1047 = vmatpush.bf16.msra.mxu0 %v1008
    %1048 = vmatpush.bf16.msra.mxu0 %v1006
    %1049 = vmatpush.bf16.msra.mxu0 %v1004
    %1050 = vmatpush.bf16.msra.mxu0 %v1002
    %1051 = vmatpush.bf16.msra.mxu0 %v1000
    %1052 = vmatmul.bf16.gmra.mxu0 %v1022
    %v1053 = vpop.f32.mrf.mxu0
    %v1054 = vadd.f32 0.0, %v1053
    %v1055 = vpop.f32.mrf.mxu0
    %v1056 = vadd.f32 0.0, %v1055
    %1057 = vdwg.mxu0
    %s1058 = scalar_lea.vmem %s2, 352
    %v1059 = vld [vmem:[%s1058] sm:$0xff]
    %v1060 = vld [vmem:[%s1058 + $0x8] sm:$0xff]
    %v1061 = vld [vmem:[%s1058 + $0x10] sm:$0xff]
    %v1062 = vld [vmem:[%s1058 + $0x18] sm:$0xff]
    %v1063 = vld [vmem:[%s1058 + $0x20] sm:$0xff]
    %v1064 = vld [vmem:[%s1058 + $0x28] sm:$0xff]
    %v1065 = vld [vmem:[%s1058 + $0x30] sm:$0xff]
    %v1066 = vld [vmem:[%s1058 + $0x38] sm:$0xff]
    %v1067 = vld [vmem:[%s1058 + $0x40] sm:$0xff]
    %v1068 = vld [vmem:[%s1058 + $0x48] sm:$0xff]
    %v1069 = vld [vmem:[%s1058 + $0x50] sm:$0x33]
    %v1071 = vrot.slane %v825, 2
    %v1083 = vunpack.c.l.b16 %v1059
    %v1084 = vunpack.c.h.b16 %v1059
    %v1085 = vunpack.c.l.b16 %v1060
    %v1086 = vunpack.c.h.b16 %v1060
    %v1087 = vunpack.c.l.b16 %v1061
    %v1088 = vunpack.c.h.b16 %v1061
    %v1089 = vunpack.c.l.b16 %v1062
    %v1090 = vunpack.c.h.b16 %v1062
    %v1091 = vunpack.c.l.b16 %v1063
    %v1092 = vunpack.c.h.b16 %v1063
    %v1093 = vunpack.c.l.b16 %v1064
    %v1094 = vunpack.c.h.b16 %v1064
    %v1095 = vunpack.c.l.b16 %v1065
    %v1096 = vunpack.c.h.b16 %v1065
    %v1097 = vunpack.c.l.b16 %v1066
    %v1098 = vunpack.c.h.b16 %v1066
    %v1099 = vunpack.c.l.b16 %v1067
    %v1100 = vunpack.c.h.b16 %v1067
    %v1101 = vunpack.c.l.b16 %v1068
    %v1102 = vunpack.c.h.b16 %v1068
    %v1103 = vunpack.c.l.b16 %v1069
    %v1104 = vunpack.c.h.b16 %v1069
    %v1105 = vpack.c.b16 %v1085, %v1083
    %v1106 = vpack.c.b16 %v1086, %v1084
    %v1107 = vpack.c.b16 %v1089, %v1087
    %v1108 = vpack.c.b16 %v1090, %v1088
    %v1109 = vpack.c.b16 %v1093, %v1091
    %v1110 = vpack.c.b16 %v1094, %v1092
    %v1111 = vpack.c.b16 %v1097, %v1095
    %v1112 = vpack.c.b16 %v1098, %v1096
    %v1113 = vpack.c.b16 %v1101, %v1099
    %v1114 = vpack.c.b16 %v1102, %v1100
    %v1115 = vpack.c.b16 %v1103, %v1103
    %v1116 = vpack.c.b16 %v1104, %v1104
    %v1128 = vsel %vm900, %v1071, 0
    %v1131 = vsel %vm904, %v1115, 0
    %v1134 = vsel %vm904, %v1116, 0
    %1136 = vmatpush.bf16.msra.mxu0 0
    %1137 = vmatpush.bf16.msra.mxu0 0
    %1138 = vmatpush.bf16.msra.mxu0 %v1131
    %1139 = vmatpush.bf16.msra.mxu0 %v1113
    %1140 = vmatpush.bf16.msra.mxu0 %v1111
    %1141 = vmatpush.bf16.msra.mxu0 %v1109
    %1142 = vmatpush.bf16.msra.mxu0 %v1107
    %1143 = vmatpush.bf16.msra.mxu0 %v1105
    %1144 = vmatmul.bf16.gmra.mxu0 %v1128
    %v1145 = vpop.f32.mrf.mxu0
    %v1146 = vadd.f32 0.0, %v1145
    %v1147 = vpop.f32.mrf.mxu0
    %v1148 = vadd.f32 0.0, %v1147
    %1149 = vdwg.mxu0
    %1150 = vmatpush.bf16.msra.mxu0 0
    %1151 = vmatpush.bf16.msra.mxu0 0
    %1152 = vmatpush.bf16.msra.mxu0 %v1134
    %1153 = vmatpush.bf16.msra.mxu0 %v1114
    %1154 = vmatpush.bf16.msra.mxu0 %v1112
    %1155 = vmatpush.bf16.msra.mxu0 %v1110
    %1156 = vmatpush.bf16.msra.mxu0 %v1108
    %1157 = vmatpush.bf16.msra.mxu0 %v1106
    %1158 = vmatmul.bf16.gmra.mxu0 %v1128
    %v1159 = vpop.f32.mrf.mxu0
    %v1160 = vadd.f32 0.0, %v1159
    %v1161 = vpop.f32.mrf.mxu0
    %v1162 = vadd.f32 0.0, %v1161
    %1163 = vdwg.mxu0
    %v1175 = vunpack.c.l.b16 %v814
    %v1176 = vunpack.c.h.b16 %v814
    %v1177 = vunpack.c.l.b16 %v815
    %v1178 = vunpack.c.h.b16 %v815
    %v1179 = vunpack.c.l.b16 %v816
    %v1180 = vunpack.c.h.b16 %v816
    %v1181 = vunpack.c.l.b16 %v817
    %v1182 = vunpack.c.h.b16 %v817
    %v1183 = vunpack.c.l.b16 %v818
    %v1184 = vunpack.c.h.b16 %v818
    %v1185 = vunpack.c.l.b16 %v819
    %v1186 = vunpack.c.h.b16 %v819
    %v1187 = vunpack.c.l.b16 %v820
    %v1188 = vunpack.c.h.b16 %v820
    %v1189 = vunpack.c.l.b16 %v821
    %v1190 = vunpack.c.h.b16 %v821
    %v1191 = vunpack.c.l.b16 %v822
    %v1192 = vunpack.c.h.b16 %v822
    %v1193 = vunpack.c.l.b16 %v823
    %v1194 = vunpack.c.h.b16 %v823
    %v1195 = vunpack.c.l.b16 %v824
    %v1196 = vunpack.c.h.b16 %v824
    %v1197 = vpack.c.b16 %v1177, %v1175
    %v1198 = vpack.c.b16 %v1178, %v1176
    %v1199 = vpack.c.b16 %v1181, %v1179
    %v1200 = vpack.c.b16 %v1182, %v1180
    %v1201 = vpack.c.b16 %v1185, %v1183
    %v1202 = vpack.c.b16 %v1186, %v1184
    %v1203 = vpack.c.b16 %v1189, %v1187
    %v1204 = vpack.c.b16 %v1190, %v1188
    %v1205 = vpack.c.b16 %v1193, %v1191
    %v1206 = vpack.c.b16 %v1194, %v1192
    %v1207 = vpack.c.b16 %v1195, %v1195
    %v1208 = vpack.c.b16 %v1196, %v1196
    %v1219 = vsel %vm900, %v825, 0
    %v1222 = vsel %vm904, %v1207, 0
    %v1225 = vsel %vm904, %v1208, 0
    %1227 = vmatpush.bf16.msra.mxu0 0
    %1228 = vmatpush.bf16.msra.mxu0 0
    %1229 = vmatpush.bf16.msra.mxu0 %v1222
    %1230 = vmatpush.bf16.msra.mxu0 %v1205
    %1231 = vmatpush.bf16.msra.mxu0 %v1203
    %1232 = vmatpush.bf16.msra.mxu0 %v1201
    %1233 = vmatpush.bf16.msra.mxu0 %v1199
    %1234 = vmatpush.bf16.msra.mxu0 %v1197
    %1235 = vmatmul.bf16.gmra.mxu0 %v1219
    %v1236 = vpop.f32.mrf.mxu0
    %v1237 = vadd.f32 %v921, %v1236
    %v1238 = vpop.f32.mrf.mxu0
    %v1239 = vadd.f32 %v923, %v1238
    %1240 = vdwg.mxu0
    %1241 = vmatpush.bf16.msra.mxu0 0
    %1242 = vmatpush.bf16.msra.mxu0 0
    %1243 = vmatpush.bf16.msra.mxu0 %v1225
    %1244 = vmatpush.bf16.msra.mxu0 %v1206
    %1245 = vmatpush.bf16.msra.mxu0 %v1204
    %1246 = vmatpush.bf16.msra.mxu0 %v1202
    %1247 = vmatpush.bf16.msra.mxu0 %v1200
    %1248 = vmatpush.bf16.msra.mxu0 %v1198
    %1249 = vmatmul.bf16.gmra.mxu0 %v1219
    %v1250 = vpop.f32.mrf.mxu0
    %v1251 = vadd.f32 %v935, %v1250
    %v1252 = vpop.f32.mrf.mxu0
    %v1253 = vadd.f32 %v937, %v1252
    %1254 = vdwg.mxu0
    %v1255 = vrot.slane %v825, 1
    %v1267 = vunpack.c.l.b16 %v940
    %v1268 = vunpack.c.h.b16 %v940
    %v1269 = vunpack.c.l.b16 %v941
    %v1270 = vunpack.c.h.b16 %v941
    %v1271 = vunpack.c.l.b16 %v942
    %v1272 = vunpack.c.h.b16 %v942
    %v1273 = vunpack.c.l.b16 %v943
    %v1274 = vunpack.c.h.b16 %v943
    %v1275 = vunpack.c.l.b16 %v944
    %v1276 = vunpack.c.h.b16 %v944
    %v1277 = vunpack.c.l.b16 %v945
    %v1278 = vunpack.c.h.b16 %v945
    %v1279 = vunpack.c.l.b16 %v946
    %v1280 = vunpack.c.h.b16 %v946
    %v1281 = vunpack.c.l.b16 %v947
    %v1282 = vunpack.c.h.b16 %v947
    %v1283 = vunpack.c.l.b16 %v948
    %v1284 = vunpack.c.h.b16 %v948
    %v1285 = vunpack.c.l.b16 %v949
    %v1286 = vunpack.c.h.b16 %v949
    %v1287 = vunpack.c.l.b16 %v950
    %v1288 = vunpack.c.h.b16 %v950
    %v1289 = vpack.c.b16 %v1269, %v1267
    %v1290 = vpack.c.b16 %v1270, %v1268
    %v1291 = vpack.c.b16 %v1273, %v1271
    %v1292 = vpack.c.b16 %v1274, %v1272
    %v1293 = vpack.c.b16 %v1277, %v1275
    %v1294 = vpack.c.b16 %v1278, %v1276
    %v1295 = vpack.c.b16 %v1281, %v1279
    %v1296 = vpack.c.b16 %v1282, %v1280
    %v1297 = vpack.c.b16 %v1285, %v1283
    %v1298 = vpack.c.b16 %v1286, %v1284
    %v1299 = vpack.c.b16 %v1287, %v1287
    %v1300 = vpack.c.b16 %v1288, %v1288
    %v1312 = vsel %vm900, %v1255, 0
    %v1315 = vsel %vm904, %v1299, 0
    %v1318 = vsel %vm904, %v1300, 0
    %1320 = vmatpush.bf16.msra.mxu0 0
    %1321 = vmatpush.bf16.msra.mxu0 0
    %1322 = vmatpush.bf16.msra.mxu0 %v1315
    %1323 = vmatpush.bf16.msra.mxu0 %v1297
    %1324 = vmatpush.bf16.msra.mxu0 %v1295
    %1325 = vmatpush.bf16.msra.mxu0 %v1293
    %1326 = vmatpush.bf16.msra.mxu0 %v1291
    %1327 = vmatpush.bf16.msra.mxu0 %v1289
    %1328 = vmatmul.bf16.gmra.mxu0 %v1312
    %v1329 = vpop.f32.mrf.mxu0
    %v1330 = vadd.f32 %v1040, %v1329
    %v1331 = vpop.f32.mrf.mxu0
    %v1332 = vadd.f32 %v1042, %v1331
    %1333 = vdwg.mxu0
    %1334 = vmatpush.bf16.msra.mxu0 0
    %1335 = vmatpush.bf16.msra.mxu0 0
    %1336 = vmatpush.bf16.msra.mxu0 %v1318
    %1337 = vmatpush.bf16.msra.mxu0 %v1298
    %1338 = vmatpush.bf16.msra.mxu0 %v1296
    %1339 = vmatpush.bf16.msra.mxu0 %v1294
    %1340 = vmatpush.bf16.msra.mxu0 %v1292
    %1341 = vmatpush.bf16.msra.mxu0 %v1290
    %1342 = vmatmul.bf16.gmra.mxu0 %v1312
    %v1343 = vpop.f32.mrf.mxu0
    %v1344 = vadd.f32 %v1054, %v1343
    %v1345 = vpop.f32.mrf.mxu0
    %v1346 = vadd.f32 %v1056, %v1345
    %1347 = vdwg.mxu0
    %v1348 = vadd.f32 %v1237, %v1330
    %v1349 = vadd.f32 %v1251, %v1344
    %v1350 = vadd.f32 %v1239, %v1332
    %v1351 = vadd.f32 %v1253, %v1346
    %v1352 = vadd.f32 %v1348, %v1146
    %v1353 = vadd.f32 %v1349, %v1160
    %v1354 = vadd.f32 %v1350, %v1148
    %v1355 = vadd.f32 %v1351, %v1162
    %v1357 = vperm.slane %v47, 0
    %v1358 = vperm.slane %v47, 1
    %v1361 = vadd.f32 %v1352, %v1357
    %v1362 = vadd.f32 %v1353, %v1358
    %v1363 = vadd.f32 %v1354, %v1357
    %v1364 = vadd.f32 %v1355, %v1358
    %v1365 = vmax.f32 %v1361, 0.0
    %v1366 = vmax.f32 %v1362, 0.0
    %v1367 = vmax.f32 %v1363, 0.0
    %v1368 = vmax.f32 %v1364, 0.0
    %v1369 = vld [vmem:[%s6] sm:$0x7]
    %v1370 = vpack.c.bf16 %v1367, %v1365
    %v1371 = vpack.c.bf16 %v1368, %v1366
    %vm1372 = vcmask 80896
    %v1374 = vsel %vm1372, %v1369, 0
    %vm1376 = vcmask 1044480
    %v1378 = vsel %vm1376, %v1370, 0
    %v1381 = vsel %vm1376, %v1371, 0
    %1383 = vmatpush.bf16.msra.mxu0 0
    %1384 = vmatpush.bf16.msra.mxu0 0
    %1385 = vmatpush.bf16.msra.mxu0 0
    %1386 = vmatpush.bf16.msra.mxu0 0
    %1387 = vmatpush.bf16.msra.mxu0 0
    %1388 = vmatpush.bf16.msra.mxu0 0
    %1389 = vmatpush.bf16.msra.mxu0 0
    %1390 = vmatpush.bf16.msra.mxu0 %v1378
    %1391 = vmatmul.bf16.gmra.mxu0 %v1374
    %v1392 = vpop.f32.mrf.mxu0
    %v1393 = vadd.f32 0.0, %v1392
    %v1394 = vpop.f32.mrf.mxu0
    %1395 = vdwg.mxu0
    %1396 = vmatpush.bf16.msra.mxu0 0
    %1397 = vmatpush.bf16.msra.mxu0 0
    %1398 = vmatpush.bf16.msra.mxu0 0
    %1399 = vmatpush.bf16.msra.mxu0 0
    %1400 = vmatpush.bf16.msra.mxu0 0
    %1401 = vmatpush.bf16.msra.mxu0 0
    %1402 = vmatpush.bf16.msra.mxu0 0
    %1403 = vmatpush.bf16.msra.mxu0 %v1381
    %1404 = vmatmul.bf16.gmra.mxu0 %v1374
    %v1405 = vpop.f32.mrf.mxu0
    %v1406 = vadd.f32 0.0, %v1405
    %v1407 = vpop.f32.mrf.mxu0
    %1408 = vdwg.mxu0
    %s1409 = scalar_lea.vmem %s6, 4
    %v1410 = vld [vmem:[%s1409] sm:$0x7]
    %v1412 = vsel %vm1372, %v1410, 0
    %1414 = vmatpush.bf16.msra.mxu0 0
    %1415 = vmatpush.bf16.msra.mxu0 0
    %1416 = vmatpush.bf16.msra.mxu0 0
    %1417 = vmatpush.bf16.msra.mxu0 0
    %1418 = vmatpush.bf16.msra.mxu0 0
    %1419 = vmatpush.bf16.msra.mxu0 0
    %1420 = vmatpush.bf16.msra.mxu0 0
    %1421 = vmatpush.bf16.msra.mxu0 %v1378
    %1422 = vmatmul.bf16.gmra.mxu0 %v1412
    %v1423 = vpop.f32.mrf.mxu0
    %v1424 = vadd.f32 0.0, %v1423
    %v1425 = vpop.f32.mrf.mxu0
    %1426 = vdwg.mxu0
    %1427 = vmatpush.bf16.msra.mxu0 0
    %1428 = vmatpush.bf16.msra.mxu0 0
    %1429 = vmatpush.bf16.msra.mxu0 0
    %1430 = vmatpush.bf16.msra.mxu0 0
    %1431 = vmatpush.bf16.msra.mxu0 0
    %1432 = vmatpush.bf16.msra.mxu0 0
    %1433 = vmatpush.bf16.msra.mxu0 0
    %1434 = vmatpush.bf16.msra.mxu0 %v1381
    %1435 = vmatmul.bf16.gmra.mxu0 %v1412
    %v1436 = vpop.f32.mrf.mxu0
    %v1437 = vadd.f32 0.0, %v1436
    %v1438 = vpop.f32.mrf.mxu0
    %1439 = vdwg.mxu0
    %v1440 = vmax.f32 %v1393, %v1424
    %v1441 = vmax.f32 %v1406, %v1437
    %v1442 = vld [vmem:[%s7] sm:$0xf]
    %v1443 = vld [vmem:[%s7 + $0x4] sm:$0xf]
    %v1444 = vld [vmem:[%s7 + $0x8] sm:$0xf]
    %v1445 = vld [vmem:[%s7 + $0xc] sm:$0xf]
    %v1446 = vld [vmem:[%s7 + $0x10] sm:$0xf]
    %v1447 = vld [vmem:[%s7 + $0x14] sm:$0xf]
    %v1448 = vld [vmem:[%s7 + $0x18] sm:$0xf]
    %v1449 = vld [vmem:[%s7 + $0x1c] sm:$0xf]
    %v1450 = vld [vmem:[%s7 + $0x20] sm:$0xf]
    %v1451 = vld [vmem:[%s7 + $0x24] sm:$0xf]
    %v1452 = vld [vmem:[%s7 + $0x28] sm:$0xf]
    %v1453 = vld [vmem:[%s7 + $0x2c] sm:$0xf]
    %v1454 = vld [vmem:[%s7 + $0x30] sm:$0xf]
    %v1455 = vld [vmem:[%s7 + $0x34] sm:$0xf]
    %v1456 = vld [vmem:[%s7 + $0x38] sm:$0xf]
    %v1457 = vld [vmem:[%s7 + $0x3c] sm:$0xf]
    %v1458 = vld [vmem:[%s7 + $0x40] sm:$0xf]
    %v1459 = vld [vmem:[%s7 + $0x44] sm:$0xf]
    %v1460 = vld [vmem:[%s7 + $0x48] sm:$0xf]
    %v1461 = vld [vmem:[%s7 + $0x4c] sm:$0xf]
    %v1462 = vpack.c.bf16 %v1440, %v1440
    %v1463 = vpack.c.bf16 %v1441, %v1441
    %v1484 = vunpack.c.l.b16 %v1442
    %v1485 = vunpack.c.l.b16 %v1443
    %v1486 = vunpack.c.l.b16 %v1444
    %v1487 = vunpack.c.l.b16 %v1445
    %v1488 = vunpack.c.l.b16 %v1446
    %v1489 = vunpack.c.l.b16 %v1447
    %v1490 = vunpack.c.l.b16 %v1448
    %v1491 = vunpack.c.l.b16 %v1449
    %v1492 = vunpack.c.l.b16 %v1450
    %v1493 = vunpack.c.l.b16 %v1451
    %v1494 = vunpack.c.l.b16 %v1452
    %v1495 = vunpack.c.l.b16 %v1453
    %v1496 = vunpack.c.l.b16 %v1454
    %v1497 = vunpack.c.l.b16 %v1455
    %v1498 = vunpack.c.l.b16 %v1456
    %v1499 = vunpack.c.l.b16 %v1457
    %v1500 = vunpack.c.l.b16 %v1458
    %v1501 = vunpack.c.l.b16 %v1459
    %v1502 = vunpack.c.l.b16 %v1460
    %v1503 = vunpack.c.l.b16 %v1461
    %v1504 = vpack.c.b16 %v1485, %v1484
    %v1505 = vpack.c.b16 %v1487, %v1486
    %v1506 = vpack.c.b16 %v1489, %v1488
    %v1507 = vpack.c.b16 %v1491, %v1490
    %v1508 = vpack.c.b16 %v1493, %v1492
    %v1509 = vpack.c.b16 %v1495, %v1494
    %v1510 = vpack.c.b16 %v1497, %v1496
    %v1511 = vpack.c.b16 %v1499, %v1498
    %v1512 = vpack.c.b16 %v1501, %v1500
    %v1513 = vpack.c.b16 %v1503, %v1502
    %v1525 = vsel %vm112, %v1463, 0
    %1527 = vmatpush.bf16.msra.mxu0 %v1511
    %1528 = vmatpush.bf16.msra.mxu0 %v1510
    %1529 = vmatpush.bf16.msra.mxu0 %v1509
    %1530 = vmatpush.bf16.msra.mxu0 %v1508
    %1531 = vmatpush.bf16.msra.mxu0 %v1507
    %1532 = vmatpush.bf16.msra.mxu0 %v1506
    %1533 = vmatpush.bf16.msra.mxu0 %v1505
    %1534 = vmatpush.bf16.msra.mxu0 %v1504
    %1535 = vmatmul.bf16.gmra.mxu0 %v1462
    %v1536 = vpop.f32.mrf.mxu0
    %v1537 = vadd.f32 0.0, %v1536
    %v1538 = vpop.f32.mrf.mxu0
    %1539 = vdwg.mxu0
    %1540 = vmatpush.bf16.msra.mxu0 0
    %1541 = vmatpush.bf16.msra.mxu0 0
    %1542 = vmatpush.bf16.msra.mxu0 0
    %1543 = vmatpush.bf16.msra.mxu0 0
    %1544 = vmatpush.bf16.msra.mxu0 0
    %1545 = vmatpush.bf16.msra.mxu0 0
    %1546 = vmatpush.bf16.msra.mxu0 %v1513
    %1547 = vmatpush.bf16.msra.mxu0 %v1512
    %1548 = vmatmul.bf16.gmra.mxu0 %v1525
    %v1549 = vpop.f32.mrf.mxu0
    %v1550 = vadd.f32 %v1537, %v1549
    %v1551 = vpop.f32.mrf.mxu0
    %1552 = vdwg.mxu0
    %s1553 = scalar_lea.vmem %s7, 80
    %v1554 = vld [vmem:[%s1553] sm:$0xf]
    %v1555 = vld [vmem:[%s1553 + $0x4] sm:$0xf]
    %v1556 = vld [vmem:[%s1553 + $0x8] sm:$0xf]
    %v1557 = vld [vmem:[%s1553 + $0xc] sm:$0xf]
    %v1558 = vld [vmem:[%s1553 + $0x10] sm:$0xf]
    %v1559 = vld [vmem:[%s1553 + $0x14] sm:$0xf]
    %v1560 = vld [vmem:[%s1553 + $0x18] sm:$0xf]
    %v1561 = vld [vmem:[%s1553 + $0x1c] sm:$0xf]
    %v1562 = vld [vmem:[%s1553 + $0x20] sm:$0xf]
    %v1563 = vld [vmem:[%s1553 + $0x24] sm:$0xf]
    %v1564 = vld [vmem:[%s1553 + $0x28] sm:$0xf]
    %v1565 = vld [vmem:[%s1553 + $0x2c] sm:$0xf]
    %v1566 = vld [vmem:[%s1553 + $0x30] sm:$0xf]
    %v1567 = vld [vmem:[%s1553 + $0x34] sm:$0xf]
    %v1568 = vld [vmem:[%s1553 + $0x38] sm:$0xf]
    %v1569 = vld [vmem:[%s1553 + $0x3c] sm:$0xf]
    %v1570 = vld [vmem:[%s1553 + $0x40] sm:$0xf]
    %v1571 = vld [vmem:[%s1553 + $0x44] sm:$0xf]
    %v1572 = vld [vmem:[%s1553 + $0x48] sm:$0xf]
    %v1573 = vld [vmem:[%s1553 + $0x4c] sm:$0xf]
    %v1594 = vunpack.c.l.b16 %v1554
    %v1595 = vunpack.c.l.b16 %v1555
    %v1596 = vunpack.c.l.b16 %v1556
    %v1597 = vunpack.c.l.b16 %v1557
    %v1598 = vunpack.c.l.b16 %v1558
    %v1599 = vunpack.c.l.b16 %v1559
    %v1600 = vunpack.c.l.b16 %v1560
    %v1601 = vunpack.c.l.b16 %v1561
    %v1602 = vunpack.c.l.b16 %v1562
    %v1603 = vunpack.c.l.b16 %v1563
    %v1604 = vunpack.c.l.b16 %v1564
    %v1605 = vunpack.c.l.b16 %v1565
    %v1606 = vunpack.c.l.b16 %v1566
    %v1607 = vunpack.c.l.b16 %v1567
    %v1608 = vunpack.c.l.b16 %v1568
    %v1609 = vunpack.c.l.b16 %v1569
    %v1610 = vunpack.c.l.b16 %v1570
    %v1611 = vunpack.c.l.b16 %v1571
    %v1612 = vunpack.c.l.b16 %v1572
    %v1613 = vunpack.c.l.b16 %v1573
    %v1614 = vpack.c.b16 %v1595, %v1594
    %v1615 = vpack.c.b16 %v1597, %v1596
    %v1616 = vpack.c.b16 %v1599, %v1598
    %v1617 = vpack.c.b16 %v1601, %v1600
    %v1618 = vpack.c.b16 %v1603, %v1602
    %v1619 = vpack.c.b16 %v1605, %v1604
    %v1620 = vpack.c.b16 %v1607, %v1606
    %v1621 = vpack.c.b16 %v1609, %v1608
    %v1622 = vpack.c.b16 %v1611, %v1610
    %v1623 = vpack.c.b16 %v1613, %v1612
    %1634 = vmatpush.bf16.msra.mxu0 %v1621
    %1635 = vmatpush.bf16.msra.mxu0 %v1620
    %1636 = vmatpush.bf16.msra.mxu0 %v1619
    %1637 = vmatpush.bf16.msra.mxu0 %v1618
    %1638 = vmatpush.bf16.msra.mxu0 %v1617
    %1639 = vmatpush.bf16.msra.mxu0 %v1616
    %1640 = vmatpush.bf16.msra.mxu0 %v1615
    %1641 = vmatpush.bf16.msra.mxu0 %v1614
    %1642 = vmatmul.bf16.gmra.mxu0 %v1462
    %v1643 = vpop.f32.mrf.mxu0
    %v1644 = vadd.f32 0.0, %v1643
    %v1645 = vpop.f32.mrf.mxu0
    %1646 = vdwg.mxu0
    %1647 = vmatpush.bf16.msra.mxu0 0
    %1648 = vmatpush.bf16.msra.mxu0 0
    %1649 = vmatpush.bf16.msra.mxu0 0
    %1650 = vmatpush.bf16.msra.mxu0 0
    %1651 = vmatpush.bf16.msra.mxu0 0
    %1652 = vmatpush.bf16.msra.mxu0 0
    %1653 = vmatpush.bf16.msra.mxu0 %v1623
    %1654 = vmatpush.bf16.msra.mxu0 %v1622
    %1655 = vmatmul.bf16.gmra.mxu0 %v1525
    %v1656 = vpop.f32.mrf.mxu0
    %v1657 = vadd.f32 %v1644, %v1656
    %v1658 = vpop.f32.mrf.mxu0
    %1659 = vdwg.mxu0
    %v1660 = vmax.f32 %v1550, %v1657
    %v1661 = vld [vmem:[%s3] sm:$0xf]
    %v1662 = vld [vmem:[%s3 + $0x4] sm:$0xf]
    %v1663 = vld [vmem:[%s3 + $0x8] sm:$0xf]
    %v1664 = vld [vmem:[%s3 + $0xc] sm:$0xf]
    %v1665 = vld [vmem:[%s3 + $0x10] sm:$0xf]
    %v1666 = vld [vmem:[%s3 + $0x14] sm:$0xf]
    %v1667 = vld [vmem:[%s3 + $0x18] sm:$0xf]
    %v1668 = vld [vmem:[%s3 + $0x1c] sm:$0xf]
    %v1669 = vld [vmem:[%s3 + $0x20] sm:$0xf]
    %v1670 = vld [vmem:[%s3 + $0x24] sm:$0xf]
    %v1671 = vpack.c.bf16 %v1660, %v1660
    %s1672 = scalar_lea.vmem %s3, 40
    %v1673 = vld [vmem:[%s1672] sm:$0xf]
    %v1674 = vld [vmem:[%s1672 + $0x4] sm:$0xf]
    %v1675 = vld [vmem:[%s1672 + $0x8] sm:$0xf]
    %v1676 = vld [vmem:[%s1672 + $0xc] sm:$0xf]
    %v1677 = vld [vmem:[%s1672 + $0x10] sm:$0xf]
    %v1678 = vld [vmem:[%s1672 + $0x14] sm:$0xf]
    %v1679 = vld [vmem:[%s1672 + $0x18] sm:$0xf]
    %v1680 = vld [vmem:[%s1672 + $0x1c] sm:$0xf]
    %v1681 = vld [vmem:[%s1672 + $0x20] sm:$0xf]
    %v1682 = vld [vmem:[%s1672 + $0x24] sm:$0xf]
    %v1684 = vshrl.u32 %v1671, 16
    %v1696 = vunpack.c.l.b16 %v1673
    %v1697 = vunpack.c.l.b16 %v1674
    %v1698 = vunpack.c.l.b16 %v1675
    %v1699 = vunpack.c.l.b16 %v1676
    %v1700 = vunpack.c.l.b16 %v1677
    %v1701 = vunpack.c.l.b16 %v1678
    %v1702 = vunpack.c.l.b16 %v1679
    %v1703 = vunpack.c.l.b16 %v1680
    %v1704 = vunpack.c.l.b16 %v1681
    %v1705 = vunpack.c.l.b16 %v1682
    %v1706 = vpack.c.b16 %v1697, %v1696
    %v1707 = vpack.c.b16 %v1699, %v1698
    %v1708 = vpack.c.b16 %v1701, %v1700
    %v1709 = vpack.c.b16 %v1703, %v1702
    %v1710 = vpack.c.b16 %v1705, %v1704
    %vm1716 = vcmask 654336
    %v1718 = vsel %vm1716, %v1684, 0
    %1720 = vmatpush.bf16.msra.mxu0 0
    %1721 = vmatpush.bf16.msra.mxu0 0
    %1722 = vmatpush.bf16.msra.mxu0 0
    %1723 = vmatpush.bf16.msra.mxu0 %v1710
    %1724 = vmatpush.bf16.msra.mxu0 %v1709
    %1725 = vmatpush.bf16.msra.mxu0 %v1708
    %1726 = vmatpush.bf16.msra.mxu0 %v1707
    %1727 = vmatpush.bf16.msra.mxu0 %v1706
    %1728 = vmatmul.bf16.gmra.mxu0 %v1718
    %v1729 = vpop.f32.mrf.mxu0
    %v1730 = vadd.f32 0.0, %v1729
    %v1731 = vpop.f32.mrf.mxu0
    %1732 = vdwg.mxu0
    %s1733 = scalar_lea.vmem %s3, 80
    %v1734 = vld [vmem:[%s1733] sm:$0xf]
    %v1735 = vld [vmem:[%s1733 + $0x4] sm:$0xf]
    %v1736 = vld [vmem:[%s1733 + $0x8] sm:$0xf]
    %v1737 = vld [vmem:[%s1733 + $0xc] sm:$0xf]
    %v1738 = vld [vmem:[%s1733 + $0x10] sm:$0xf]
    %v1739 = vld [vmem:[%s1733 + $0x14] sm:$0xf]
    %v1740 = vld [vmem:[%s1733 + $0x18] sm:$0xf]
    %v1741 = vld [vmem:[%s1733 + $0x1c] sm:$0xf]
    %v1742 = vld [vmem:[%s1733 + $0x20] sm:$0xf]
    %v1743 = vld [vmem:[%s1733 + $0x24] sm:$0xf]
    %s1744 = scalar_lea.vmem %s3, 120
    %v1745 = vld [vmem:[%s1744] sm:$0xf]
    %v1746 = vld [vmem:[%s1744 + $0x4] sm:$0xf]
    %v1747 = vld [vmem:[%s1744 + $0x8] sm:$0xf]
    %v1748 = vld [vmem:[%s1744 + $0xc] sm:$0xf]
    %v1749 = vld [vmem:[%s1744 + $0x10] sm:$0xf]
    %v1750 = vld [vmem:[%s1744 + $0x14] sm:$0xf]
    %v1751 = vld [vmem:[%s1744 + $0x18] sm:$0xf]
    %v1752 = vld [vmem:[%s1744 + $0x1c] sm:$0xf]
    %v1753 = vld [vmem:[%s1744 + $0x20] sm:$0xf]
    %v1754 = vld [vmem:[%s1744 + $0x24] sm:$0xf]
    %v1755 = vrot.slane %v1684, 1
    %v1766 = vunpack.c.l.b16 %v1745
    %v1767 = vunpack.c.l.b16 %v1746
    %v1768 = vunpack.c.l.b16 %v1747
    %v1769 = vunpack.c.l.b16 %v1748
    %v1770 = vunpack.c.l.b16 %v1749
    %v1771 = vunpack.c.l.b16 %v1750
    %v1772 = vunpack.c.l.b16 %v1751
    %v1773 = vunpack.c.l.b16 %v1752
    %v1774 = vunpack.c.l.b16 %v1753
    %v1775 = vunpack.c.l.b16 %v1754
    %v1776 = vpack.c.b16 %v1767, %v1766
    %v1777 = vpack.c.b16 %v1769, %v1768
    %v1778 = vpack.c.b16 %v1771, %v1770
    %v1779 = vpack.c.b16 %v1773, %v1772
    %v1780 = vpack.c.b16 %v1775, %v1774
    %v1787 = vsel %vm1716, %v1755, 0
    %1789 = vmatpush.bf16.msra.mxu0 0
    %1790 = vmatpush.bf16.msra.mxu0 0
    %1791 = vmatpush.bf16.msra.mxu0 0
    %1792 = vmatpush.bf16.msra.mxu0 %v1780
    %1793 = vmatpush.bf16.msra.mxu0 %v1779
    %1794 = vmatpush.bf16.msra.mxu0 %v1778
    %1795 = vmatpush.bf16.msra.mxu0 %v1777
    %1796 = vmatpush.bf16.msra.mxu0 %v1776
    %1797 = vmatmul.bf16.gmra.mxu0 %v1787
    %v1798 = vpop.f32.mrf.mxu0
    %v1799 = vadd.f32 0.0, %v1798
    %v1800 = vpop.f32.mrf.mxu0
    %1801 = vdwg.mxu0
    %s1802 = scalar_lea.vmem %s3, 160
    %v1803 = vld [vmem:[%s1802] sm:$0xf]
    %v1804 = vld [vmem:[%s1802 + $0x4] sm:$0xf]
    %v1805 = vld [vmem:[%s1802 + $0x8] sm:$0xf]
    %v1806 = vld [vmem:[%s1802 + $0xc] sm:$0xf]
    %v1807 = vld [vmem:[%s1802 + $0x10] sm:$0xf]
    %v1808 = vld [vmem:[%s1802 + $0x14] sm:$0xf]
    %v1809 = vld [vmem:[%s1802 + $0x18] sm:$0xf]
    %v1810 = vld [vmem:[%s1802 + $0x1c] sm:$0xf]
    %v1811 = vld [vmem:[%s1802 + $0x20] sm:$0xf]
    %v1812 = vld [vmem:[%s1802 + $0x24] sm:$0xf]
    %v1814 = vrot.slane %v1671, 2
    %v1825 = vunpack.c.l.b16 %v1803
    %v1826 = vunpack.c.l.b16 %v1804
    %v1827 = vunpack.c.l.b16 %v1805
    %v1828 = vunpack.c.l.b16 %v1806
    %v1829 = vunpack.c.l.b16 %v1807
    %v1830 = vunpack.c.l.b16 %v1808
    %v1831 = vunpack.c.l.b16 %v1809
    %v1832 = vunpack.c.l.b16 %v1810
    %v1833 = vunpack.c.l.b16 %v1811
    %v1834 = vunpack.c.l.b16 %v1812
    %v1835 = vpack.c.b16 %v1826, %v1825
    %v1836 = vpack.c.b16 %v1828, %v1827
    %v1837 = vpack.c.b16 %v1830, %v1829
    %v1838 = vpack.c.b16 %v1832, %v1831
    %v1839 = vpack.c.b16 %v1834, %v1833
    %v1846 = vsel %vm1716, %v1814, 0
    %1848 = vmatpush.bf16.msra.mxu0 0
    %1849 = vmatpush.bf16.msra.mxu0 0
    %1850 = vmatpush.bf16.msra.mxu0 0
    %1851 = vmatpush.bf16.msra.mxu0 %v1839
    %1852 = vmatpush.bf16.msra.mxu0 %v1838
    %1853 = vmatpush.bf16.msra.mxu0 %v1837
    %1854 = vmatpush.bf16.msra.mxu0 %v1836
    %1855 = vmatpush.bf16.msra.mxu0 %v1835
    %1856 = vmatmul.bf16.gmra.mxu0 %v1846
    %v1857 = vpop.f32.mrf.mxu0
    %v1858 = vadd.f32 0.0, %v1857
    %v1859 = vpop.f32.mrf.mxu0
    %1860 = vdwg.mxu0
    %v1871 = vunpack.c.l.b16 %v1661
    %v1872 = vunpack.c.l.b16 %v1662
    %v1873 = vunpack.c.l.b16 %v1663
    %v1874 = vunpack.c.l.b16 %v1664
    %v1875 = vunpack.c.l.b16 %v1665
    %v1876 = vunpack.c.l.b16 %v1666
    %v1877 = vunpack.c.l.b16 %v1667
    %v1878 = vunpack.c.l.b16 %v1668
    %v1879 = vunpack.c.l.b16 %v1669
    %v1880 = vunpack.c.l.b16 %v1670
    %v1881 = vpack.c.b16 %v1872, %v1871
    %v1882 = vpack.c.b16 %v1874, %v1873
    %v1883 = vpack.c.b16 %v1876, %v1875
    %v1884 = vpack.c.b16 %v1878, %v1877
    %v1885 = vpack.c.b16 %v1880, %v1879
    %v1891 = vsel %vm1716, %v1671, 0
    %1893 = vmatpush.bf16.msra.mxu0 0
    %1894 = vmatpush.bf16.msra.mxu0 0
    %1895 = vmatpush.bf16.msra.mxu0 0
    %1896 = vmatpush.bf16.msra.mxu0 %v1885
    %1897 = vmatpush.bf16.msra.mxu0 %v1884
    %1898 = vmatpush.bf16.msra.mxu0 %v1883
    %1899 = vmatpush.bf16.msra.mxu0 %v1882
    %1900 = vmatpush.bf16.msra.mxu0 %v1881
    %1901 = vmatmul.bf16.gmra.mxu0 %v1891
    %v1902 = vpop.f32.mrf.mxu0
    %v1903 = vadd.f32 %v1730, %v1902
    %v1904 = vpop.f32.mrf.mxu0
    %1905 = vdwg.mxu0
    %v1906 = vrot.slane %v1671, 1
    %v1917 = vunpack.c.l.b16 %v1734
    %v1918 = vunpack.c.l.b16 %v1735
    %v1919 = vunpack.c.l.b16 %v1736
    %v1920 = vunpack.c.l.b16 %v1737
    %v1921 = vunpack.c.l.b16 %v1738
    %v1922 = vunpack.c.l.b16 %v1739
    %v1923 = vunpack.c.l.b16 %v1740
    %v1924 = vunpack.c.l.b16 %v1741
    %v1925 = vunpack.c.l.b16 %v1742
    %v1926 = vunpack.c.l.b16 %v1743
    %v1927 = vpack.c.b16 %v1918, %v1917
    %v1928 = vpack.c.b16 %v1920, %v1919
    %v1929 = vpack.c.b16 %v1922, %v1921
    %v1930 = vpack.c.b16 %v1924, %v1923
    %v1931 = vpack.c.b16 %v1926, %v1925
    %v1938 = vsel %vm1716, %v1906, 0
    %1940 = vmatpush.bf16.msra.mxu0 0
    %1941 = vmatpush.bf16.msra.mxu0 0
    %1942 = vmatpush.bf16.msra.mxu0 0
    %1943 = vmatpush.bf16.msra.mxu0 %v1931
    %1944 = vmatpush.bf16.msra.mxu0 %v1930
    %1945 = vmatpush.bf16.msra.mxu0 %v1929
    %1946 = vmatpush.bf16.msra.mxu0 %v1928
    %1947 = vmatpush.bf16.msra.mxu0 %v1927
    %1948 = vmatmul.bf16.gmra.mxu0 %v1938
    %v1949 = vpop.f32.mrf.mxu0
    %v1950 = vadd.f32 %v1799, %v1949
    %v1951 = vpop.f32.mrf.mxu0
    %1952 = vdwg.mxu0
    %v1953 = vadd.f32 %v1903, %v1950
    %v1954 = vadd.f32 %v1953, %v1858
    %v1955 = vadd.f32 %v1954, %v48
    %v1956 = vmax.f32 %v1955, 0.0
    %v1957 = vpack.c.bf16 %v1956, %v1956
    %v1969 = vunpack.c.l.b16 %v50
    %v1970 = vunpack.c.l.b16 %v51
    %v1971 = vunpack.c.l.b16 %v52
    %v1972 = vunpack.c.l.b16 %v53
    %v1973 = vunpack.c.l.b16 %v54
    %v1974 = vunpack.c.l.b16 %v55
    %v1975 = vunpack.c.l.b16 %v56
    %v1976 = vunpack.c.l.b16 %v57
    %v1977 = vunpack.c.l.b16 %v58
    %v1978 = vunpack.c.l.b16 %v59
    %v1979 = vunpack.c.l.b16 %v60
    %v1980 = vpack.c.b16 %v1970, %v1969
    %v1981 = vpack.c.b16 %v1972, %v1971
    %v1982 = vpack.c.b16 %v1974, %v1973
    %v1983 = vpack.c.b16 %v1976, %v1975
    %v1984 = vpack.c.b16 %v1978, %v1977
    %v1985 = vpack.c.b16 %v1979, %v1979
    %v1992 = vsel %vm900, %v1957, 0
    %v1995 = vsel %vm904, %v1985, 0
    %1997 = vmatpush.bf16.msra.mxu0 0
    %1998 = vmatpush.bf16.msra.mxu0 0
    %1999 = vmatpush.bf16.msra.mxu0 %v1995
    %2000 = vmatpush.bf16.msra.mxu0 %v1984
    %2001 = vmatpush.bf16.msra.mxu0 %v1983
    %2002 = vmatpush.bf16.msra.mxu0 %v1982
    %2003 = vmatpush.bf16.msra.mxu0 %v1981
    %2004 = vmatpush.bf16.msra.mxu0 %v1980
    %2005 = vmatmul.bf16.gmra.mxu0 %v1992
    %v2006 = vpop.f32.mrf.mxu0
    %v2007 = vadd.f32 %v49, %v2006
    %v2008 = vpop.f32.mrf.mxu0
    %2009 = vdwg.mxu0
    %2010 = vst [vmem:[#allocation2] sm:$0x1] %v2007
    %s2011 = scalar_lea.vmem %s0, 32
    %v2012 = vld [vmem:[%s2011] sm:$0xff]
    %v2013 = vld [vmem:[%s2011 + $0x8] sm:$0xff]
    %v2014 = vld [vmem:[%s2011 + $0x10] sm:$0xff]
    %v2015 = vld [vmem:[%s2011 + $0x18] sm:$0xff]
    %v2016 = vld [vmem:[%s1] sm:$0xff]
    %v2017 = vld [vmem:[%s1 + $0x8] sm:$0xff]
    %v2018 = vld [vmem:[%s1 + $0x10] sm:$0xff]
    %v2019 = vld [vmem:[%s1 + $0x18] sm:$0xff]
    %v2020 = vpack.c.bf16 %v2013, %v2012
    %v2021 = vpack.c.bf16 %v2015, %v2014
    %v2022 = vld [vmem:[%s71] sm:$0xff]
    %v2023 = vld [vmem:[%s71 + $0x8] sm:$0xff]
    %v2024 = vld [vmem:[%s71 + $0x10] sm:$0xff]
    %v2025 = vld [vmem:[%s71 + $0x18] sm:$0xff]
    %v2027 = vshrl.u32 %v2020, 16
    %v2029 = vshll.u32 %v2020, 16
    %v2031 = vrot.slane %v2029, 1
    %v2032 = vor.u32 %v2027, %v2031
    %v2034 = vshll.u32 %v2021, 16
    %v2036 = vrot.slane %v2034, 1
    %v2037 = vsel %vm76, %v2032, %v2036
    %v2038 = vshrl.u32 %v2021, 16
    %v2040 = vor.u32 %v2038, %v2036
    %v2045 = vunpack.c.l.b16 %v2022
    %v2046 = vunpack.c.h.b16 %v2022
    %v2047 = vunpack.c.l.b16 %v2023
    %v2048 = vunpack.c.h.b16 %v2023
    %v2049 = vunpack.c.l.b16 %v2024
    %v2050 = vunpack.c.h.b16 %v2024
    %v2051 = vunpack.c.l.b16 %v2025
    %v2052 = vunpack.c.h.b16 %v2025
    %v2053 = vpack.c.b16 %v2047, %v2045
    %v2054 = vpack.c.b16 %v2048, %v2046
    %v2055 = vpack.c.b16 %v2051, %v2049
    %v2056 = vpack.c.b16 %v2052, %v2050
    %v2062 = vsel %vm112, %v2037, 0
    %v2065 = vsel %vm112, %v2040, 0
    %2067 = vmatpush.bf16.msra.mxu0 0
    %2068 = vmatpush.bf16.msra.mxu0 0
    %2069 = vmatpush.bf16.msra.mxu0 0
    %2070 = vmatpush.bf16.msra.mxu0 0
    %2071 = vmatpush.bf16.msra.mxu0 0
    %2072 = vmatpush.bf16.msra.mxu0 0
    %2073 = vmatpush.bf16.msra.mxu0 %v2055
    %2074 = vmatpush.bf16.msra.mxu0 %v2053
    %2075 = vmatmul.bf16.gmra.mxu0 %v2062
    %v2076 = vpop.f32.mrf.mxu0
    %v2077 = vadd.f32 0.0, %v2076
    %v2078 = vpop.f32.mrf.mxu0
    %v2079 = vadd.f32 0.0, %v2078
    %2080 = vmatmul.bf16.gmra.mxu0 %v2065
    %v2081 = vpop.f32.mrf.mxu0
    %v2082 = vadd.f32 0.0, %v2081
    %v2083 = vpop.f32.mrf.mxu0
    %v2084 = vadd.f32 0.0, %v2083
    %2085 = vdwg.mxu0
    %2086 = vmatpush.bf16.msra.mxu0 0
    %2087 = vmatpush.bf16.msra.mxu0 0
    %2088 = vmatpush.bf16.msra.mxu0 0
    %2089 = vmatpush.bf16.msra.mxu0 0
    %2090 = vmatpush.bf16.msra.mxu0 0
    %2091 = vmatpush.bf16.msra.mxu0 0
    %2092 = vmatpush.bf16.msra.mxu0 %v2056
    %2093 = vmatpush.bf16.msra.mxu0 %v2054
    %2094 = vmatmul.bf16.gmra.mxu0 %v2062
    %v2095 = vpop.f32.mrf.mxu0
    %v2096 = vadd.f32 0.0, %v2095
    %v2097 = vpop.f32.mrf.mxu0
    %v2098 = vadd.f32 0.0, %v2097
    %2099 = vmatmul.bf16.gmra.mxu0 %v2065
    %v2100 = vpop.f32.mrf.mxu0
    %v2101 = vadd.f32 0.0, %v2100
    %v2102 = vpop.f32.mrf.mxu0
    %v2103 = vadd.f32 0.0, %v2102
    %2104 = vdwg.mxu0
    %v2105 = vld [vmem:[%s157] sm:$0xff]
    %v2106 = vld [vmem:[%s157 + $0x8] sm:$0xff]
    %v2107 = vld [vmem:[%s157 + $0x10] sm:$0xff]
    %v2108 = vld [vmem:[%s157 + $0x18] sm:$0xff]
    %v2109 = vld [vmem:[%s162] sm:$0xff]
    %v2110 = vld [vmem:[%s162 + $0x8] sm:$0xff]
    %v2111 = vld [vmem:[%s162 + $0x10] sm:$0xff]
    %v2112 = vld [vmem:[%s162 + $0x18] sm:$0xff]
    %v2113 = vrot.slane %v2027, 1
    %v2114 = vrot.slane %v2029, 2
    %v2115 = vor.u32 %v2113, %v2114
    %v2116 = vrot.slane %v2038, 1
    %v2117 = vrot.slane %v2034, 2
    %v2118 = vor.u32 %v2116, %v2117
    %v2119 = vsel %vm167, %v2115, %v2118
    %v2124 = vunpack.c.l.b16 %v2109
    %v2125 = vunpack.c.h.b16 %v2109
    %v2126 = vunpack.c.l.b16 %v2110
    %v2127 = vunpack.c.h.b16 %v2110
    %v2128 = vunpack.c.l.b16 %v2111
    %v2129 = vunpack.c.h.b16 %v2111
    %v2130 = vunpack.c.l.b16 %v2112
    %v2131 = vunpack.c.h.b16 %v2112
    %v2132 = vpack.c.b16 %v2126, %v2124
    %v2133 = vpack.c.b16 %v2127, %v2125
    %v2134 = vpack.c.b16 %v2130, %v2128
    %v2135 = vpack.c.b16 %v2131, %v2129
    %v2141 = vsel %vm112, %v2119, 0
    %v2144 = vsel %vm112, %v2118, 0
    %2146 = vmatpush.bf16.msra.mxu0 0
    %2147 = vmatpush.bf16.msra.mxu0 0
    %2148 = vmatpush.bf16.msra.mxu0 0
    %2149 = vmatpush.bf16.msra.mxu0 0
    %2150 = vmatpush.bf16.msra.mxu0 0
    %2151 = vmatpush.bf16.msra.mxu0 0
    %2152 = vmatpush.bf16.msra.mxu0 %v2134
    %2153 = vmatpush.bf16.msra.mxu0 %v2132
    %2154 = vmatmul.bf16.gmra.mxu0 %v2141
    %v2155 = vpop.f32.mrf.mxu0
    %v2156 = vadd.f32 0.0, %v2155
    %v2157 = vpop.f32.mrf.mxu0
    %v2158 = vadd.f32 0.0, %v2157
    %2159 = vmatmul.bf16.gmra.mxu0 %v2144
    %v2160 = vpop.f32.mrf.mxu0
    %v2161 = vadd.f32 0.0, %v2160
    %v2162 = vpop.f32.mrf.mxu0
    %v2163 = vadd.f32 0.0, %v2162
    %2164 = vdwg.mxu0
    %2165 = vmatpush.bf16.msra.mxu0 0
    %2166 = vmatpush.bf16.msra.mxu0 0
    %2167 = vmatpush.bf16.msra.mxu0 0
    %2168 = vmatpush.bf16.msra.mxu0 0
    %2169 = vmatpush.bf16.msra.mxu0 0
    %2170 = vmatpush.bf16.msra.mxu0 0
    %2171 = vmatpush.bf16.msra.mxu0 %v2135
    %2172 = vmatpush.bf16.msra.mxu0 %v2133
    %2173 = vmatmul.bf16.gmra.mxu0 %v2141
    %v2174 = vpop.f32.mrf.mxu0
    %v2175 = vadd.f32 0.0, %v2174
    %v2176 = vpop.f32.mrf.mxu0
    %v2177 = vadd.f32 0.0, %v2176
    %2178 = vmatmul.bf16.gmra.mxu0 %v2144
    %v2179 = vpop.f32.mrf.mxu0
    %v2180 = vadd.f32 0.0, %v2179
    %v2181 = vpop.f32.mrf.mxu0
    %v2182 = vadd.f32 0.0, %v2181
    %2183 = vdwg.mxu0
    %v2184 = vld [vmem:[%s239] sm:$0xff]
    %v2185 = vld [vmem:[%s239 + $0x8] sm:$0xff]
    %v2186 = vld [vmem:[%s239 + $0x10] sm:$0xff]
    %v2187 = vld [vmem:[%s239 + $0x18] sm:$0xff]
    %v2190 = vrot.slane %v2020, 2
    %v2191 = vrot.slane %v2021, 2
    %v2192 = vsel %vm246, %v2190, %v2191
    %v2197 = vunpack.c.l.b16 %v2184
    %v2198 = vunpack.c.h.b16 %v2184
    %v2199 = vunpack.c.l.b16 %v2185
    %v2200 = vunpack.c.h.b16 %v2185
    %v2201 = vunpack.c.l.b16 %v2186
    %v2202 = vunpack.c.h.b16 %v2186
    %v2203 = vunpack.c.l.b16 %v2187
    %v2204 = vunpack.c.h.b16 %v2187
    %v2205 = vpack.c.b16 %v2199, %v2197
    %v2206 = vpack.c.b16 %v2200, %v2198
    %v2207 = vpack.c.b16 %v2203, %v2201
    %v2208 = vpack.c.b16 %v2204, %v2202
    %v2214 = vsel %vm112, %v2192, 0
    %v2217 = vsel %vm112, %v2191, 0
    %2219 = vmatpush.bf16.msra.mxu0 0
    %2220 = vmatpush.bf16.msra.mxu0 0
    %2221 = vmatpush.bf16.msra.mxu0 0
    %2222 = vmatpush.bf16.msra.mxu0 0
    %2223 = vmatpush.bf16.msra.mxu0 0
    %2224 = vmatpush.bf16.msra.mxu0 0
    %2225 = vmatpush.bf16.msra.mxu0 %v2207
    %2226 = vmatpush.bf16.msra.mxu0 %v2205
    %2227 = vmatmul.bf16.gmra.mxu0 %v2214
    %v2228 = vpop.f32.mrf.mxu0
    %v2229 = vadd.f32 0.0, %v2228
    %v2230 = vpop.f32.mrf.mxu0
    %v2231 = vadd.f32 0.0, %v2230
    %2232 = vmatmul.bf16.gmra.mxu0 %v2217
    %v2233 = vpop.f32.mrf.mxu0
    %v2234 = vadd.f32 0.0, %v2233
    %v2235 = vpop.f32.mrf.mxu0
    %v2236 = vadd.f32 0.0, %v2235
    %2237 = vdwg.mxu0
    %2238 = vmatpush.bf16.msra.mxu0 0
    %2239 = vmatpush.bf16.msra.mxu0 0
    %2240 = vmatpush.bf16.msra.mxu0 0
    %2241 = vmatpush.bf16.msra.mxu0 0
    %2242 = vmatpush.bf16.msra.mxu0 0
    %2243 = vmatpush.bf16.msra.mxu0 0
    %2244 = vmatpush.bf16.msra.mxu0 %v2208
    %2245 = vmatpush.bf16.msra.mxu0 %v2206
    %2246 = vmatmul.bf16.gmra.mxu0 %v2214
    %v2247 = vpop.f32.mrf.mxu0
    %v2248 = vadd.f32 0.0, %v2247
    %v2249 = vpop.f32.mrf.mxu0
    %v2250 = vadd.f32 0.0, %v2249
    %2251 = vmatmul.bf16.gmra.mxu0 %v2217
    %v2252 = vpop.f32.mrf.mxu0
    %v2253 = vadd.f32 0.0, %v2252
    %v2254 = vpop.f32.mrf.mxu0
    %v2255 = vadd.f32 0.0, %v2254
    %2256 = vdwg.mxu0
    %v2261 = vunpack.c.l.b16 %v2016
    %v2262 = vunpack.c.h.b16 %v2016
    %v2263 = vunpack.c.l.b16 %v2017
    %v2264 = vunpack.c.h.b16 %v2017
    %v2265 = vunpack.c.l.b16 %v2018
    %v2266 = vunpack.c.h.b16 %v2018
    %v2267 = vunpack.c.l.b16 %v2019
    %v2268 = vunpack.c.h.b16 %v2019
    %v2269 = vpack.c.b16 %v2263, %v2261
    %v2270 = vpack.c.b16 %v2264, %v2262
    %v2271 = vpack.c.b16 %v2267, %v2265
    %v2272 = vpack.c.b16 %v2268, %v2266
    %v2277 = vsel %vm112, %v2020, 0
    %v2279 = vsel %vm112, %v2021, 0
    %2281 = vmatpush.bf16.msra.mxu0 0
    %2282 = vmatpush.bf16.msra.mxu0 0
    %2283 = vmatpush.bf16.msra.mxu0 0
    %2284 = vmatpush.bf16.msra.mxu0 0
    %2285 = vmatpush.bf16.msra.mxu0 0
    %2286 = vmatpush.bf16.msra.mxu0 0
    %2287 = vmatpush.bf16.msra.mxu0 %v2271
    %2288 = vmatpush.bf16.msra.mxu0 %v2269
    %2289 = vmatmul.bf16.gmra.mxu0 %v2277
    %v2290 = vpop.f32.mrf.mxu0
    %v2291 = vadd.f32 %v2077, %v2290
    %v2292 = vpop.f32.mrf.mxu0
    %v2293 = vadd.f32 %v2079, %v2292
    %2294 = vmatmul.bf16.gmra.mxu0 %v2279
    %v2295 = vpop.f32.mrf.mxu0
    %v2296 = vadd.f32 %v2082, %v2295
    %v2297 = vpop.f32.mrf.mxu0
    %v2298 = vadd.f32 %v2084, %v2297
    %2299 = vdwg.mxu0
    %2300 = vmatpush.bf16.msra.mxu0 0
    %2301 = vmatpush.bf16.msra.mxu0 0
    %2302 = vmatpush.bf16.msra.mxu0 0
    %2303 = vmatpush.bf16.msra.mxu0 0
    %2304 = vmatpush.bf16.msra.mxu0 0
    %2305 = vmatpush.bf16.msra.mxu0 0
    %2306 = vmatpush.bf16.msra.mxu0 %v2272
    %2307 = vmatpush.bf16.msra.mxu0 %v2270
    %2308 = vmatmul.bf16.gmra.mxu0 %v2277
    %v2309 = vpop.f32.mrf.mxu0
    %v2310 = vadd.f32 %v2096, %v2309
    %v2311 = vpop.f32.mrf.mxu0
    %v2312 = vadd.f32 %v2098, %v2311
    %2313 = vmatmul.bf16.gmra.mxu0 %v2279
    %v2314 = vpop.f32.mrf.mxu0
    %v2315 = vadd.f32 %v2101, %v2314
    %v2316 = vpop.f32.mrf.mxu0
    %v2317 = vadd.f32 %v2103, %v2316
    %2318 = vdwg.mxu0
    %v2319 = vrot.slane %v2020, 1
    %v2320 = vrot.slane %v2021, 1
    %v2321 = vsel %vm376, %v2319, %v2320
    %v2326 = vunpack.c.l.b16 %v2105
    %v2327 = vunpack.c.h.b16 %v2105
    %v2328 = vunpack.c.l.b16 %v2106
    %v2329 = vunpack.c.h.b16 %v2106
    %v2330 = vunpack.c.l.b16 %v2107
    %v2331 = vunpack.c.h.b16 %v2107
    %v2332 = vunpack.c.l.b16 %v2108
    %v2333 = vunpack.c.h.b16 %v2108
    %v2334 = vpack.c.b16 %v2328, %v2326
    %v2335 = vpack.c.b16 %v2329, %v2327
    %v2336 = vpack.c.b16 %v2332, %v2330
    %v2337 = vpack.c.b16 %v2333, %v2331
    %v2343 = vsel %vm112, %v2321, 0
    %v2346 = vsel %vm112, %v2320, 0
    %2348 = vmatpush.bf16.msra.mxu0 0
    %2349 = vmatpush.bf16.msra.mxu0 0
    %2350 = vmatpush.bf16.msra.mxu0 0
    %2351 = vmatpush.bf16.msra.mxu0 0
    %2352 = vmatpush.bf16.msra.mxu0 0
    %2353 = vmatpush.bf16.msra.mxu0 0
    %2354 = vmatpush.bf16.msra.mxu0 %v2336
    %2355 = vmatpush.bf16.msra.mxu0 %v2334
    %2356 = vmatmul.bf16.gmra.mxu0 %v2343
    %v2357 = vpop.f32.mrf.mxu0
    %v2358 = vadd.f32 %v2156, %v2357
    %v2359 = vpop.f32.mrf.mxu0
    %v2360 = vadd.f32 %v2158, %v2359
    %2361 = vmatmul.bf16.gmra.mxu0 %v2346
    %v2362 = vpop.f32.mrf.mxu0
    %v2363 = vadd.f32 %v2161, %v2362
    %v2364 = vpop.f32.mrf.mxu0
    %v2365 = vadd.f32 %v2163, %v2364
    %2366 = vdwg.mxu0
    %2367 = vmatpush.bf16.msra.mxu0 0
    %2368 = vmatpush.bf16.msra.mxu0 0
    %2369 = vmatpush.bf16.msra.mxu0 0
    %2370 = vmatpush.bf16.msra.mxu0 0
    %2371 = vmatpush.bf16.msra.mxu0 0
    %2372 = vmatpush.bf16.msra.mxu0 0
    %2373 = vmatpush.bf16.msra.mxu0 %v2337
    %2374 = vmatpush.bf16.msra.mxu0 %v2335
    %2375 = vmatmul.bf16.gmra.mxu0 %v2343
    %v2376 = vpop.f32.mrf.mxu0
    %v2377 = vadd.f32 %v2175, %v2376
    %v2378 = vpop.f32.mrf.mxu0
    %v2379 = vadd.f32 %v2177, %v2378
    %2380 = vmatmul.bf16.gmra.mxu0 %v2346
    %v2381 = vpop.f32.mrf.mxu0
    %v2382 = vadd.f32 %v2180, %v2381
    %v2383 = vpop.f32.mrf.mxu0
    %v2384 = vadd.f32 %v2182, %v2383
    %2385 = vdwg.mxu0
    %v2386 = vadd.f32 %v2291, %v2358
    %v2387 = vadd.f32 %v2310, %v2377
    %v2388 = vadd.f32 %v2293, %v2360
    %v2389 = vadd.f32 %v2312, %v2379
    %v2390 = vadd.f32 %v2296, %v2363
    %v2391 = vadd.f32 %v2315, %v2382
    %v2392 = vadd.f32 %v2298, %v2365
    %v2393 = vadd.f32 %v2317, %v2384
    %v2394 = vadd.f32 %v2386, %v2229
    %v2395 = vadd.f32 %v2387, %v2248
    %v2396 = vadd.f32 %v2388, %v2231
    %v2397 = vadd.f32 %v2389, %v2250
    %v2398 = vadd.f32 %v2390, %v2234
    %v2399 = vadd.f32 %v2391, %v2253
    %v2400 = vadd.f32 %v2392, %v2236
    %v2401 = vadd.f32 %v2393, %v2255
    %v2402 = vadd.f32 %v2394, %v461
    %v2403 = vadd.f32 %v2395, %v462
    %v2404 = vadd.f32 %v2396, %v461
    %v2405 = vadd.f32 %v2397, %v462
    %v2406 = vadd.f32 %v2398, %v461
    %v2407 = vadd.f32 %v2399, %v462
    %v2408 = vadd.f32 %v2400, %v461
    %v2409 = vadd.f32 %v2401, %v462
    %v2410 = vmax.f32 %v2402, 0.0
    %v2411 = vmax.f32 %v2403, 0.0
    %v2412 = vmax.f32 %v2404, 0.0
    %v2413 = vmax.f32 %v2405, 0.0
    %v2414 = vmax.f32 %v2406, 0.0
    %v2415 = vmax.f32 %v2407, 0.0
    %v2416 = vmax.f32 %v2408, 0.0
    %v2417 = vmax.f32 %v2409, 0.0
    %v2418 = vld [vmem:[%s4] sm:$0xf]
    %v2419 = vld [vmem:[%s4 + $0x4] sm:$0x7]
    %v2420 = vpack.c.bf16 %v2412, %v2410
    %v2421 = vpack.c.bf16 %v2413, %v2411
    %v2422 = vpack.c.bf16 %v2416, %v2414
    %v2423 = vpack.c.bf16 %v2417, %v2415
    %v2426 = vunpack.c.l.b16 %v2418
    %v2427 = vunpack.c.l.b16 %v2419
    %v2428 = vpack.c.b16 %v2427, %v2426
    %v2430 = vsel %vm492, %v2428, 0
    %v2433 = vsel %vm496, %v2422, 0
    %v2436 = vsel %vm496, %v2423, 0
    %2438 = vmatpush.bf16.msra.mxu0 0
    %2439 = vmatpush.bf16.msra.mxu0 0
    %2440 = vmatpush.bf16.msra.mxu0 0
    %2441 = vmatpush.bf16.msra.mxu0 0
    %2442 = vmatpush.bf16.msra.mxu0 0
    %2443 = vmatpush.bf16.msra.mxu0 0
    %2444 = vmatpush.bf16.msra.mxu0 %v2433
    %2445 = vmatpush.bf16.msra.mxu0 %v2420
    %2446 = vmatmul.bf16.gmra.mxu0 %v2430
    %v2447 = vpop.f32.mrf.mxu0
    %v2448 = vadd.f32 0.0, %v2447
    %v2449 = vpop.f32.mrf.mxu0
    %v2450 = vadd.f32 0.0, %v2449
    %2451 = vdwg.mxu0
    %2452 = vmatpush.bf16.msra.mxu0 0
    %2453 = vmatpush.bf16.msra.mxu0 0
    %2454 = vmatpush.bf16.msra.mxu0 0
    %2455 = vmatpush.bf16.msra.mxu0 0
    %2456 = vmatpush.bf16.msra.mxu0 0
    %2457 = vmatpush.bf16.msra.mxu0 0
    %2458 = vmatpush.bf16.msra.mxu0 %v2436
    %2459 = vmatpush.bf16.msra.mxu0 %v2421
    %2460 = vmatmul.bf16.gmra.mxu0 %v2430
    %v2461 = vpop.f32.mrf.mxu0
    %v2462 = vadd.f32 0.0, %v2461
    %v2463 = vpop.f32.mrf.mxu0
    %v2464 = vadd.f32 0.0, %v2463
    %2465 = vdwg.mxu0
    %v2466 = vld [vmem:[%s531] sm:$0xf]
    %v2467 = vld [vmem:[%s531 + $0x4] sm:$0x7]
    %v2470 = vunpack.c.l.b16 %v2466
    %v2471 = vunpack.c.l.b16 %v2467
    %v2472 = vpack.c.b16 %v2471, %v2470
    %v2474 = vsel %vm492, %v2472, 0
    %2476 = vmatpush.bf16.msra.mxu0 0
    %2477 = vmatpush.bf16.msra.mxu0 0
    %2478 = vmatpush.bf16.msra.mxu0 0
    %2479 = vmatpush.bf16.msra.mxu0 0
    %2480 = vmatpush.bf16.msra.mxu0 0
    %2481 = vmatpush.bf16.msra.mxu0 0
    %2482 = vmatpush.bf16.msra.mxu0 %v2433
    %2483 = vmatpush.bf16.msra.mxu0 %v2420
    %2484 = vmatmul.bf16.gmra.mxu0 %v2474
    %v2485 = vpop.f32.mrf.mxu0
    %v2486 = vadd.f32 0.0, %v2485
    %v2487 = vpop.f32.mrf.mxu0
    %v2488 = vadd.f32 0.0, %v2487
    %2489 = vdwg.mxu0
    %2490 = vmatpush.bf16.msra.mxu0 0
    %2491 = vmatpush.bf16.msra.mxu0 0
    %2492 = vmatpush.bf16.msra.mxu0 0
    %2493 = vmatpush.bf16.msra.mxu0 0
    %2494 = vmatpush.bf16.msra.mxu0 0
    %2495 = vmatpush.bf16.msra.mxu0 0
    %2496 = vmatpush.bf16.msra.mxu0 %v2436
    %2497 = vmatpush.bf16.msra.mxu0 %v2421
    %2498 = vmatmul.bf16.gmra.mxu0 %v2474
    %v2499 = vpop.f32.mrf.mxu0
    %v2500 = vadd.f32 0.0, %v2499
    %v2501 = vpop.f32.mrf.mxu0
    %v2502 = vadd.f32 0.0, %v2501
    %2503 = vdwg.mxu0
    %v2504 = vmax.f32 %v2448, %v2486
    %v2505 = vmax.f32 %v2462, %v2500
    %v2506 = vmax.f32 %v2450, %v2488
    %v2507 = vmax.f32 %v2464, %v2502
    %v2508 = vld [vmem:[%s5] sm:$0xf]
    %v2509 = vld [vmem:[%s5 + $0x4] sm:$0xf]
    %v2510 = vld [vmem:[%s5 + $0x8] sm:$0xf]
    %v2511 = vld [vmem:[%s5 + $0xc] sm:$0xf]
    %v2512 = vld [vmem:[%s5 + $0x10] sm:$0xf]
    %v2513 = vld [vmem:[%s5 + $0x14] sm:$0xf]
    %v2514 = vld [vmem:[%s5 + $0x18] sm:$0xf]
    %v2515 = vld [vmem:[%s5 + $0x1c] sm:$0xf]
    %v2516 = vld [vmem:[%s5 + $0x20] sm:$0xf]
    %v2517 = vld [vmem:[%s5 + $0x24] sm:$0xf]
    %v2518 = vld [vmem:[%s5 + $0x28] sm:$0xf]
    %v2519 = vld [vmem:[%s5 + $0x2c] sm:$0xf]
    %v2520 = vld [vmem:[%s5 + $0x30] sm:$0xf]
    %v2521 = vld [vmem:[%s5 + $0x34] sm:$0xf]
    %v2522 = vld [vmem:[%s5 + $0x38] sm:$0xf]
    %v2523 = vld [vmem:[%s5 + $0x3c] sm:$0xf]
    %v2524 = vld [vmem:[%s5 + $0x40] sm:$0xf]
    %v2525 = vld [vmem:[%s5 + $0x44] sm:$0xf]
    %v2526 = vld [vmem:[%s5 + $0x48] sm:$0xf]
    %v2527 = vld [vmem:[%s5 + $0x4c] sm:$0xf]
    %v2528 = vld [vmem:[%s5 + $0x50] sm:$0xf]
    %v2529 = vpack.c.bf16 %v2506, %v2504
    %v2530 = vpack.c.bf16 %v2507, %v2505
    %v2552 = vunpack.c.l.b16 %v2508
    %v2553 = vunpack.c.l.b16 %v2509
    %v2554 = vunpack.c.l.b16 %v2510
    %v2555 = vunpack.c.l.b16 %v2511
    %v2556 = vunpack.c.l.b16 %v2512
    %v2557 = vunpack.c.l.b16 %v2513
    %v2558 = vunpack.c.l.b16 %v2514
    %v2559 = vunpack.c.l.b16 %v2515
    %v2560 = vunpack.c.l.b16 %v2516
    %v2561 = vunpack.c.l.b16 %v2517
    %v2562 = vunpack.c.l.b16 %v2518
    %v2563 = vunpack.c.l.b16 %v2519
    %v2564 = vunpack.c.l.b16 %v2520
    %v2565 = vunpack.c.l.b16 %v2521
    %v2566 = vunpack.c.l.b16 %v2522
    %v2567 = vunpack.c.l.b16 %v2523
    %v2568 = vunpack.c.l.b16 %v2524
    %v2569 = vunpack.c.l.b16 %v2525
    %v2570 = vunpack.c.l.b16 %v2526
    %v2571 = vunpack.c.l.b16 %v2527
    %v2572 = vunpack.c.l.b16 %v2528
    %v2573 = vpack.c.b16 %v2553, %v2552
    %v2574 = vpack.c.b16 %v2555, %v2554
    %v2575 = vpack.c.b16 %v2557, %v2556
    %v2576 = vpack.c.b16 %v2559, %v2558
    %v2577 = vpack.c.b16 %v2561, %v2560
    %v2578 = vpack.c.b16 %v2563, %v2562
    %v2579 = vpack.c.b16 %v2565, %v2564
    %v2580 = vpack.c.b16 %v2567, %v2566
    %v2581 = vpack.c.b16 %v2569, %v2568
    %v2582 = vpack.c.b16 %v2571, %v2570
    %v2583 = vpack.c.b16 %v2572, %v2572
    %v2595 = vsel %vm660, %v2530, 0
    %v2598 = vsel %vm664, %v2583, 0
    %2600 = vmatpush.bf16.msra.mxu0 %v2580
    %2601 = vmatpush.bf16.msra.mxu0 %v2579
    %2602 = vmatpush.bf16.msra.mxu0 %v2578
    %2603 = vmatpush.bf16.msra.mxu0 %v2577
    %2604 = vmatpush.bf16.msra.mxu0 %v2576
    %2605 = vmatpush.bf16.msra.mxu0 %v2575
    %2606 = vmatpush.bf16.msra.mxu0 %v2574
    %2607 = vmatpush.bf16.msra.mxu0 %v2573
    %2608 = vmatmul.bf16.gmra.mxu0 %v2529
    %v2609 = vpop.f32.mrf.mxu0
    %v2610 = vadd.f32 0.0, %v2609
    %v2611 = vpop.f32.mrf.mxu0
    %v2612 = vadd.f32 0.0, %v2611
    %2613 = vdwg.mxu0
    %2614 = vmatpush.bf16.msra.mxu0 0
    %2615 = vmatpush.bf16.msra.mxu0 0
    %2616 = vmatpush.bf16.msra.mxu0 0
    %2617 = vmatpush.bf16.msra.mxu0 0
    %2618 = vmatpush.bf16.msra.mxu0 0
    %2619 = vmatpush.bf16.msra.mxu0 %v2598
    %2620 = vmatpush.bf16.msra.mxu0 %v2582
    %2621 = vmatpush.bf16.msra.mxu0 %v2581
    %2622 = vmatmul.bf16.gmra.mxu0 %v2595
    %v2623 = vpop.f32.mrf.mxu0
    %v2624 = vadd.f32 %v2610, %v2623
    %v2625 = vpop.f32.mrf.mxu0
    %v2626 = vadd.f32 %v2612, %v2625
    %2627 = vdwg.mxu0
    %v2628 = vld [vmem:[%s696] sm:$0xf]
    %v2629 = vld [vmem:[%s696 + $0x4] sm:$0xf]
    %v2630 = vld [vmem:[%s696 + $0x8] sm:$0xf]
    %v2631 = vld [vmem:[%s696 + $0xc] sm:$0xf]
    %v2632 = vld [vmem:[%s696 + $0x10] sm:$0xf]
    %v2633 = vld [vmem:[%s696 + $0x14] sm:$0xf]
    %v2634 = vld [vmem:[%s696 + $0x18] sm:$0xf]
    %v2635 = vld [vmem:[%s696 + $0x1c] sm:$0xf]
    %v2636 = vld [vmem:[%s696 + $0x20] sm:$0xf]
    %v2637 = vld [vmem:[%s696 + $0x24] sm:$0xf]
    %v2638 = vld [vmem:[%s696 + $0x28] sm:$0xf]
    %v2639 = vld [vmem:[%s696 + $0x2c] sm:$0xf]
    %v2640 = vld [vmem:[%s696 + $0x30] sm:$0xf]
    %v2641 = vld [vmem:[%s696 + $0x34] sm:$0xf]
    %v2642 = vld [vmem:[%s696 + $0x38] sm:$0xf]
    %v2643 = vld [vmem:[%s696 + $0x3c] sm:$0xf]
    %v2644 = vld [vmem:[%s696 + $0x40] sm:$0xf]
    %v2645 = vld [vmem:[%s696 + $0x44] sm:$0xf]
    %v2646 = vld [vmem:[%s696 + $0x48] sm:$0xf]
    %v2647 = vld [vmem:[%s696 + $0x4c] sm:$0xf]
    %v2648 = vld [vmem:[%s696 + $0x50] sm:$0xf]
    %v2670 = vunpack.c.l.b16 %v2628
    %v2671 = vunpack.c.l.b16 %v2629
    %v2672 = vunpack.c.l.b16 %v2630
    %v2673 = vunpack.c.l.b16 %v2631
    %v2674 = vunpack.c.l.b16 %v2632
    %v2675 = vunpack.c.l.b16 %v2633
    %v2676 = vunpack.c.l.b16 %v2634
    %v2677 = vunpack.c.l.b16 %v2635
    %v2678 = vunpack.c.l.b16 %v2636
    %v2679 = vunpack.c.l.b16 %v2637
    %v2680 = vunpack.c.l.b16 %v2638
    %v2681 = vunpack.c.l.b16 %v2639
    %v2682 = vunpack.c.l.b16 %v2640
    %v2683 = vunpack.c.l.b16 %v2641
    %v2684 = vunpack.c.l.b16 %v2642
    %v2685 = vunpack.c.l.b16 %v2643
    %v2686 = vunpack.c.l.b16 %v2644
    %v2687 = vunpack.c.l.b16 %v2645
    %v2688 = vunpack.c.l.b16 %v2646
    %v2689 = vunpack.c.l.b16 %v2647
    %v2690 = vunpack.c.l.b16 %v2648
    %v2691 = vpack.c.b16 %v2671, %v2670
    %v2692 = vpack.c.b16 %v2673, %v2672
    %v2693 = vpack.c.b16 %v2675, %v2674
    %v2694 = vpack.c.b16 %v2677, %v2676
    %v2695 = vpack.c.b16 %v2679, %v2678
    %v2696 = vpack.c.b16 %v2681, %v2680
    %v2697 = vpack.c.b16 %v2683, %v2682
    %v2698 = vpack.c.b16 %v2685, %v2684
    %v2699 = vpack.c.b16 %v2687, %v2686
    %v2700 = vpack.c.b16 %v2689, %v2688
    %v2701 = vpack.c.b16 %v2690, %v2690
    %v2713 = vsel %vm664, %v2701, 0
    %2715 = vmatpush.bf16.msra.mxu0 %v2698
    %2716 = vmatpush.bf16.msra.mxu0 %v2697
    %2717 = vmatpush.bf16.msra.mxu0 %v2696
    %2718 = vmatpush.bf16.msra.mxu0 %v2695
    %2719 = vmatpush.bf16.msra.mxu0 %v2694
    %2720 = vmatpush.bf16.msra.mxu0 %v2693
    %2721 = vmatpush.bf16.msra.mxu0 %v2692
    %2722 = vmatpush.bf16.msra.mxu0 %v2691
    %2723 = vmatmul.bf16.gmra.mxu0 %v2529
    %v2724 = vpop.f32.mrf.mxu0
    %v2725 = vadd.f32 0.0, %v2724
    %v2726 = vpop.f32.mrf.mxu0
    %v2727 = vadd.f32 0.0, %v2726
    %2728 = vdwg.mxu0
    %2729 = vmatpush.bf16.msra.mxu0 0
    %2730 = vmatpush.bf16.msra.mxu0 0
    %2731 = vmatpush.bf16.msra.mxu0 0
    %2732 = vmatpush.bf16.msra.mxu0 0
    %2733 = vmatpush.bf16.msra.mxu0 0
    %2734 = vmatpush.bf16.msra.mxu0 %v2713
    %2735 = vmatpush.bf16.msra.mxu0 %v2700
    %2736 = vmatpush.bf16.msra.mxu0 %v2699
    %2737 = vmatmul.bf16.gmra.mxu0 %v2595
    %v2738 = vpop.f32.mrf.mxu0
    %v2739 = vadd.f32 %v2725, %v2738
    %v2740 = vpop.f32.mrf.mxu0
    %v2741 = vadd.f32 %v2727, %v2740
    %2742 = vdwg.mxu0
    %v2743 = vmax.f32 %v2624, %v2739
    %v2744 = vmax.f32 %v2626, %v2741
    %v2745 = vld [vmem:[%s2] sm:$0xff]
    %v2746 = vld [vmem:[%s2 + $0x8] sm:$0xff]
    %v2747 = vld [vmem:[%s2 + $0x10] sm:$0xff]
    %v2748 = vld [vmem:[%s2 + $0x18] sm:$0xff]
    %v2749 = vld [vmem:[%s2 + $0x20] sm:$0xff]
    %v2750 = vld [vmem:[%s2 + $0x28] sm:$0xff]
    %v2751 = vld [vmem:[%s2 + $0x30] sm:$0xff]
    %v2752 = vld [vmem:[%s2 + $0x38] sm:$0xff]
    %v2753 = vld [vmem:[%s2 + $0x40] sm:$0xff]
    %v2754 = vld [vmem:[%s2 + $0x48] sm:$0xff]
    %v2755 = vld [vmem:[%s2 + $0x50] sm:$0x33]
    %v2756 = vpack.c.bf16 %v2744, %v2743
    %v2757 = vld [vmem:[%s826] sm:$0xff]
    %v2758 = vld [vmem:[%s826 + $0x8] sm:$0xff]
    %v2759 = vld [vmem:[%s826 + $0x10] sm:$0xff]
    %v2760 = vld [vmem:[%s826 + $0x18] sm:$0xff]
    %v2761 = vld [vmem:[%s826 + $0x20] sm:$0xff]
    %v2762 = vld [vmem:[%s826 + $0x28] sm:$0xff]
    %v2763 = vld [vmem:[%s826 + $0x30] sm:$0xff]
    %v2764 = vld [vmem:[%s826 + $0x38] sm:$0xff]
    %v2765 = vld [vmem:[%s826 + $0x40] sm:$0xff]
    %v2766 = vld [vmem:[%s826 + $0x48] sm:$0xff]
    %v2767 = vld [vmem:[%s826 + $0x50] sm:$0x33]
    %v2769 = vshrl.u32 %v2756, 16
    %v2771 = vshll.u32 %v2756, 16
    %v2773 = vrot.slane %v2771, 1
    %v2774 = vor.u32 %v2769, %v2773
    %v2786 = vunpack.c.l.b16 %v2757
    %v2787 = vunpack.c.h.b16 %v2757
    %v2788 = vunpack.c.l.b16 %v2758
    %v2789 = vunpack.c.h.b16 %v2758
    %v2790 = vunpack.c.l.b16 %v2759
    %v2791 = vunpack.c.h.b16 %v2759
    %v2792 = vunpack.c.l.b16 %v2760
    %v2793 = vunpack.c.h.b16 %v2760
    %v2794 = vunpack.c.l.b16 %v2761
    %v2795 = vunpack.c.h.b16 %v2761
    %v2796 = vunpack.c.l.b16 %v2762
    %v2797 = vunpack.c.h.b16 %v2762
    %v2798 = vunpack.c.l.b16 %v2763
    %v2799 = vunpack.c.h.b16 %v2763
    %v2800 = vunpack.c.l.b16 %v2764
    %v2801 = vunpack.c.h.b16 %v2764
    %v2802 = vunpack.c.l.b16 %v2765
    %v2803 = vunpack.c.h.b16 %v2765
    %v2804 = vunpack.c.l.b16 %v2766
    %v2805 = vunpack.c.h.b16 %v2766
    %v2806 = vunpack.c.l.b16 %v2767
    %v2807 = vunpack.c.h.b16 %v2767
    %v2808 = vpack.c.b16 %v2788, %v2786
    %v2809 = vpack.c.b16 %v2789, %v2787
    %v2810 = vpack.c.b16 %v2792, %v2790
    %v2811 = vpack.c.b16 %v2793, %v2791
    %v2812 = vpack.c.b16 %v2796, %v2794
    %v2813 = vpack.c.b16 %v2797, %v2795
    %v2814 = vpack.c.b16 %v2800, %v2798
    %v2815 = vpack.c.b16 %v2801, %v2799
    %v2816 = vpack.c.b16 %v2804, %v2802
    %v2817 = vpack.c.b16 %v2805, %v2803
    %v2818 = vpack.c.b16 %v2806, %v2806
    %v2819 = vpack.c.b16 %v2807, %v2807
    %v2831 = vsel %vm900, %v2774, 0
    %v2834 = vsel %vm904, %v2818, 0
    %v2837 = vsel %vm904, %v2819, 0
    %2839 = vmatpush.bf16.msra.mxu0 0
    %2840 = vmatpush.bf16.msra.mxu0 0
    %2841 = vmatpush.bf16.msra.mxu0 %v2834
    %2842 = vmatpush.bf16.msra.mxu0 %v2816
    %2843 = vmatpush.bf16.msra.mxu0 %v2814
    %2844 = vmatpush.bf16.msra.mxu0 %v2812
    %2845 = vmatpush.bf16.msra.mxu0 %v2810
    %2846 = vmatpush.bf16.msra.mxu0 %v2808
    %2847 = vmatmul.bf16.gmra.mxu0 %v2831
    %v2848 = vpop.f32.mrf.mxu0
    %v2849 = vadd.f32 0.0, %v2848
    %v2850 = vpop.f32.mrf.mxu0
    %v2851 = vadd.f32 0.0, %v2850
    %2852 = vdwg.mxu0
    %2853 = vmatpush.bf16.msra.mxu0 0
    %2854 = vmatpush.bf16.msra.mxu0 0
    %2855 = vmatpush.bf16.msra.mxu0 %v2837
    %2856 = vmatpush.bf16.msra.mxu0 %v2817
    %2857 = vmatpush.bf16.msra.mxu0 %v2815
    %2858 = vmatpush.bf16.msra.mxu0 %v2813
    %2859 = vmatpush.bf16.msra.mxu0 %v2811
    %2860 = vmatpush.bf16.msra.mxu0 %v2809
    %2861 = vmatmul.bf16.gmra.mxu0 %v2831
    %v2862 = vpop.f32.mrf.mxu0
    %v2863 = vadd.f32 0.0, %v2862
    %v2864 = vpop.f32.mrf.mxu0
    %v2865 = vadd.f32 0.0, %v2864
    %2866 = vdwg.mxu0
    %v2867 = vld [vmem:[%s939] sm:$0xff]
    %v2868 = vld [vmem:[%s939 + $0x8] sm:$0xff]
    %v2869 = vld [vmem:[%s939 + $0x10] sm:$0xff]
    %v2870 = vld [vmem:[%s939 + $0x18] sm:$0xff]
    %v2871 = vld [vmem:[%s939 + $0x20] sm:$0xff]
    %v2872 = vld [vmem:[%s939 + $0x28] sm:$0xff]
    %v2873 = vld [vmem:[%s939 + $0x30] sm:$0xff]
    %v2874 = vld [vmem:[%s939 + $0x38] sm:$0xff]
    %v2875 = vld [vmem:[%s939 + $0x40] sm:$0xff]
    %v2876 = vld [vmem:[%s939 + $0x48] sm:$0xff]
    %v2877 = vld [vmem:[%s939 + $0x50] sm:$0x33]
    %v2878 = vld [vmem:[%s951] sm:$0xff]
    %v2879 = vld [vmem:[%s951 + $0x8] sm:$0xff]
    %v2880 = vld [vmem:[%s951 + $0x10] sm:$0xff]
    %v2881 = vld [vmem:[%s951 + $0x18] sm:$0xff]
    %v2882 = vld [vmem:[%s951 + $0x20] sm:$0xff]
    %v2883 = vld [vmem:[%s951 + $0x28] sm:$0xff]
    %v2884 = vld [vmem:[%s951 + $0x30] sm:$0xff]
    %v2885 = vld [vmem:[%s951 + $0x38] sm:$0xff]
    %v2886 = vld [vmem:[%s951 + $0x40] sm:$0xff]
    %v2887 = vld [vmem:[%s951 + $0x48] sm:$0xff]
    %v2888 = vld [vmem:[%s951 + $0x50] sm:$0x33]
    %v2889 = vrot.slane %v2769, 1
    %v2890 = vrot.slane %v2771, 2
    %v2891 = vor.u32 %v2889, %v2890
    %v2903 = vunpack.c.l.b16 %v2878
    %v2904 = vunpack.c.h.b16 %v2878
    %v2905 = vunpack.c.l.b16 %v2879
    %v2906 = vunpack.c.h.b16 %v2879
    %v2907 = vunpack.c.l.b16 %v2880
    %v2908 = vunpack.c.h.b16 %v2880
    %v2909 = vunpack.c.l.b16 %v2881
    %v2910 = vunpack.c.h.b16 %v2881
    %v2911 = vunpack.c.l.b16 %v2882
    %v2912 = vunpack.c.h.b16 %v2882
    %v2913 = vunpack.c.l.b16 %v2883
    %v2914 = vunpack.c.h.b16 %v2883
    %v2915 = vunpack.c.l.b16 %v2884
    %v2916 = vunpack.c.h.b16 %v2884
    %v2917 = vunpack.c.l.b16 %v2885
    %v2918 = vunpack.c.h.b16 %v2885
    %v2919 = vunpack.c.l.b16 %v2886
    %v2920 = vunpack.c.h.b16 %v2886
    %v2921 = vunpack.c.l.b16 %v2887
    %v2922 = vunpack.c.h.b16 %v2887
    %v2923 = vunpack.c.l.b16 %v2888
    %v2924 = vunpack.c.h.b16 %v2888
    %v2925 = vpack.c.b16 %v2905, %v2903
    %v2926 = vpack.c.b16 %v2906, %v2904
    %v2927 = vpack.c.b16 %v2909, %v2907
    %v2928 = vpack.c.b16 %v2910, %v2908
    %v2929 = vpack.c.b16 %v2913, %v2911
    %v2930 = vpack.c.b16 %v2914, %v2912
    %v2931 = vpack.c.b16 %v2917, %v2915
    %v2932 = vpack.c.b16 %v2918, %v2916
    %v2933 = vpack.c.b16 %v2921, %v2919
    %v2934 = vpack.c.b16 %v2922, %v2920
    %v2935 = vpack.c.b16 %v2923, %v2923
    %v2936 = vpack.c.b16 %v2924, %v2924
    %v2948 = vsel %vm900, %v2891, 0
    %v2951 = vsel %vm904, %v2935, 0
    %v2954 = vsel %vm904, %v2936, 0
    %2956 = vmatpush.bf16.msra.mxu0 0
    %2957 = vmatpush.bf16.msra.mxu0 0
    %2958 = vmatpush.bf16.msra.mxu0 %v2951
    %2959 = vmatpush.bf16.msra.mxu0 %v2933
    %2960 = vmatpush.bf16.msra.mxu0 %v2931
    %2961 = vmatpush.bf16.msra.mxu0 %v2929
    %2962 = vmatpush.bf16.msra.mxu0 %v2927
    %2963 = vmatpush.bf16.msra.mxu0 %v2925
    %2964 = vmatmul.bf16.gmra.mxu0 %v2948
    %v2965 = vpop.f32.mrf.mxu0
    %v2966 = vadd.f32 0.0, %v2965
    %v2967 = vpop.f32.mrf.mxu0
    %v2968 = vadd.f32 0.0, %v2967
    %2969 = vdwg.mxu0
    %2970 = vmatpush.bf16.msra.mxu0 0
    %2971 = vmatpush.bf16.msra.mxu0 0
    %2972 = vmatpush.bf16.msra.mxu0 %v2954
    %2973 = vmatpush.bf16.msra.mxu0 %v2934
    %2974 = vmatpush.bf16.msra.mxu0 %v2932
    %2975 = vmatpush.bf16.msra.mxu0 %v2930
    %2976 = vmatpush.bf16.msra.mxu0 %v2928
    %2977 = vmatpush.bf16.msra.mxu0 %v2926
    %2978 = vmatmul.bf16.gmra.mxu0 %v2948
    %v2979 = vpop.f32.mrf.mxu0
    %v2980 = vadd.f32 0.0, %v2979
    %v2981 = vpop.f32.mrf.mxu0
    %v2982 = vadd.f32 0.0, %v2981
    %2983 = vdwg.mxu0
    %v2984 = vld [vmem:[%s1058] sm:$0xff]
    %v2985 = vld [vmem:[%s1058 + $0x8] sm:$0xff]
    %v2986 = vld [vmem:[%s1058 + $0x10] sm:$0xff]
    %v2987 = vld [vmem:[%s1058 + $0x18] sm:$0xff]
    %v2988 = vld [vmem:[%s1058 + $0x20] sm:$0xff]
    %v2989 = vld [vmem:[%s1058 + $0x28] sm:$0xff]
    %v2990 = vld [vmem:[%s1058 + $0x30] sm:$0xff]
    %v2991 = vld [vmem:[%s1058 + $0x38] sm:$0xff]
    %v2992 = vld [vmem:[%s1058 + $0x40] sm:$0xff]
    %v2993 = vld [vmem:[%s1058 + $0x48] sm:$0xff]
    %v2994 = vld [vmem:[%s1058 + $0x50] sm:$0x33]
    %v2996 = vrot.slane %v2756, 2
    %v3008 = vunpack.c.l.b16 %v2984
    %v3009 = vunpack.c.h.b16 %v2984
    %v3010 = vunpack.c.l.b16 %v2985
    %v3011 = vunpack.c.h.b16 %v2985
    %v3012 = vunpack.c.l.b16 %v2986
    %v3013 = vunpack.c.h.b16 %v2986
    %v3014 = vunpack.c.l.b16 %v2987
    %v3015 = vunpack.c.h.b16 %v2987
    %v3016 = vunpack.c.l.b16 %v2988
    %v3017 = vunpack.c.h.b16 %v2988
    %v3018 = vunpack.c.l.b16 %v2989
    %v3019 = vunpack.c.h.b16 %v2989
    %v3020 = vunpack.c.l.b16 %v2990
    %v3021 = vunpack.c.h.b16 %v2990
    %v3022 = vunpack.c.l.b16 %v2991
    %v3023 = vunpack.c.h.b16 %v2991
    %v3024 = vunpack.c.l.b16 %v2992
    %v3025 = vunpack.c.h.b16 %v2992
    %v3026 = vunpack.c.l.b16 %v2993
    %v3027 = vunpack.c.h.b16 %v2993
    %v3028 = vunpack.c.l.b16 %v2994
    %v3029 = vunpack.c.h.b16 %v2994
    %v3030 = vpack.c.b16 %v3010, %v3008
    %v3031 = vpack.c.b16 %v3011, %v3009
    %v3032 = vpack.c.b16 %v3014, %v3012
    %v3033 = vpack.c.b16 %v3015, %v3013
    %v3034 = vpack.c.b16 %v3018, %v3016
    %v3035 = vpack.c.b16 %v3019, %v3017
    %v3036 = vpack.c.b16 %v3022, %v3020
    %v3037 = vpack.c.b16 %v3023, %v3021
    %v3038 = vpack.c.b16 %v3026, %v3024
    %v3039 = vpack.c.b16 %v3027, %v3025
    %v3040 = vpack.c.b16 %v3028, %v3028
    %v3041 = vpack.c.b16 %v3029, %v3029
    %v3053 = vsel %vm900, %v2996, 0
    %v3056 = vsel %vm904, %v3040, 0
    %v3059 = vsel %vm904, %v3041, 0
    %3061 = vmatpush.bf16.msra.mxu0 0
    %3062 = vmatpush.bf16.msra.mxu0 0
    %3063 = vmatpush.bf16.msra.mxu0 %v3056
    %3064 = vmatpush.bf16.msra.mxu0 %v3038
    %3065 = vmatpush.bf16.msra.mxu0 %v3036
    %3066 = vmatpush.bf16.msra.mxu0 %v3034
    %3067 = vmatpush.bf16.msra.mxu0 %v3032
    %3068 = vmatpush.bf16.msra.mxu0 %v3030
    %3069 = vmatmul.bf16.gmra.mxu0 %v3053
    %v3070 = vpop.f32.mrf.mxu0
    %v3071 = vadd.f32 0.0, %v3070
    %v3072 = vpop.f32.mrf.mxu0
    %v3073 = vadd.f32 0.0, %v3072
    %3074 = vdwg.mxu0
    %3075 = vmatpush.bf16.msra.mxu0 0
    %3076 = vmatpush.bf16.msra.mxu0 0
    %3077 = vmatpush.bf16.msra.mxu0 %v3059
    %3078 = vmatpush.bf16.msra.mxu0 %v3039
    %3079 = vmatpush.bf16.msra.mxu0 %v3037
    %3080 = vmatpush.bf16.msra.mxu0 %v3035
    %3081 = vmatpush.bf16.msra.mxu0 %v3033
    %3082 = vmatpush.bf16.msra.mxu0 %v3031
    %3083 = vmatmul.bf16.gmra.mxu0 %v3053
    %v3084 = vpop.f32.mrf.mxu0
    %v3085 = vadd.f32 0.0, %v3084
    %v3086 = vpop.f32.mrf.mxu0
    %v3087 = vadd.f32 0.0, %v3086
    %3088 = vdwg.mxu0
    %v3100 = vunpack.c.l.b16 %v2745
    %v3101 = vunpack.c.h.b16 %v2745
    %v3102 = vunpack.c.l.b16 %v2746
    %v3103 = vunpack.c.h.b16 %v2746
    %v3104 = vunpack.c.l.b16 %v2747
    %v3105 = vunpack.c.h.b16 %v2747
    %v3106 = vunpack.c.l.b16 %v2748
    %v3107 = vunpack.c.h.b16 %v2748
    %v3108 = vunpack.c.l.b16 %v2749
    %v3109 = vunpack.c.h.b16 %v2749
    %v3110 = vunpack.c.l.b16 %v2750
    %v3111 = vunpack.c.h.b16 %v2750
    %v3112 = vunpack.c.l.b16 %v2751
    %v3113 = vunpack.c.h.b16 %v2751
    %v3114 = vunpack.c.l.b16 %v2752
    %v3115 = vunpack.c.h.b16 %v2752
    %v3116 = vunpack.c.l.b16 %v2753
    %v3117 = vunpack.c.h.b16 %v2753
    %v3118 = vunpack.c.l.b16 %v2754
    %v3119 = vunpack.c.h.b16 %v2754
    %v3120 = vunpack.c.l.b16 %v2755
    %v3121 = vunpack.c.h.b16 %v2755
    %v3122 = vpack.c.b16 %v3102, %v3100
    %v3123 = vpack.c.b16 %v3103, %v3101
    %v3124 = vpack.c.b16 %v3106, %v3104
    %v3125 = vpack.c.b16 %v3107, %v3105
    %v3126 = vpack.c.b16 %v3110, %v3108
    %v3127 = vpack.c.b16 %v3111, %v3109
    %v3128 = vpack.c.b16 %v3114, %v3112
    %v3129 = vpack.c.b16 %v3115, %v3113
    %v3130 = vpack.c.b16 %v3118, %v3116
    %v3131 = vpack.c.b16 %v3119, %v3117
    %v3132 = vpack.c.b16 %v3120, %v3120
    %v3133 = vpack.c.b16 %v3121, %v3121
    %v3144 = vsel %vm900, %v2756, 0
    %v3147 = vsel %vm904, %v3132, 0
    %v3150 = vsel %vm904, %v3133, 0
    %3152 = vmatpush.bf16.msra.mxu0 0
    %3153 = vmatpush.bf16.msra.mxu0 0
    %3154 = vmatpush.bf16.msra.mxu0 %v3147
    %3155 = vmatpush.bf16.msra.mxu0 %v3130
    %3156 = vmatpush.bf16.msra.mxu0 %v3128
    %3157 = vmatpush.bf16.msra.mxu0 %v3126
    %3158 = vmatpush.bf16.msra.mxu0 %v3124
    %3159 = vmatpush.bf16.msra.mxu0 %v3122
    %3160 = vmatmul.bf16.gmra.mxu0 %v3144
    %v3161 = vpop.f32.mrf.mxu0
    %v3162 = vadd.f32 %v2849, %v3161
    %v3163 = vpop.f32.mrf.mxu0
    %v3164 = vadd.f32 %v2851, %v3163
    %3165 = vdwg.mxu0
    %3166 = vmatpush.bf16.msra.mxu0 0
    %3167 = vmatpush.bf16.msra.mxu0 0
    %3168 = vmatpush.bf16.msra.mxu0 %v3150
    %3169 = vmatpush.bf16.msra.mxu0 %v3131
    %3170 = vmatpush.bf16.msra.mxu0 %v3129
    %3171 = vmatpush.bf16.msra.mxu0 %v3127
    %3172 = vmatpush.bf16.msra.mxu0 %v3125
    %3173 = vmatpush.bf16.msra.mxu0 %v3123
    %3174 = vmatmul.bf16.gmra.mxu0 %v3144
    %v3175 = vpop.f32.mrf.mxu0
    %v3176 = vadd.f32 %v2863, %v3175
    %v3177 = vpop.f32.mrf.mxu0
    %v3178 = vadd.f32 %v2865, %v3177
    %3179 = vdwg.mxu0
    %v3180 = vrot.slane %v2756, 1
    %v3192 = vunpack.c.l.b16 %v2867
    %v3193 = vunpack.c.h.b16 %v2867
    %v3194 = vunpack.c.l.b16 %v2868
    %v3195 = vunpack.c.h.b16 %v2868
    %v3196 = vunpack.c.l.b16 %v2869
    %v3197 = vunpack.c.h.b16 %v2869
    %v3198 = vunpack.c.l.b16 %v2870
    %v3199 = vunpack.c.h.b16 %v2870
    %v3200 = vunpack.c.l.b16 %v2871
    %v3201 = vunpack.c.h.b16 %v2871
    %v3202 = vunpack.c.l.b16 %v2872
    %v3203 = vunpack.c.h.b16 %v2872
    %v3204 = vunpack.c.l.b16 %v2873
    %v3205 = vunpack.c.h.b16 %v2873
    %v3206 = vunpack.c.l.b16 %v2874
    %v3207 = vunpack.c.h.b16 %v2874
    %v3208 = vunpack.c.l.b16 %v2875
    %v3209 = vunpack.c.h.b16 %v2875
    %v3210 = vunpack.c.l.b16 %v2876
    %v3211 = vunpack.c.h.b16 %v2876
    %v3212 = vunpack.c.l.b16 %v2877
    %v3213 = vunpack.c.h.b16 %v2877
    %v3214 = vpack.c.b16 %v3194, %v3192
    %v3215 = vpack.c.b16 %v3195, %v3193
    %v3216 = vpack.c.b16 %v3198, %v3196
    %v3217 = vpack.c.b16 %v3199, %v3197
    %v3218 = vpack.c.b16 %v3202, %v3200
    %v3219 = vpack.c.b16 %v3203, %v3201
    %v3220 = vpack.c.b16 %v3206, %v3204
    %v3221 = vpack.c.b16 %v3207, %v3205
    %v3222 = vpack.c.b16 %v3210, %v3208
    %v3223 = vpack.c.b16 %v3211, %v3209
    %v3224 = vpack.c.b16 %v3212, %v3212
    %v3225 = vpack.c.b16 %v3213, %v3213
    %v3237 = vsel %vm900, %v3180, 0
    %v3240 = vsel %vm904, %v3224, 0
    %v3243 = vsel %vm904, %v3225, 0
    %3245 = vmatpush.bf16.msra.mxu0 0
    %3246 = vmatpush.bf16.msra.mxu0 0
    %3247 = vmatpush.bf16.msra.mxu0 %v3240
    %3248 = vmatpush.bf16.msra.mxu0 %v3222
    %3249 = vmatpush.bf16.msra.mxu0 %v3220
    %3250 = vmatpush.bf16.msra.mxu0 %v3218
    %3251 = vmatpush.bf16.msra.mxu0 %v3216
    %3252 = vmatpush.bf16.msra.mxu0 %v3214
    %3253 = vmatmul.bf16.gmra.mxu0 %v3237
    %v3254 = vpop.f32.mrf.mxu0
    %v3255 = vadd.f32 %v2966, %v3254
    %v3256 = vpop.f32.mrf.mxu0
    %v3257 = vadd.f32 %v2968, %v3256
    %3258 = vdwg.mxu0
    %3259 = vmatpush.bf16.msra.mxu0 0
    %3260 = vmatpush.bf16.msra.mxu0 0
    %3261 = vmatpush.bf16.msra.mxu0 %v3243
    %3262 = vmatpush.bf16.msra.mxu0 %v3223
    %3263 = vmatpush.bf16.msra.mxu0 %v3221
    %3264 = vmatpush.bf16.msra.mxu0 %v3219
    %3265 = vmatpush.bf16.msra.mxu0 %v3217
    %3266 = vmatpush.bf16.msra.mxu0 %v3215
    %3267 = vmatmul.bf16.gmra.mxu0 %v3237
    %v3268 = vpop.f32.mrf.mxu0
    %v3269 = vadd.f32 %v2980, %v3268
    %v3270 = vpop.f32.mrf.mxu0
    %v3271 = vadd.f32 %v2982, %v3270
    %3272 = vdwg.mxu0
    %v3273 = vadd.f32 %v3162, %v3255
    %v3274 = vadd.f32 %v3176, %v3269
    %v3275 = vadd.f32 %v3164, %v3257
    %v3276 = vadd.f32 %v3178, %v3271
    %v3277 = vadd.f32 %v3273, %v3071
    %v3278 = vadd.f32 %v3274, %v3085
    %v3279 = vadd.f32 %v3275, %v3073
    %v3280 = vadd.f32 %v3276, %v3087
    %v3281 = vadd.f32 %v3277, %v1357
    %v3282 = vadd.f32 %v3278, %v1358
    %v3283 = vadd.f32 %v3279, %v1357
    %v3284 = vadd.f32 %v3280, %v1358
    %v3285 = vmax.f32 %v3281, 0.0
    %v3286 = vmax.f32 %v3282, 0.0
    %v3287 = vmax.f32 %v3283, 0.0
    %v3288 = vmax.f32 %v3284, 0.0
    %v3289 = vld [vmem:[%s6] sm:$0x7]
    %v3290 = vpack.c.bf16 %v3287, %v3285
    %v3291 = vpack.c.bf16 %v3288, %v3286
    %v3293 = vsel %vm1372, %v3289, 0
    %v3296 = vsel %vm1376, %v3290, 0
    %v3299 = vsel %vm1376, %v3291, 0
    %3301 = vmatpush.bf16.msra.mxu0 0
    %3302 = vmatpush.bf16.msra.mxu0 0
    %3303 = vmatpush.bf16.msra.mxu0 0
    %3304 = vmatpush.bf16.msra.mxu0 0
    %3305 = vmatpush.bf16.msra.mxu0 0
    %3306 = vmatpush.bf16.msra.mxu0 0
    %3307 = vmatpush.bf16.msra.mxu0 0
    %3308 = vmatpush.bf16.msra.mxu0 %v3296
    %3309 = vmatmul.bf16.gmra.mxu0 %v3293
    %v3310 = vpop.f32.mrf.mxu0
    %v3311 = vadd.f32 0.0, %v3310
    %v3312 = vpop.f32.mrf.mxu0
    %3313 = vdwg.mxu0
    %3314 = vmatpush.bf16.msra.mxu0 0
    %3315 = vmatpush.bf16.msra.mxu0 0
    %3316 = vmatpush.bf16.msra.mxu0 0
    %3317 = vmatpush.bf16.msra.mxu0 0
    %3318 = vmatpush.bf16.msra.mxu0 0
    %3319 = vmatpush.bf16.msra.mxu0 0
    %3320 = vmatpush.bf16.msra.mxu0 0
    %3321 = vmatpush.bf16.msra.mxu0 %v3299
    %3322 = vmatmul.bf16.gmra.mxu0 %v3293
    %v3323 = vpop.f32.mrf.mxu0
    %v3324 = vadd.f32 0.0, %v3323
    %v3325 = vpop.f32.mrf.mxu0
    %3326 = vdwg.mxu0
    %v3327 = vld [vmem:[%s1409] sm:$0x7]
    %v3329 = vsel %vm1372, %v3327, 0
    %3331 = vmatpush.bf16.msra.mxu0 0
    %3332 = vmatpush.bf16.msra.mxu0 0
    %3333 = vmatpush.bf16.msra.mxu0 0
    %3334 = vmatpush.bf16.msra.mxu0 0
    %3335 = vmatpush.bf16.msra.mxu0 0
    %3336 = vmatpush.bf16.msra.mxu0 0
    %3337 = vmatpush.bf16.msra.mxu0 0
    %3338 = vmatpush.bf16.msra.mxu0 %v3296
    %3339 = vmatmul.bf16.gmra.mxu0 %v3329
    %v3340 = vpop.f32.mrf.mxu0
    %v3341 = vadd.f32 0.0, %v3340
    %v3342 = vpop.f32.mrf.mxu0
    %3343 = vdwg.mxu0
    %3344 = vmatpush.bf16.msra.mxu0 0
    %3345 = vmatpush.bf16.msra.mxu0 0
    %3346 = vmatpush.bf16.msra.mxu0 0
    %3347 = vmatpush.bf16.msra.mxu0 0
    %3348 = vmatpush.bf16.msra.mxu0 0
    %3349 = vmatpush.bf16.msra.mxu0 0
    %3350 = vmatpush.bf16.msra.mxu0 0
    %3351 = vmatpush.bf16.msra.mxu0 %v3299
    %3352 = vmatmul.bf16.gmra.mxu0 %v3329
    %v3353 = vpop.f32.mrf.mxu0
    %v3354 = vadd.f32 0.0, %v3353
    %v3355 = vpop.f32.mrf.mxu0
    %3356 = vdwg.mxu0
    %v3357 = vmax.f32 %v3311, %v3341
    %v3358 = vmax.f32 %v3324, %v3354
    %v3359 = vld [vmem:[%s7] sm:$0xf]
    %v3360 = vld [vmem:[%s7 + $0x4] sm:$0xf]
    %v3361 = vld [vmem:[%s7 + $0x8] sm:$0xf]
    %v3362 = vld [vmem:[%s7 + $0xc] sm:$0xf]
    %v3363 = vld [vmem:[%s7 + $0x10] sm:$0xf]
    %v3364 = vld [vmem:[%s7 + $0x14] sm:$0xf]
    %v3365 = vld [vmem:[%s7 + $0x18] sm:$0xf]
    %v3366 = vld [vmem:[%s7 + $0x1c] sm:$0xf]
    %v3367 = vld [vmem:[%s7 + $0x20] sm:$0xf]
    %v3368 = vld [vmem:[%s7 + $0x24] sm:$0xf]
    %v3369 = vld [vmem:[%s7 + $0x28] sm:$0xf]
    %v3370 = vld [vmem:[%s7 + $0x2c] sm:$0xf]
    %v3371 = vld [vmem:[%s7 + $0x30] sm:$0xf]
    %v3372 = vld [vmem:[%s7 + $0x34] sm:$0xf]
    %v3373 = vld [vmem:[%s7 + $0x38] sm:$0xf]
    %v3374 = vld [vmem:[%s7 + $0x3c] sm:$0xf]
    %v3375 = vld [vmem:[%s7 + $0x40] sm:$0xf]
    %v3376 = vld [vmem:[%s7 + $0x44] sm:$0xf]
    %v3377 = vld [vmem:[%s7 + $0x48] sm:$0xf]
    %v3378 = vld [vmem:[%s7 + $0x4c] sm:$0xf]
    %v3379 = vpack.c.bf16 %v3357, %v3357
    %v3380 = vpack.c.bf16 %v3358, %v3358
    %v3401 = vunpack.c.l.b16 %v3359
    %v3402 = vunpack.c.l.b16 %v3360
    %v3403 = vunpack.c.l.b16 %v3361
    %v3404 = vunpack.c.l.b16 %v3362
    %v3405 = vunpack.c.l.b16 %v3363
    %v3406 = vunpack.c.l.b16 %v3364
    %v3407 = vunpack.c.l.b16 %v3365
    %v3408 = vunpack.c.l.b16 %v3366
    %v3409 = vunpack.c.l.b16 %v3367
    %v3410 = vunpack.c.l.b16 %v3368
    %v3411 = vunpack.c.l.b16 %v3369
    %v3412 = vunpack.c.l.b16 %v3370
    %v3413 = vunpack.c.l.b16 %v3371
    %v3414 = vunpack.c.l.b16 %v3372
    %v3415 = vunpack.c.l.b16 %v3373
    %v3416 = vunpack.c.l.b16 %v3374
    %v3417 = vunpack.c.l.b16 %v3375
    %v3418 = vunpack.c.l.b16 %v3376
    %v3419 = vunpack.c.l.b16 %v3377
    %v3420 = vunpack.c.l.b16 %v3378
    %v3421 = vpack.c.b16 %v3402, %v3401
    %v3422 = vpack.c.b16 %v3404, %v3403
    %v3423 = vpack.c.b16 %v3406, %v3405
    %v3424 = vpack.c.b16 %v3408, %v3407
    %v3425 = vpack.c.b16 %v3410, %v3409
    %v3426 = vpack.c.b16 %v3412, %v3411
    %v3427 = vpack.c.b16 %v3414, %v3413
    %v3428 = vpack.c.b16 %v3416, %v3415
    %v3429 = vpack.c.b16 %v3418, %v3417
    %v3430 = vpack.c.b16 %v3420, %v3419
    %v3442 = vsel %vm112, %v3380, 0
    %3444 = vmatpush.bf16.msra.mxu0 %v3428
    %3445 = vmatpush.bf16.msra.mxu0 %v3427
    %3446 = vmatpush.bf16.msra.mxu0 %v3426
    %3447 = vmatpush.bf16.msra.mxu0 %v3425
    %3448 = vmatpush.bf16.msra.mxu0 %v3424
    %3449 = vmatpush.bf16.msra.mxu0 %v3423
    %3450 = vmatpush.bf16.msra.mxu0 %v3422
    %3451 = vmatpush.bf16.msra.mxu0 %v3421
    %3452 = vmatmul.bf16.gmra.mxu0 %v3379
    %v3453 = vpop.f32.mrf.mxu0
    %v3454 = vadd.f32 0.0, %v3453
    %v3455 = vpop.f32.mrf.mxu0
    %3456 = vdwg.mxu0
    %3457 = vmatpush.bf16.msra.mxu0 0
    %3458 = vmatpush.bf16.msra.mxu0 0
    %3459 = vmatpush.bf16.msra.mxu0 0
    %3460 = vmatpush.bf16.msra.mxu0 0
    %3461 = vmatpush.bf16.msra.mxu0 0
    %3462 = vmatpush.bf16.msra.mxu0 0
    %3463 = vmatpush.bf16.msra.mxu0 %v3430
    %3464 = vmatpush.bf16.msra.mxu0 %v3429
    %3465 = vmatmul.bf16.gmra.mxu0 %v3442
    %v3466 = vpop.f32.mrf.mxu0
    %v3467 = vadd.f32 %v3454, %v3466
    %v3468 = vpop.f32.mrf.mxu0
    %3469 = vdwg.mxu0
    %v3470 = vld [vmem:[%s1553] sm:$0xf]
    %v3471 = vld [vmem:[%s1553 + $0x4] sm:$0xf]
    %v3472 = vld [vmem:[%s1553 + $0x8] sm:$0xf]
    %v3473 = vld [vmem:[%s1553 + $0xc] sm:$0xf]
    %v3474 = vld [vmem:[%s1553 + $0x10] sm:$0xf]
    %v3475 = vld [vmem:[%s1553 + $0x14] sm:$0xf]
    %v3476 = vld [vmem:[%s1553 + $0x18] sm:$0xf]
    %v3477 = vld [vmem:[%s1553 + $0x1c] sm:$0xf]
    %v3478 = vld [vmem:[%s1553 + $0x20] sm:$0xf]
    %v3479 = vld [vmem:[%s1553 + $0x24] sm:$0xf]
    %v3480 = vld [vmem:[%s1553 + $0x28] sm:$0xf]
    %v3481 = vld [vmem:[%s1553 + $0x2c] sm:$0xf]
    %v3482 = vld [vmem:[%s1553 + $0x30] sm:$0xf]
    %v3483 = vld [vmem:[%s1553 + $0x34] sm:$0xf]
    %v3484 = vld [vmem:[%s1553 + $0x38] sm:$0xf]
    %v3485 = vld [vmem:[%s1553 + $0x3c] sm:$0xf]
    %v3486 = vld [vmem:[%s1553 + $0x40] sm:$0xf]
    %v3487 = vld [vmem:[%s1553 + $0x44] sm:$0xf]
    %v3488 = vld [vmem:[%s1553 + $0x48] sm:$0xf]
    %v3489 = vld [vmem:[%s1553 + $0x4c] sm:$0xf]
    %v3510 = vunpack.c.l.b16 %v3470
    %v3511 = vunpack.c.l.b16 %v3471
    %v3512 = vunpack.c.l.b16 %v3472
    %v3513 = vunpack.c.l.b16 %v3473
    %v3514 = vunpack.c.l.b16 %v3474
    %v3515 = vunpack.c.l.b16 %v3475
    %v3516 = vunpack.c.l.b16 %v3476
    %v3517 = vunpack.c.l.b16 %v3477
    %v3518 = vunpack.c.l.b16 %v3478
    %v3519 = vunpack.c.l.b16 %v3479
    %v3520 = vunpack.c.l.b16 %v3480
    %v3521 = vunpack.c.l.b16 %v3481
    %v3522 = vunpack.c.l.b16 %v3482
    %v3523 = vunpack.c.l.b16 %v3483
    %v3524 = vunpack.c.l.b16 %v3484
    %v3525 = vunpack.c.l.b16 %v3485
    %v3526 = vunpack.c.l.b16 %v3486
    %v3527 = vunpack.c.l.b16 %v3487
    %v3528 = vunpack.c.l.b16 %v3488
    %v3529 = vunpack.c.l.b16 %v3489
    %v3530 = vpack.c.b16 %v3511, %v3510
    %v3531 = vpack.c.b16 %v3513, %v3512
    %v3532 = vpack.c.b16 %v3515, %v3514
    %v3533 = vpack.c.b16 %v3517, %v3516
    %v3534 = vpack.c.b16 %v3519, %v3518
    %v3535 = vpack.c.b16 %v3521, %v3520
    %v3536 = vpack.c.b16 %v3523, %v3522
    %v3537 = vpack.c.b16 %v3525, %v3524
    %v3538 = vpack.c.b16 %v3527, %v3526
    %v3539 = vpack.c.b16 %v3529, %v3528
    %3550 = vmatpush.bf16.msra.mxu0 %v3537
    %3551 = vmatpush.bf16.msra.mxu0 %v3536
    %3552 = vmatpush.bf16.msra.mxu0 %v3535
    %3553 = vmatpush.bf16.msra.mxu0 %v3534
    %3554 = vmatpush.bf16.msra.mxu0 %v3533
    %3555 = vmatpush.bf16.msra.mxu0 %v3532
    %3556 = vmatpush.bf16.msra.mxu0 %v3531
    %3557 = vmatpush.bf16.msra.mxu0 %v3530
    %3558 = vmatmul.bf16.gmra.mxu0 %v3379
    %v3559 = vpop.f32.mrf.mxu0
    %v3560 = vadd.f32 0.0, %v3559
    %v3561 = vpop.f32.mrf.mxu0
    %3562 = vdwg.mxu0
    %3563 = vmatpush.bf16.msra.mxu0 0
    %3564 = vmatpush.bf16.msra.mxu0 0
    %3565 = vmatpush.bf16.msra.mxu0 0
    %3566 = vmatpush.bf16.msra.mxu0 0
    %3567 = vmatpush.bf16.msra.mxu0 0
    %3568 = vmatpush.bf16.msra.mxu0 0
    %3569 = vmatpush.bf16.msra.mxu0 %v3539
    %3570 = vmatpush.bf16.msra.mxu0 %v3538
    %3571 = vmatmul.bf16.gmra.mxu0 %v3442
    %v3572 = vpop.f32.mrf.mxu0
    %v3573 = vadd.f32 %v3560, %v3572
    %v3574 = vpop.f32.mrf.mxu0
    %3575 = vdwg.mxu0
    %v3576 = vmax.f32 %v3467, %v3573
    %v3577 = vld [vmem:[%s3] sm:$0xf]
    %v3578 = vld [vmem:[%s3 + $0x4] sm:$0xf]
    %v3579 = vld [vmem:[%s3 + $0x8] sm:$0xf]
    %v3580 = vld [vmem:[%s3 + $0xc] sm:$0xf]
    %v3581 = vld [vmem:[%s3 + $0x10] sm:$0xf]
    %v3582 = vld [vmem:[%s3 + $0x14] sm:$0xf]
    %v3583 = vld [vmem:[%s3 + $0x18] sm:$0xf]
    %v3584 = vld [vmem:[%s3 + $0x1c] sm:$0xf]
    %v3585 = vld [vmem:[%s3 + $0x20] sm:$0xf]
    %v3586 = vld [vmem:[%s3 + $0x24] sm:$0xf]
    %v3587 = vpack.c.bf16 %v3576, %v3576
    %v3588 = vld [vmem:[%s1672] sm:$0xf]
    %v3589 = vld [vmem:[%s1672 + $0x4] sm:$0xf]
    %v3590 = vld [vmem:[%s1672 + $0x8] sm:$0xf]
    %v3591 = vld [vmem:[%s1672 + $0xc] sm:$0xf]
    %v3592 = vld [vmem:[%s1672 + $0x10] sm:$0xf]
    %v3593 = vld [vmem:[%s1672 + $0x14] sm:$0xf]
    %v3594 = vld [vmem:[%s1672 + $0x18] sm:$0xf]
    %v3595 = vld [vmem:[%s1672 + $0x1c] sm:$0xf]
    %v3596 = vld [vmem:[%s1672 + $0x20] sm:$0xf]
    %v3597 = vld [vmem:[%s1672 + $0x24] sm:$0xf]
    %v3599 = vshrl.u32 %v3587, 16
    %v3611 = vunpack.c.l.b16 %v3588
    %v3612 = vunpack.c.l.b16 %v3589
    %v3613 = vunpack.c.l.b16 %v3590
    %v3614 = vunpack.c.l.b16 %v3591
    %v3615 = vunpack.c.l.b16 %v3592
    %v3616 = vunpack.c.l.b16 %v3593
    %v3617 = vunpack.c.l.b16 %v3594
    %v3618 = vunpack.c.l.b16 %v3595
    %v3619 = vunpack.c.l.b16 %v3596
    %v3620 = vunpack.c.l.b16 %v3597
    %v3621 = vpack.c.b16 %v3612, %v3611
    %v3622 = vpack.c.b16 %v3614, %v3613
    %v3623 = vpack.c.b16 %v3616, %v3615
    %v3624 = vpack.c.b16 %v3618, %v3617
    %v3625 = vpack.c.b16 %v3620, %v3619
    %v3632 = vsel %vm1716, %v3599, 0
    %3634 = vmatpush.bf16.msra.mxu0 0
    %3635 = vmatpush.bf16.msra.mxu0 0
    %3636 = vmatpush.bf16.msra.mxu0 0
    %3637 = vmatpush.bf16.msra.mxu0 %v3625
    %3638 = vmatpush.bf16.msra.mxu0 %v3624
    %3639 = vmatpush.bf16.msra.mxu0 %v3623
    %3640 = vmatpush.bf16.msra.mxu0 %v3622
    %3641 = vmatpush.bf16.msra.mxu0 %v3621
    %3642 = vmatmul.bf16.gmra.mxu0 %v3632
    %v3643 = vpop.f32.mrf.mxu0
    %v3644 = vadd.f32 0.0, %v3643
    %v3645 = vpop.f32.mrf.mxu0
    %3646 = vdwg.mxu0
    %v3647 = vld [vmem:[%s1733] sm:$0xf]
    %v3648 = vld [vmem:[%s1733 + $0x4] sm:$0xf]
    %v3649 = vld [vmem:[%s1733 + $0x8] sm:$0xf]
    %v3650 = vld [vmem:[%s1733 + $0xc] sm:$0xf]
    %v3651 = vld [vmem:[%s1733 + $0x10] sm:$0xf]
    %v3652 = vld [vmem:[%s1733 + $0x14] sm:$0xf]
    %v3653 = vld [vmem:[%s1733 + $0x18] sm:$0xf]
    %v3654 = vld [vmem:[%s1733 + $0x1c] sm:$0xf]
    %v3655 = vld [vmem:[%s1733 + $0x20] sm:$0xf]
    %v3656 = vld [vmem:[%s1733 + $0x24] sm:$0xf]
    %v3657 = vld [vmem:[%s1744] sm:$0xf]
    %v3658 = vld [vmem:[%s1744 + $0x4] sm:$0xf]
    %v3659 = vld [vmem:[%s1744 + $0x8] sm:$0xf]
    %v3660 = vld [vmem:[%s1744 + $0xc] sm:$0xf]
    %v3661 = vld [vmem:[%s1744 + $0x10] sm:$0xf]
    %v3662 = vld [vmem:[%s1744 + $0x14] sm:$0xf]
    %v3663 = vld [vmem:[%s1744 + $0x18] sm:$0xf]
    %v3664 = vld [vmem:[%s1744 + $0x1c] sm:$0xf]
    %v3665 = vld [vmem:[%s1744 + $0x20] sm:$0xf]
    %v3666 = vld [vmem:[%s1744 + $0x24] sm:$0xf]
    %v3667 = vrot.slane %v3599, 1
    %v3678 = vunpack.c.l.b16 %v3657
    %v3679 = vunpack.c.l.b16 %v3658
    %v3680 = vunpack.c.l.b16 %v3659
    %v3681 = vunpack.c.l.b16 %v3660
    %v3682 = vunpack.c.l.b16 %v3661
    %v3683 = vunpack.c.l.b16 %v3662
    %v3684 = vunpack.c.l.b16 %v3663
    %v3685 = vunpack.c.l.b16 %v3664
    %v3686 = vunpack.c.l.b16 %v3665
    %v3687 = vunpack.c.l.b16 %v3666
    %v3688 = vpack.c.b16 %v3679, %v3678
    %v3689 = vpack.c.b16 %v3681, %v3680
    %v3690 = vpack.c.b16 %v3683, %v3682
    %v3691 = vpack.c.b16 %v3685, %v3684
    %v3692 = vpack.c.b16 %v3687, %v3686
    %v3699 = vsel %vm1716, %v3667, 0
    %3701 = vmatpush.bf16.msra.mxu0 0
    %3702 = vmatpush.bf16.msra.mxu0 0
    %3703 = vmatpush.bf16.msra.mxu0 0
    %3704 = vmatpush.bf16.msra.mxu0 %v3692
    %3705 = vmatpush.bf16.msra.mxu0 %v3691
    %3706 = vmatpush.bf16.msra.mxu0 %v3690
    %3707 = vmatpush.bf16.msra.mxu0 %v3689
    %3708 = vmatpush.bf16.msra.mxu0 %v3688
    %3709 = vmatmul.bf16.gmra.mxu0 %v3699
    %v3710 = vpop.f32.mrf.mxu0
    %v3711 = vadd.f32 0.0, %v3710
    %v3712 = vpop.f32.mrf.mxu0
    %3713 = vdwg.mxu0
    %v3714 = vld [vmem:[%s1802] sm:$0xf]
    %v3715 = vld [vmem:[%s1802 + $0x4] sm:$0xf]
    %v3716 = vld [vmem:[%s1802 + $0x8] sm:$0xf]
    %v3717 = vld [vmem:[%s1802 + $0xc] sm:$0xf]
    %v3718 = vld [vmem:[%s1802 + $0x10] sm:$0xf]
    %v3719 = vld [vmem:[%s1802 + $0x14] sm:$0xf]
    %v3720 = vld [vmem:[%s1802 + $0x18] sm:$0xf]
    %v3721 = vld [vmem:[%s1802 + $0x1c] sm:$0xf]
    %v3722 = vld [vmem:[%s1802 + $0x20] sm:$0xf]
    %v3723 = vld [vmem:[%s1802 + $0x24] sm:$0xf]
    %v3725 = vrot.slane %v3587, 2
    %v3736 = vunpack.c.l.b16 %v3714
    %v3737 = vunpack.c.l.b16 %v3715
    %v3738 = vunpack.c.l.b16 %v3716
    %v3739 = vunpack.c.l.b16 %v3717
    %v3740 = vunpack.c.l.b16 %v3718
    %v3741 = vunpack.c.l.b16 %v3719
    %v3742 = vunpack.c.l.b16 %v3720
    %v3743 = vunpack.c.l.b16 %v3721
    %v3744 = vunpack.c.l.b16 %v3722
    %v3745 = vunpack.c.l.b16 %v3723
    %v3746 = vpack.c.b16 %v3737, %v3736
    %v3747 = vpack.c.b16 %v3739, %v3738
    %v3748 = vpack.c.b16 %v3741, %v3740
    %v3749 = vpack.c.b16 %v3743, %v3742
    %v3750 = vpack.c.b16 %v3745, %v3744
    %v3757 = vsel %vm1716, %v3725, 0
    %3759 = vmatpush.bf16.msra.mxu0 0
    %3760 = vmatpush.bf16.msra.mxu0 0
    %3761 = vmatpush.bf16.msra.mxu0 0
    %3762 = vmatpush.bf16.msra.mxu0 %v3750
    %3763 = vmatpush.bf16.msra.mxu0 %v3749
    %3764 = vmatpush.bf16.msra.mxu0 %v3748
    %3765 = vmatpush.bf16.msra.mxu0 %v3747
    %3766 = vmatpush.bf16.msra.mxu0 %v3746
    %3767 = vmatmul.bf16.gmra.mxu0 %v3757
    %v3768 = vpop.f32.mrf.mxu0
    %v3769 = vadd.f32 0.0, %v3768
    %v3770 = vpop.f32.mrf.mxu0
    %3771 = vdwg.mxu0
    %v3782 = vunpack.c.l.b16 %v3577
    %v3783 = vunpack.c.l.b16 %v3578
    %v3784 = vunpack.c.l.b16 %v3579
    %v3785 = vunpack.c.l.b16 %v3580
    %v3786 = vunpack.c.l.b16 %v3581
    %v3787 = vunpack.c.l.b16 %v3582
    %v3788 = vunpack.c.l.b16 %v3583
    %v3789 = vunpack.c.l.b16 %v3584
    %v3790 = vunpack.c.l.b16 %v3585
    %v3791 = vunpack.c.l.b16 %v3586
    %v3792 = vpack.c.b16 %v3783, %v3782
    %v3793 = vpack.c.b16 %v3785, %v3784
    %v3794 = vpack.c.b16 %v3787, %v3786
    %v3795 = vpack.c.b16 %v3789, %v3788
    %v3796 = vpack.c.b16 %v3791, %v3790
    %v3802 = vsel %vm1716, %v3587, 0
    %3804 = vmatpush.bf16.msra.mxu0 0
    %3805 = vmatpush.bf16.msra.mxu0 0
    %3806 = vmatpush.bf16.msra.mxu0 0
    %3807 = vmatpush.bf16.msra.mxu0 %v3796
    %3808 = vmatpush.bf16.msra.mxu0 %v3795
    %3809 = vmatpush.bf16.msra.mxu0 %v3794
    %3810 = vmatpush.bf16.msra.mxu0 %v3793
    %3811 = vmatpush.bf16.msra.mxu0 %v3792
    %3812 = vmatmul.bf16.gmra.mxu0 %v3802
    %v3813 = vpop.f32.mrf.mxu0
    %v3814 = vadd.f32 %v3644, %v3813
    %v3815 = vpop.f32.mrf.mxu0
    %3816 = vdwg.mxu0
    %v3817 = vrot.slane %v3587, 1
    %v3828 = vunpack.c.l.b16 %v3647
    %v3829 = vunpack.c.l.b16 %v3648
    %v3830 = vunpack.c.l.b16 %v3649
    %v3831 = vunpack.c.l.b16 %v3650
    %v3832 = vunpack.c.l.b16 %v3651
    %v3833 = vunpack.c.l.b16 %v3652
    %v3834 = vunpack.c.l.b16 %v3653
    %v3835 = vunpack.c.l.b16 %v3654
    %v3836 = vunpack.c.l.b16 %v3655
    %v3837 = vunpack.c.l.b16 %v3656
    %v3838 = vpack.c.b16 %v3829, %v3828
    %v3839 = vpack.c.b16 %v3831, %v3830
    %v3840 = vpack.c.b16 %v3833, %v3832
    %v3841 = vpack.c.b16 %v3835, %v3834
    %v3842 = vpack.c.b16 %v3837, %v3836
    %v3849 = vsel %vm1716, %v3817, 0
    %3851 = vmatpush.bf16.msra.mxu0 0
    %3852 = vmatpush.bf16.msra.mxu0 0
    %3853 = vmatpush.bf16.msra.mxu0 0
    %3854 = vmatpush.bf16.msra.mxu0 %v3842
    %3855 = vmatpush.bf16.msra.mxu0 %v3841
    %3856 = vmatpush.bf16.msra.mxu0 %v3840
    %3857 = vmatpush.bf16.msra.mxu0 %v3839
    %3858 = vmatpush.bf16.msra.mxu0 %v3838
    %3859 = vmatmul.bf16.gmra.mxu0 %v3849
    %v3860 = vpop.f32.mrf.mxu0
    %v3861 = vadd.f32 %v3711, %v3860
    %v3862 = vpop.f32.mrf.mxu0
    %3863 = vdwg.mxu0
    %v3864 = vadd.f32 %v3814, %v3861
    %v3865 = vadd.f32 %v3864, %v3769
    %v3866 = vadd.f32 %v3865, %v48
    %v3867 = vmax.f32 %v3866, 0.0
    %v3868 = vpack.c.bf16 %v3867, %v3867
    %v3870 = vsel %vm900, %v3868, 0
    %3872 = vmatpush.bf16.msra.mxu0 0
    %3873 = vmatpush.bf16.msra.mxu0 0
    %3874 = vmatpush.bf16.msra.mxu0 %v1995
    %3875 = vmatpush.bf16.msra.mxu0 %v1984
    %3876 = vmatpush.bf16.msra.mxu0 %v1983
    %3877 = vmatpush.bf16.msra.mxu0 %v1982
    %3878 = vmatpush.bf16.msra.mxu0 %v1981
    %3879 = vmatpush.bf16.msra.mxu0 %v1980
    %3880 = vmatmul.bf16.gmra.mxu0 %v3870
    %v3881 = vpop.f32.mrf.mxu0
    %v3882 = vadd.f32 %v49, %v3881
    %v3883 = vpop.f32.mrf.mxu0
    %3884 = vdwg.mxu0
    %3885 = vst [vmem:[#allocation2 + $0x1] sm:$0x1] %v3882
    // Predicated region
    $region54: #{lenet5_forward.1} parent=1 // pred_check
      _
    $region55: #{lenet5_forward.1} parent=1 // pred_check_branch
      %3887 = sbr.rel (0) target = $region57
    $region56: #{lenet5_forward.1} parent=1 // pred_region
      %3889 = vsyncadd [#allocation3], 0
      %s3891 = sshll.u32 [#allocation2], 4
      %s3892 = int_to_ptr.vmem [resolvable:$true] %s3891
      %s3893 = sshll.u32 %s13, 4
      %s3894 = int_to_ptr.hbm [resolvable:$true] %s3893
      %3896 = dma.vmem_to_hbm [thread:$0]  %s3892, 32, %s3894, [#allocation3]
    $region57: #{lenet5_forward.1} parent=1 // pred_fallthru
      _
    // Predicated region
    $region58: #{lenet5_forward.1} parent=1 // pred_check
      _
    $region59: #{lenet5_forward.1} parent=1 // pred_check_branch
      %3898 = sbr.rel (0) target = $region61
    $region60: #{lenet5_forward.1} parent=1 // pred_region
      %3900 = dma.done [#allocation3], 32
    $region61: #{lenet5_forward.1} parent=1 // pred_fallthru
      _
    %3901 = vsyncpa [#allocation3], 1

</llo_original>
